<compile_context>
chip_gen: v5e
topology: v5e:2x2
jax: 0.10.0
libtpu: 0.0.40
codegen_flags: <defaults>
</compile_context>

<pallas_src>
import functools

import jax
import jax.numpy as jnp
from jax import lax
from jax.experimental import pallas as pl
from jax.experimental.pallas import tpu as pltpu


def _fused_kernel(x_ref, wdw_ref, wpw_ref, gamma_ref, beta_ref, o_ref, xp_ref, *,
                  cin, cout, kh, kw, stride, dilation, padding,
                  h, w, h_out, w_out, preactivation, affine, eps):
    """ReLU + depthwise dilated conv + 1x1 conv + BatchNorm, whole batch at once.

    x_ref : (N, Cin, H, W)        VMEM
    wdw_ref: (kh*kw*Cin,)         SMEM, layout [tap, ci]
    wpw_ref: (Cin*Cout,)          SMEM, layout [ci, co]
    gamma_ref/beta_ref: (Cout,)   SMEM
    o_ref : (N, Cout, Hout, Wout) VMEM
    xp_ref: (N, Cin, H+2p, W+2p)  VMEM scratch (only used when padding>0 or stride>1)
    """
    n = x_ref.shape[0]

    # ---- ReLU (pre-activation).  ReLU(0)=0, so relu-then-pad == pad-then-relu. ----
    x = x_ref[...].astype(jnp.float32)
    if preactivation:
        x = jnp.maximum(x, 0.0)

    use_scratch = (padding > 0) or (stride != 1)
    if use_scratch:
        wp = w + 2 * padding
        if padding > 0:
            # Zero only the halo strips (interior is overwritten right below).
            zrow = jnp.zeros((n, cin, padding, wp), jnp.float32)
            zcol = jnp.zeros((n, cin, h, padding), jnp.float32)
            xp_ref[:, :, pl.ds(0, padding), :] = zrow                         # top
            xp_ref[:, :, pl.ds(padding + h, padding), :] = zrow               # bottom
            xp_ref[:, :, pl.ds(padding, h), pl.ds(0, padding)] = zcol         # left
            xp_ref[:, :, pl.ds(padding, h), pl.ds(padding + w, padding)] = zcol  # right
        xp_ref[:, :, pl.ds(padding, h), pl.ds(padding, w)] = x

    def tap(ci, i, j):
        """Input window for depthwise tap (i, j) of channel ci: (N, 1, Hout, Wout)."""
        h0 = i * dilation
        w0 = j * dilation
        if use_scratch:
            if stride == 1:
                return xp_ref[:, pl.ds(ci, 1), pl.ds(h0, h_out), pl.ds(w0, w_out)]
            # TODO(synk): stride>1 takes the doubly-strided read path (correct but
            # gather-like); decompose per phase if such configs become hot.
            return xp_ref[:, pl.ds(ci, 1), pl.ds(h0, h_out, stride),
                          pl.ds(w0, w_out, stride)]
        # padding==0, stride==1: tap straight off the ReLU'd input value.
        return x[:, ci:ci + 1, h0:h0 + h_out, w0:w0 + w_out]

    # ---- Depthwise dilated conv: per-channel scalar-tap FMAs (weights in SMEM). ----
    dw = []
    for ci in range(cin):
        acc = jnp.zeros((n, 1, h_out, w_out), jnp.float32)
        for i in range(kh):
            for j in range(kw):
                acc = acc + tap(ci, i, j) * wdw_ref[(i * kw + j) * cin + ci]
        dw.append(acc)

    # ---- 1x1 pointwise conv + BatchNorm2d (train-mode batch stats), per Cout. ------
    inv_count = 1.0 / float(n * h_out * w_out)
    for co in range(cout):
        y = dw[0] * wpw_ref[0 * cout + co]
        for ci in range(1, cin):
            y = y + dw[ci] * wpw_ref[ci * cout + co]

        s = jnp.sum(y, axis=3, keepdims=True)       # lane reduce
        s = jnp.sum(s, axis=2, keepdims=True)       # sublane reduce
        s = jnp.sum(s, axis=0, keepdims=True)       # batch reduce -> (1,1,1,1)
        mean = s * inv_count
        d = y - mean
        v = jnp.sum(d * d, axis=3, keepdims=True)
        v = jnp.sum(v, axis=2, keepdims=True)
        v = jnp.sum(v, axis=0, keepdims=True)
        out = d * lax.rsqrt(v * inv_count + eps)    # biased variance, eps inside rsqrt
        if affine:
            out = out * gamma_ref[co] + beta_ref[co]
        o_ref[:, pl.ds(co, 1), :, :] = out.astype(o_ref.dtype)


def dilated_conv2d(x_nchw, w_dw, w_pw, gamma, beta, *, kernel_size, padding,
                   stride, dilation, affine=True, preactivation=True, eps=1e-5):
    """Forward pass of DilatedConv2d as a single fused Pallas TPU kernel.

    Args:
      x_nchw: (N, Cin, H, W)   PyTorch layout, consumed directly (no transposes).
      w_dw:   (Cin, KH, KW)    depthwise weights (PyTorch (Cin,1,KH,KW) squeezed).
      w_pw:   (Cout, Cin)      1x1 pointwise weights (PyTorch (Cout,Cin,1,1) squeezed).
      gamma, beta: (Cout,)     BN affine params (ignored if affine=False).
    Returns:
      (N, Cout, Hout, Wout) float32.
    """
    x = x_nchw.astype(jnp.float32)
    n, cin, h, w = x.shape
    cout = w_pw.shape[0]
    kh = kw = kernel_size
    h_out = (h + 2 * padding - dilation * (kh - 1) - 1) // stride + 1
    w_out = (w + 2 * padding - dilation * (kw - 1) - 1) // stride + 1

    # Tiny flat scalar tables for SMEM (one-time re-layouts; a real model would
    # precompute these).  Layouts: wdw [tap, ci], wpw [ci, co].
    wdw_flat = jnp.transpose(w_dw.astype(jnp.float32), (1, 2, 0)).reshape(-1)
    wpw_flat = jnp.transpose(w_pw.astype(jnp.float32), (1, 0)).reshape(-1)
    gamma_flat = gamma.astype(jnp.float32).reshape(-1)
    beta_flat = beta.astype(jnp.float32).reshape(-1)

    kernel = functools.partial(
        _fused_kernel, cin=cin, cout=cout, kh=kh, kw=kw, stride=stride,
        dilation=dilation, padding=padding, h=h, w=w, h_out=h_out, w_out=w_out,
        preactivation=preactivation, affine=affine, eps=eps)

    smem_spec = pl.BlockSpec(memory_space=pltpu.MemorySpace.SMEM)
    return pl.pallas_call(
        kernel,
        out_shape=jax.ShapeDtypeStruct((n, cout, h_out, w_out), jnp.float32),
        grid=(1,),
        in_specs=[
            pl.BlockSpec((n, cin, h, w), lambda i: (0, 0, 0, 0)),
            smem_spec,   # depthwise weights
            smem_spec,   # pointwise weights
            smem_spec,   # gamma
            smem_spec,   # beta
        ],
        out_specs=pl.BlockSpec((n, cout, h_out, w_out), lambda i: (0, 0, 0, 0)),
        scratch_shapes=[pltpu.VMEM((n, cin, h + 2 * padding, w + 2 * padding),
                                   jnp.float32)],
        compiler_params=pltpu.CompilerParams(dimension_semantics=("arbitrary",)),
    )(x, wdw_flat, wpw_flat, gamma_flat, beta_flat)


def _reference(x, w_dw, w_pw, gamma, beta, *, kernel_size, padding, stride,
               dilation, affine, preactivation, eps=1e-5):
    """Pure-JAX reference (matches PyTorch forward in train() mode)."""
    cin = x.shape[1]
    cout = w_pw.shape[0]
    kh = kw = kernel_size
    hdn = jnp.maximum(x, 0.0) if preactivation else x
    hdn = lax.conv_general_dilated(
        hdn, w_dw.reshape(cin, 1, kh, kw),
        window_strides=(stride, stride),
        padding=((padding, padding), (padding, padding)),
        rhs_dilation=(dilation, dilation),
        dimension_numbers=("NCHW", "OIHW", "NCHW"),
        feature_group_count=cin,
        precision=lax.Precision.HIGHEST)
    hdn = lax.conv_general_dilated(
        hdn, w_pw.reshape(cout, cin, 1, 1),
        window_strides=(1, 1), padding="VALID",
        dimension_numbers=("NCHW", "OIHW", "NCHW"),
        precision=lax.Precision.HIGHEST)
    mean = jnp.mean(hdn, axis=(0, 2, 3), keepdims=True)
    var = jnp.mean((hdn - mean) ** 2, axis=(0, 2, 3), keepdims=True)
    out = (hdn - mean) * lax.rsqrt(var + eps)
    if affine:
        out = out * gamma.reshape(1, cout, 1, 1) + beta.reshape(1, cout, 1, 1)
    return out


if __name__ == "__main__":
    # Module hyperparameters.
    in_channels, out_channels = 4, 8
    kernel_size, padding, stride, dilation = 3, 2, 1, 2
    affine, preactivation = True, True

    key = jax.random.PRNGKey(0)
    kx, kdw, kpw, kg, kb = jax.random.split(key, 5)

    x = jax.random.normal(kx, (2, in_channels, 16, 16), jnp.float32)            # NCHW
    w_dw = 0.1 * jax.random.normal(kdw, (in_channels, kernel_size, kernel_size), jnp.float32)
    w_pw = 0.1 * jax.random.normal(kpw, (out_channels, in_channels), jnp.float32)
    gamma = 1.0 + 0.1 * jax.random.normal(kg, (out_channels,), jnp.float32)
    beta = 0.1 * jax.random.normal(kb, (out_channels,), jnp.float32)

    out = dilated_conv2d(x, w_dw, w_pw, gamma, beta,
                         kernel_size=kernel_size, padding=padding,
                         stride=stride, dilation=dilation,
                         affine=affine, preactivation=preactivation)
    out = jax.block_until_ready(out)
    assert out.shape == (2, out_channels, 16, 16), out.shape

    ref = jax.block_until_ready(
        _reference(x, w_dw, w_pw, gamma, beta, kernel_size=kernel_size,
                   padding=padding, stride=stride, dilation=dilation,
                   affine=affine, preactivation=preactivation))
    max_err = float(jnp.max(jnp.abs(out - ref)))
    assert max_err < 2e-3, f"max |err| = {max_err}"
    print("KERNEL_OK")
</pallas_src>

<mosaic_0001>
module attributes {stable_mosaic.version = 11 : i64} {
  func.func @_fused_kernel(%arg0: i32, %arg1: memref<2x4x16x16xf32, #tpu.memory_space<vmem>>, %arg2: memref<36xf32, #tpu.memory_space<smem>>, %arg3: memref<32xf32, #tpu.memory_space<smem>>, %arg4: memref<8xf32, #tpu.memory_space<smem>>, %arg5: memref<8xf32, #tpu.memory_space<smem>>, %arg6: memref<2x8x16x16xf32, #tpu.memory_space<vmem>>, %arg7: memref<2x4x20x20xf32, #tpu.memory_space<vmem>>) attributes {dimension_semantics = [#tpu.dimension_semantics<arbitrary>], iteration_bounds = array<i64: 1>, scalar_prefetch = 0 : i64, scratch_operands = 1 : i64, tpu.core_type = #tpu.core_type<tc>, window_params = [{pipeline_mode = #tpu.pipeline_mode<synchronous>, transform_indices = @transform_0, window_bounds = array<i64: 2, 4, 16, 16>}, {transform_indices = @transform_1, window_bounds = array<i64: 36>}, {transform_indices = @transform_2, window_bounds = array<i64: 32>}, {transform_indices = @transform_3, window_bounds = array<i64: 8>}, {transform_indices = @transform_4, window_bounds = array<i64: 8>}, {pipeline_mode = #tpu.pipeline_mode<synchronous>, transform_indices = @transform_5, window_bounds = array<i64: 2, 8, 16, 16>}]} {
    %c0 = arith.constant 0 : index
    %c0_0 = arith.constant 0 : index
    %c0_1 = arith.constant 0 : index
    %c0_2 = arith.constant 0 : index
    %0 = vector.load %arg1[%c0, %c0_0, %c0_1, %c0_2] : memref<2x4x16x16xf32, #tpu.memory_space<vmem>>, vector<2x4x16x16xf32>
    %cst = arith.constant 0.000000e+00 : f32
    %1 = vector.broadcast %cst : f32 to vector<2x4x16x16xf32>
    %2 = arith.maximumf %0, %1 : vector<2x4x16x16xf32>
    %cst_3 = arith.constant 0.000000e+00 : f32
    %3 = vector.broadcast %cst_3 : f32 to vector<2x4x2x20xf32>
    %cst_4 = arith.constant 0.000000e+00 : f32
    %4 = vector.broadcast %cst_4 : f32 to vector<2x4x16x2xf32>
    %c0_5 = arith.constant 0 : index
    %c0_6 = arith.constant 0 : index
    %c0_7 = arith.constant 0 : index
    %c0_8 = arith.constant 0 : index
    %5 = vector.load %arg7[%c0_5, %c0_6, %c0_7, %c0_8] : memref<2x4x20x20xf32, #tpu.memory_space<vmem>>, vector<2x4x2x20xf32>
    tpu.vector_store %arg7[%c0_5, %c0_6, %c0_7, %c0_8], %3 {strides = array<i32>} : memref<2x4x20x20xf32, #tpu.memory_space<vmem>>, vector<2x4x2x20xf32>,
    %c0_9 = arith.constant 0 : index
    %c0_10 = arith.constant 0 : index
    %c18 = arith.constant 18 : index
    %c0_11 = arith.constant 0 : index
    %6 = vector.load %arg7[%c0_9, %c0_10, %c18, %c0_11] : memref<2x4x20x20xf32, #tpu.memory_space<vmem>>, vector<2x4x2x20xf32>
    tpu.vector_store %arg7[%c0_9, %c0_10, %c18, %c0_11], %3 {strides = array<i32>} : memref<2x4x20x20xf32, #tpu.memory_space<vmem>>, vector<2x4x2x20xf32>,
    %c0_12 = arith.constant 0 : index
    %c0_13 = arith.constant 0 : index
    %c2 = arith.constant 2 : index
    %c0_14 = arith.constant 0 : index
    %7 = vector.load %arg7[%c0_12, %c0_13, %c2, %c0_14] : memref<2x4x20x20xf32, #tpu.memory_space<vmem>>, vector<2x4x16x2xf32>
    tpu.vector_store %arg7[%c0_12, %c0_13, %c2, %c0_14], %4 {strides = array<i32>} : memref<2x4x20x20xf32, #tpu.memory_space<vmem>>, vector<2x4x16x2xf32>,
    %c0_15 = arith.constant 0 : index
    %c0_16 = arith.constant 0 : index
    %c2_17 = arith.constant 2 : index
    %c18_18 = arith.constant 18 : index
    %8 = vector.load %arg7[%c0_15, %c0_16, %c2_17, %c18_18] : memref<2x4x20x20xf32, #tpu.memory_space<vmem>>, vector<2x4x16x2xf32>
    tpu.vector_store %arg7[%c0_15, %c0_16, %c2_17, %c18_18], %4 {strides = array<i32>} : memref<2x4x20x20xf32, #tpu.memory_space<vmem>>, vector<2x4x16x2xf32>,
    %c0_19 = arith.constant 0 : index
    %c0_20 = arith.constant 0 : index
    %c2_21 = arith.constant 2 : index
    %c2_22 = arith.constant 2 : index
    %9 = vector.load %arg7[%c0_19, %c0_20, %c2_21, %c2_22] : memref<2x4x20x20xf32, #tpu.memory_space<vmem>>, vector<2x4x16x16xf32>
    tpu.vector_store %arg7[%c0_19, %c0_20, %c2_21, %c2_22], %2 {strides = array<i32>} : memref<2x4x20x20xf32, #tpu.memory_space<vmem>>, vector<2x4x16x16xf32>,
    %cst_23 = arith.constant 0.000000e+00 : f32
    %10 = vector.broadcast %cst_23 : f32 to vector<2x1x16x16xf32>
    %c0_24 = arith.constant 0 : index
    %c0_25 = arith.constant 0 : index
    %c0_26 = arith.constant 0 : index
    %c0_27 = arith.constant 0 : index
    %11 = vector.load %arg7[%c0_24, %c0_25, %c0_26, %c0_27] : memref<2x4x20x20xf32, #tpu.memory_space<vmem>>, vector<2x1x16x16xf32>
    %c0_28 = arith.constant 0 : index
    %12 = memref.load %arg2[%c0_28] : memref<36xf32, #tpu.memory_space<smem>>
    %13 = vector.broadcast %12 : f32 to vector<2x1x16x16xf32>
    %14 = arith.mulf %11, %13 : vector<2x1x16x16xf32>
    %15 = arith.addf %10, %14 : vector<2x1x16x16xf32>
    %c0_29 = arith.constant 0 : index
    %c0_30 = arith.constant 0 : index
    %c0_31 = arith.constant 0 : index
    %c2_32 = arith.constant 2 : index
    %16 = vector.load %arg7[%c0_29, %c0_30, %c0_31, %c2_32] : memref<2x4x20x20xf32, #tpu.memory_space<vmem>>, vector<2x1x16x16xf32>
    %c4 = arith.constant 4 : index
    %17 = memref.load %arg2[%c4] : memref<36xf32, #tpu.memory_space<smem>>
    %18 = vector.broadcast %17 : f32 to vector<2x1x16x16xf32>
    %19 = arith.mulf %16, %18 : vector<2x1x16x16xf32>
    %20 = arith.addf %15, %19 : vector<2x1x16x16xf32>
    %c0_33 = arith.constant 0 : index
    %c0_34 = arith.constant 0 : index
    %c0_35 = arith.constant 0 : index
    %c4_36 = arith.constant 4 : index
    %21 = vector.load %arg7[%c0_33, %c0_34, %c0_35, %c4_36] : memref<2x4x20x20xf32, #tpu.memory_space<vmem>>, vector<2x1x16x16xf32>
    %c8 = arith.constant 8 : index
    %22 = memref.load %arg2[%c8] : memref<36xf32, #tpu.memory_space<smem>>
    %23 = vector.broadcast %22 : f32 to vector<2x1x16x16xf32>
    %24 = arith.mulf %21, %23 : vector<2x1x16x16xf32>
    %25 = arith.addf %20, %24 : vector<2x1x16x16xf32>
    %c0_37 = arith.constant 0 : index
    %c0_38 = arith.constant 0 : index
    %c2_39 = arith.constant 2 : index
    %c0_40 = arith.constant 0 : index
    %26 = vector.load %arg7[%c0_37, %c0_38, %c2_39, %c0_40] : memref<2x4x20x20xf32, #tpu.memory_space<vmem>>, vector<2x1x16x16xf32>
    %c12 = arith.constant 12 : index
    %27 = memref.load %arg2[%c12] : memref<36xf32, #tpu.memory_space<smem>>
    %28 = vector.broadcast %27 : f32 to vector<2x1x16x16xf32>
    %29 = arith.mulf %26, %28 : vector<2x1x16x16xf32>
    %30 = arith.addf %25, %29 : vector<2x1x16x16xf32>
    %c0_41 = arith.constant 0 : index
    %c0_42 = arith.constant 0 : index
    %c2_43 = arith.constant 2 : index
    %c2_44 = arith.constant 2 : index
    %31 = vector.load %arg7[%c0_41, %c0_42, %c2_43, %c2_44] : memref<2x4x20x20xf32, #tpu.memory_space<vmem>>, vector<2x1x16x16xf32>
    %c16 = arith.constant 16 : index
    %32 = memref.load %arg2[%c16] : memref<36xf32, #tpu.memory_space<smem>>
    %33 = vector.broadcast %32 : f32 to vector<2x1x16x16xf32>
    %34 = arith.mulf %31, %33 : vector<2x1x16x16xf32>
    %35 = arith.addf %30, %34 : vector<2x1x16x16xf32>
    %c0_45 = arith.constant 0 : index
    %c0_46 = arith.constant 0 : index
    %c2_47 = arith.constant 2 : index
    %c4_48 = arith.constant 4 : index
    %36 = vector.load %arg7[%c0_45, %c0_46, %c2_47, %c4_48] : memref<2x4x20x20xf32, #tpu.memory_space<vmem>>, vector<2x1x16x16xf32>
    %c20 = arith.constant 20 : index
    %37 = memref.load %arg2[%c20] : memref<36xf32, #tpu.memory_space<smem>>
    %38 = vector.broadcast %37 : f32 to vector<2x1x16x16xf32>
    %39 = arith.mulf %36, %38 : vector<2x1x16x16xf32>
    %40 = arith.addf %35, %39 : vector<2x1x16x16xf32>
    %c0_49 = arith.constant 0 : index
    %c0_50 = arith.constant 0 : index
    %c4_51 = arith.constant 4 : index
    %c0_52 = arith.constant 0 : index
    %41 = vector.load %arg7[%c0_49, %c0_50, %c4_51, %c0_52] : memref<2x4x20x20xf32, #tpu.memory_space<vmem>>, vector<2x1x16x16xf32>
    %c24 = arith.constant 24 : index
    %42 = memref.load %arg2[%c24] : memref<36xf32, #tpu.memory_space<smem>>
    %43 = vector.broadcast %42 : f32 to vector<2x1x16x16xf32>
    %44 = arith.mulf %41, %43 : vector<2x1x16x16xf32>
    %45 = arith.addf %40, %44 : vector<2x1x16x16xf32>
    %c0_53 = arith.constant 0 : index
    %c0_54 = arith.constant 0 : index
    %c4_55 = arith.constant 4 : index
    %c2_56 = arith.constant 2 : index
    %46 = vector.load %arg7[%c0_53, %c0_54, %c4_55, %c2_56] : memref<2x4x20x20xf32, #tpu.memory_space<vmem>>, vector<2x1x16x16xf32>
    %c28 = arith.constant 28 : index
    %47 = memref.load %arg2[%c28] : memref<36xf32, #tpu.memory_space<smem>>
    %48 = vector.broadcast %47 : f32 to vector<2x1x16x16xf32>
    %49 = arith.mulf %46, %48 : vector<2x1x16x16xf32>
    %50 = arith.addf %45, %49 : vector<2x1x16x16xf32>
    %c0_57 = arith.constant 0 : index
    %c0_58 = arith.constant 0 : index
    %c4_59 = arith.constant 4 : index
    %c4_60 = arith.constant 4 : index
    %51 = vector.load %arg7[%c0_57, %c0_58, %c4_59, %c4_60] : memref<2x4x20x20xf32, #tpu.memory_space<vmem>>, vector<2x1x16x16xf32>
    %c32 = arith.constant 32 : index
    %52 = memref.load %arg2[%c32] : memref<36xf32, #tpu.memory_space<smem>>
    %53 = vector.broadcast %52 : f32 to vector<2x1x16x16xf32>
    %54 = arith.mulf %51, %53 : vector<2x1x16x16xf32>
    %55 = arith.addf %50, %54 : vector<2x1x16x16xf32>
    %cst_61 = arith.constant 0.000000e+00 : f32
    %56 = vector.broadcast %cst_61 : f32 to vector<2x1x16x16xf32>
    %c0_62 = arith.constant 0 : index
    %c1 = arith.constant 1 : index
    %c0_63 = arith.constant 0 : index
    %c0_64 = arith.constant 0 : index
    %57 = vector.load %arg7[%c0_62, %c1, %c0_63, %c0_64] : memref<2x4x20x20xf32, #tpu.memory_space<vmem>>, vector<2x1x16x16xf32>
    %c1_65 = arith.constant 1 : index
    %58 = memref.load %arg2[%c1_65] : memref<36xf32, #tpu.memory_space<smem>>
    %59 = vector.broadcast %58 : f32 to vector<2x1x16x16xf32>
    %60 = arith.mulf %57, %59 : vector<2x1x16x16xf32>
    %61 = arith.addf %56, %60 : vector<2x1x16x16xf32>
    %c0_66 = arith.constant 0 : index
    %c1_67 = arith.constant 1 : index
    %c0_68 = arith.constant 0 : index
    %c2_69 = arith.constant 2 : index
    %62 = vector.load %arg7[%c0_66, %c1_67, %c0_68, %c2_69] : memref<2x4x20x20xf32, #tpu.memory_space<vmem>>, vector<2x1x16x16xf32>
    %c5 = arith.constant 5 : index
    %63 = memref.load %arg2[%c5] : memref<36xf32, #tpu.memory_space<smem>>
    %64 = vector.broadcast %63 : f32 to vector<2x1x16x16xf32>
    %65 = arith.mulf %62, %64 : vector<2x1x16x16xf32>
    %66 = arith.addf %61, %65 : vector<2x1x16x16xf32>
    %c0_70 = arith.constant 0 : index
    %c1_71 = arith.constant 1 : index
    %c0_72 = arith.constant 0 : index
    %c4_73 = arith.constant 4 : index
    %67 = vector.load %arg7[%c0_70, %c1_71, %c0_72, %c4_73] : memref<2x4x20x20xf32, #tpu.memory_space<vmem>>, vector<2x1x16x16xf32>
    %c9 = arith.constant 9 : index
    %68 = memref.load %arg2[%c9] : memref<36xf32, #tpu.memory_space<smem>>
    %69 = vector.broadcast %68 : f32 to vector<2x1x16x16xf32>
    %70 = arith.mulf %67, %69 : vector<2x1x16x16xf32>
    %71 = arith.addf %66, %70 : vector<2x1x16x16xf32>
    %c0_74 = arith.constant 0 : index
    %c1_75 = arith.constant 1 : index
    %c2_76 = arith.constant 2 : index
    %c0_77 = arith.constant 0 : index
    %72 = vector.load %arg7[%c0_74, %c1_75, %c2_76, %c0_77] : memref<2x4x20x20xf32, #tpu.memory_space<vmem>>, vector<2x1x16x16xf32>
    %c13 = arith.constant 13 : index
    %73 = memref.load %arg2[%c13] : memref<36xf32, #tpu.memory_space<smem>>
    %74 = vector.broadcast %73 : f32 to vector<2x1x16x16xf32>
    %75 = arith.mulf %72, %74 : vector<2x1x16x16xf32>
    %76 = arith.addf %71, %75 : vector<2x1x16x16xf32>
    %c0_78 = arith.constant 0 : index
    %c1_79 = arith.constant 1 : index
    %c2_80 = arith.constant 2 : index
    %c2_81 = arith.constant 2 : index
    %77 = vector.load %arg7[%c0_78, %c1_79, %c2_80, %c2_81] : memref<2x4x20x20xf32, #tpu.memory_space<vmem>>, vector<2x1x16x16xf32>
    %c17 = arith.constant 17 : index
    %78 = memref.load %arg2[%c17] : memref<36xf32, #tpu.memory_space<smem>>
    %79 = vector.broadcast %78 : f32 to vector<2x1x16x16xf32>
    %80 = arith.mulf %77, %79 : vector<2x1x16x16xf32>
    %81 = arith.addf %76, %80 : vector<2x1x16x16xf32>
    %c0_82 = arith.constant 0 : index
    %c1_83 = arith.constant 1 : index
    %c2_84 = arith.constant 2 : index
    %c4_85 = arith.constant 4 : index
    %82 = vector.load %arg7[%c0_82, %c1_83, %c2_84, %c4_85] : memref<2x4x20x20xf32, #tpu.memory_space<vmem>>, vector<2x1x16x16xf32>
    %c21 = arith.constant 21 : index
    %83 = memref.load %arg2[%c21] : memref<36xf32, #tpu.memory_space<smem>>
    %84 = vector.broadcast %83 : f32 to vector<2x1x16x16xf32>
    %85 = arith.mulf %82, %84 : vector<2x1x16x16xf32>
    %86 = arith.addf %81, %85 : vector<2x1x16x16xf32>
    %c0_86 = arith.constant 0 : index
    %c1_87 = arith.constant 1 : index
    %c4_88 = arith.constant 4 : index
    %c0_89 = arith.constant 0 : index
    %87 = vector.load %arg7[%c0_86, %c1_87, %c4_88, %c0_89] : memref<2x4x20x20xf32, #tpu.memory_space<vmem>>, vector<2x1x16x16xf32>
    %c25 = arith.constant 25 : index
    %88 = memref.load %arg2[%c25] : memref<36xf32, #tpu.memory_space<smem>>
    %89 = vector.broadcast %88 : f32 to vector<2x1x16x16xf32>
    %90 = arith.mulf %87, %89 : vector<2x1x16x16xf32>
    %91 = arith.addf %86, %90 : vector<2x1x16x16xf32>
    %c0_90 = arith.constant 0 : index
    %c1_91 = arith.constant 1 : index
    %c4_92 = arith.constant 4 : index
    %c2_93 = arith.constant 2 : index
    %92 = vector.load %arg7[%c0_90, %c1_91, %c4_92, %c2_93] : memref<2x4x20x20xf32, #tpu.memory_space<vmem>>, vector<2x1x16x16xf32>
    %c29 = arith.constant 29 : index
    %93 = memref.load %arg2[%c29] : memref<36xf32, #tpu.memory_space<smem>>
    %94 = vector.broadcast %93 : f32 to vector<2x1x16x16xf32>
    %95 = arith.mulf %92, %94 : vector<2x1x16x16xf32>
    %96 = arith.addf %91, %95 : vector<2x1x16x16xf32>
    %c0_94 = arith.constant 0 : index
    %c1_95 = arith.constant 1 : index
    %c4_96 = arith.constant 4 : index
    %c4_97 = arith.constant 4 : index
    %97 = vector.load %arg7[%c0_94, %c1_95, %c4_96, %c4_97] : memref<2x4x20x20xf32, #tpu.memory_space<vmem>>, vector<2x1x16x16xf32>
    %c33 = arith.constant 33 : index
    %98 = memref.load %arg2[%c33] : memref<36xf32, #tpu.memory_space<smem>>
    %99 = vector.broadcast %98 : f32 to vector<2x1x16x16xf32>
    %100 = arith.mulf %97, %99 : vector<2x1x16x16xf32>
    %101 = arith.addf %96, %100 : vector<2x1x16x16xf32>
    %cst_98 = arith.constant 0.000000e+00 : f32
    %102 = vector.broadcast %cst_98 : f32 to vector<2x1x16x16xf32>
    %c0_99 = arith.constant 0 : index
    %c2_100 = arith.constant 2 : index
    %c0_101 = arith.constant 0 : index
    %c0_102 = arith.constant 0 : index
    %103 = vector.load %arg7[%c0_99, %c2_100, %c0_101, %c0_102] : memref<2x4x20x20xf32, #tpu.memory_space<vmem>>, vector<2x1x16x16xf32>
    %c2_103 = arith.constant 2 : index
    %104 = memref.load %arg2[%c2_103] : memref<36xf32, #tpu.memory_space<smem>>
    %105 = vector.broadcast %104 : f32 to vector<2x1x16x16xf32>
    %106 = arith.mulf %103, %105 : vector<2x1x16x16xf32>
    %107 = arith.addf %102, %106 : vector<2x1x16x16xf32>
    %c0_104 = arith.constant 0 : index
    %c2_105 = arith.constant 2 : index
    %c0_106 = arith.constant 0 : index
    %c2_107 = arith.constant 2 : index
    %108 = vector.load %arg7[%c0_104, %c2_105, %c0_106, %c2_107] : memref<2x4x20x20xf32, #tpu.memory_space<vmem>>, vector<2x1x16x16xf32>
    %c6 = arith.constant 6 : index
    %109 = memref.load %arg2[%c6] : memref<36xf32, #tpu.memory_space<smem>>
    %110 = vector.broadcast %109 : f32 to vector<2x1x16x16xf32>
    %111 = arith.mulf %108, %110 : vector<2x1x16x16xf32>
    %112 = arith.addf %107, %111 : vector<2x1x16x16xf32>
    %c0_108 = arith.constant 0 : index
    %c2_109 = arith.constant 2 : index
    %c0_110 = arith.constant 0 : index
    %c4_111 = arith.constant 4 : index
    %113 = vector.load %arg7[%c0_108, %c2_109, %c0_110, %c4_111] : memref<2x4x20x20xf32, #tpu.memory_space<vmem>>, vector<2x1x16x16xf32>
    %c10 = arith.constant 10 : index
    %114 = memref.load %arg2[%c10] : memref<36xf32, #tpu.memory_space<smem>>
    %115 = vector.broadcast %114 : f32 to vector<2x1x16x16xf32>
    %116 = arith.mulf %113, %115 : vector<2x1x16x16xf32>
    %117 = arith.addf %112, %116 : vector<2x1x16x16xf32>
    %c0_112 = arith.constant 0 : index
    %c2_113 = arith.constant 2 : index
    %c2_114 = arith.constant 2 : index
    %c0_115 = arith.constant 0 : index
    %118 = vector.load %arg7[%c0_112, %c2_113, %c2_114, %c0_115] : memref<2x4x20x20xf32, #tpu.memory_space<vmem>>, vector<2x1x16x16xf32>
    %c14 = arith.constant 14 : index
    %119 = memref.load %arg2[%c14] : memref<36xf32, #tpu.memory_space<smem>>
    %120 = vector.broadcast %119 : f32 to vector<2x1x16x16xf32>
    %121 = arith.mulf %118, %120 : vector<2x1x16x16xf32>
    %122 = arith.addf %117, %121 : vector<2x1x16x16xf32>
    %c0_116 = arith.constant 0 : index
    %c2_117 = arith.constant 2 : index
    %c2_118 = arith.constant 2 : index
    %c2_119 = arith.constant 2 : index
    %123 = vector.load %arg7[%c0_116, %c2_117, %c2_118, %c2_119] : memref<2x4x20x20xf32, #tpu.memory_space<vmem>>, vector<2x1x16x16xf32>
    %c18_120 = arith.constant 18 : index
    %124 = memref.load %arg2[%c18_120] : memref<36xf32, #tpu.memory_space<smem>>
    %125 = vector.broadcast %124 : f32 to vector<2x1x16x16xf32>
    %126 = arith.mulf %123, %125 : vector<2x1x16x16xf32>
    %127 = arith.addf %122, %126 : vector<2x1x16x16xf32>
    %c0_121 = arith.constant 0 : index
    %c2_122 = arith.constant 2 : index
    %c2_123 = arith.constant 2 : index
    %c4_124 = arith.constant 4 : index
    %128 = vector.load %arg7[%c0_121, %c2_122, %c2_123, %c4_124] : memref<2x4x20x20xf32, #tpu.memory_space<vmem>>, vector<2x1x16x16xf32>
    %c22 = arith.constant 22 : index
    %129 = memref.load %arg2[%c22] : memref<36xf32, #tpu.memory_space<smem>>
    %130 = vector.broadcast %129 : f32 to vector<2x1x16x16xf32>
    %131 = arith.mulf %128, %130 : vector<2x1x16x16xf32>
    %132 = arith.addf %127, %131 : vector<2x1x16x16xf32>
    %c0_125 = arith.constant 0 : index
    %c2_126 = arith.constant 2 : index
    %c4_127 = arith.constant 4 : index
    %c0_128 = arith.constant 0 : index
    %133 = vector.load %arg7[%c0_125, %c2_126, %c4_127, %c0_128] : memref<2x4x20x20xf32, #tpu.memory_space<vmem>>, vector<2x1x16x16xf32>
    %c26 = arith.constant 26 : index
    %134 = memref.load %arg2[%c26] : memref<36xf32, #tpu.memory_space<smem>>
    %135 = vector.broadcast %134 : f32 to vector<2x1x16x16xf32>
    %136 = arith.mulf %133, %135 : vector<2x1x16x16xf32>
    %137 = arith.addf %132, %136 : vector<2x1x16x16xf32>
    %c0_129 = arith.constant 0 : index
    %c2_130 = arith.constant 2 : index
    %c4_131 = arith.constant 4 : index
    %c2_132 = arith.constant 2 : index
    %138 = vector.load %arg7[%c0_129, %c2_130, %c4_131, %c2_132] : memref<2x4x20x20xf32, #tpu.memory_space<vmem>>, vector<2x1x16x16xf32>
    %c30 = arith.constant 30 : index
    %139 = memref.load %arg2[%c30] : memref<36xf32, #tpu.memory_space<smem>>
    %140 = vector.broadcast %139 : f32 to vector<2x1x16x16xf32>
    %141 = arith.mulf %138, %140 : vector<2x1x16x16xf32>
    %142 = arith.addf %137, %141 : vector<2x1x16x16xf32>
    %c0_133 = arith.constant 0 : index
    %c2_134 = arith.constant 2 : index
    %c4_135 = arith.constant 4 : index
    %c4_136 = arith.constant 4 : index
    %143 = vector.load %arg7[%c0_133, %c2_134, %c4_135, %c4_136] : memref<2x4x20x20xf32, #tpu.memory_space<vmem>>, vector<2x1x16x16xf32>
    %c34 = arith.constant 34 : index
    %144 = memref.load %arg2[%c34] : memref<36xf32, #tpu.memory_space<smem>>
    %145 = vector.broadcast %144 : f32 to vector<2x1x16x16xf32>
    %146 = arith.mulf %143, %145 : vector<2x1x16x16xf32>
    %147 = arith.addf %142, %146 : vector<2x1x16x16xf32>
    %cst_137 = arith.constant 0.000000e+00 : f32
    %148 = vector.broadcast %cst_137 : f32 to vector<2x1x16x16xf32>
    %c0_138 = arith.constant 0 : index
    %c3 = arith.constant 3 : index
    %c0_139 = arith.constant 0 : index
    %c0_140 = arith.constant 0 : index
    %149 = vector.load %arg7[%c0_138, %c3, %c0_139, %c0_140] : memref<2x4x20x20xf32, #tpu.memory_space<vmem>>, vector<2x1x16x16xf32>
    %c3_141 = arith.constant 3 : index
    %150 = memref.load %arg2[%c3_141] : memref<36xf32, #tpu.memory_space<smem>>
    %151 = vector.broadcast %150 : f32 to vector<2x1x16x16xf32>
    %152 = arith.mulf %149, %151 : vector<2x1x16x16xf32>
    %153 = arith.addf %148, %152 : vector<2x1x16x16xf32>
    %c0_142 = arith.constant 0 : index
    %c3_143 = arith.constant 3 : index
    %c0_144 = arith.constant 0 : index
    %c2_145 = arith.constant 2 : index
    %154 = vector.load %arg7[%c0_142, %c3_143, %c0_144, %c2_145] : memref<2x4x20x20xf32, #tpu.memory_space<vmem>>, vector<2x1x16x16xf32>
    %c7 = arith.constant 7 : index
    %155 = memref.load %arg2[%c7] : memref<36xf32, #tpu.memory_space<smem>>
    %156 = vector.broadcast %155 : f32 to vector<2x1x16x16xf32>
    %157 = arith.mulf %154, %156 : vector<2x1x16x16xf32>
    %158 = arith.addf %153, %157 : vector<2x1x16x16xf32>
    %c0_146 = arith.constant 0 : index
    %c3_147 = arith.constant 3 : index
    %c0_148 = arith.constant 0 : index
    %c4_149 = arith.constant 4 : index
    %159 = vector.load %arg7[%c0_146, %c3_147, %c0_148, %c4_149] : memref<2x4x20x20xf32, #tpu.memory_space<vmem>>, vector<2x1x16x16xf32>
    %c11 = arith.constant 11 : index
    %160 = memref.load %arg2[%c11] : memref<36xf32, #tpu.memory_space<smem>>
    %161 = vector.broadcast %160 : f32 to vector<2x1x16x16xf32>
    %162 = arith.mulf %159, %161 : vector<2x1x16x16xf32>
    %163 = arith.addf %158, %162 : vector<2x1x16x16xf32>
    %c0_150 = arith.constant 0 : index
    %c3_151 = arith.constant 3 : index
    %c2_152 = arith.constant 2 : index
    %c0_153 = arith.constant 0 : index
    %164 = vector.load %arg7[%c0_150, %c3_151, %c2_152, %c0_153] : memref<2x4x20x20xf32, #tpu.memory_space<vmem>>, vector<2x1x16x16xf32>
    %c15 = arith.constant 15 : index
    %165 = memref.load %arg2[%c15] : memref<36xf32, #tpu.memory_space<smem>>
    %166 = vector.broadcast %165 : f32 to vector<2x1x16x16xf32>
    %167 = arith.mulf %164, %166 : vector<2x1x16x16xf32>
    %168 = arith.addf %163, %167 : vector<2x1x16x16xf32>
    %c0_154 = arith.constant 0 : index
    %c3_155 = arith.constant 3 : index
    %c2_156 = arith.constant 2 : index
    %c2_157 = arith.constant 2 : index
    %169 = vector.load %arg7[%c0_154, %c3_155, %c2_156, %c2_157] : memref<2x4x20x20xf32, #tpu.memory_space<vmem>>, vector<2x1x16x16xf32>
    %c19 = arith.constant 19 : index
    %170 = memref.load %arg2[%c19] : memref<36xf32, #tpu.memory_space<smem>>
    %171 = vector.broadcast %170 : f32 to vector<2x1x16x16xf32>
    %172 = arith.mulf %169, %171 : vector<2x1x16x16xf32>
    %173 = arith.addf %168, %172 : vector<2x1x16x16xf32>
    %c0_158 = arith.constant 0 : index
    %c3_159 = arith.constant 3 : index
    %c2_160 = arith.constant 2 : index
    %c4_161 = arith.constant 4 : index
    %174 = vector.load %arg7[%c0_158, %c3_159, %c2_160, %c4_161] : memref<2x4x20x20xf32, #tpu.memory_space<vmem>>, vector<2x1x16x16xf32>
    %c23 = arith.constant 23 : index
    %175 = memref.load %arg2[%c23] : memref<36xf32, #tpu.memory_space<smem>>
    %176 = vector.broadcast %175 : f32 to vector<2x1x16x16xf32>
    %177 = arith.mulf %174, %176 : vector<2x1x16x16xf32>
    %178 = arith.addf %173, %177 : vector<2x1x16x16xf32>
    %c0_162 = arith.constant 0 : index
    %c3_163 = arith.constant 3 : index
    %c4_164 = arith.constant 4 : index
    %c0_165 = arith.constant 0 : index
    %179 = vector.load %arg7[%c0_162, %c3_163, %c4_164, %c0_165] : memref<2x4x20x20xf32, #tpu.memory_space<vmem>>, vector<2x1x16x16xf32>
    %c27 = arith.constant 27 : index
    %180 = memref.load %arg2[%c27] : memref<36xf32, #tpu.memory_space<smem>>
    %181 = vector.broadcast %180 : f32 to vector<2x1x16x16xf32>
    %182 = arith.mulf %179, %181 : vector<2x1x16x16xf32>
    %183 = arith.addf %178, %182 : vector<2x1x16x16xf32>
    %c0_166 = arith.constant 0 : index
    %c3_167 = arith.constant 3 : index
    %c4_168 = arith.constant 4 : index
    %c2_169 = arith.constant 2 : index
    %184 = vector.load %arg7[%c0_166, %c3_167, %c4_168, %c2_169] : memref<2x4x20x20xf32, #tpu.memory_space<vmem>>, vector<2x1x16x16xf32>
    %c31 = arith.constant 31 : index
    %185 = memref.load %arg2[%c31] : memref<36xf32, #tpu.memory_space<smem>>
    %186 = vector.broadcast %185 : f32 to vector<2x1x16x16xf32>
    %187 = arith.mulf %184, %186 : vector<2x1x16x16xf32>
    %188 = arith.addf %183, %187 : vector<2x1x16x16xf32>
    %c0_170 = arith.constant 0 : index
    %c3_171 = arith.constant 3 : index
    %c4_172 = arith.constant 4 : index
    %c4_173 = arith.constant 4 : index
    %189 = vector.load %arg7[%c0_170, %c3_171, %c4_172, %c4_173] : memref<2x4x20x20xf32, #tpu.memory_space<vmem>>, vector<2x1x16x16xf32>
    %c35 = arith.constant 35 : index
    %190 = memref.load %arg2[%c35] : memref<36xf32, #tpu.memory_space<smem>>
    %191 = vector.broadcast %190 : f32 to vector<2x1x16x16xf32>
    %192 = arith.mulf %189, %191 : vector<2x1x16x16xf32>
    %193 = arith.addf %188, %192 : vector<2x1x16x16xf32>
    %c0_174 = arith.constant 0 : index
    %194 = memref.load %arg3[%c0_174] : memref<32xf32, #tpu.memory_space<smem>>
    %195 = vector.broadcast %194 : f32 to vector<2x1x16x16xf32>
    %196 = arith.mulf %55, %195 : vector<2x1x16x16xf32>
    %c8_175 = arith.constant 8 : index
    %197 = memref.load %arg3[%c8_175] : memref<32xf32, #tpu.memory_space<smem>>
    %198 = vector.broadcast %197 : f32 to vector<2x1x16x16xf32>
    %199 = arith.mulf %101, %198 : vector<2x1x16x16xf32>
    %200 = arith.addf %196, %199 : vector<2x1x16x16xf32>
    %c16_176 = arith.constant 16 : index
    %201 = memref.load %arg3[%c16_176] : memref<32xf32, #tpu.memory_space<smem>>
    %202 = vector.broadcast %201 : f32 to vector<2x1x16x16xf32>
    %203 = arith.mulf %147, %202 : vector<2x1x16x16xf32>
    %204 = arith.addf %200, %203 : vector<2x1x16x16xf32>
    %c24_177 = arith.constant 24 : index
    %205 = memref.load %arg3[%c24_177] : memref<32xf32, #tpu.memory_space<smem>>
    %206 = vector.broadcast %205 : f32 to vector<2x1x16x16xf32>
    %207 = arith.mulf %193, %206 : vector<2x1x16x16xf32>
    %208 = arith.addf %204, %207 : vector<2x1x16x16xf32>
    %cst_178 = arith.constant dense<0.000000e+00> : vector<2x1x16xf32>
    %209 = vector.multi_reduction <add>, %208, %cst_178 [3] : vector<2x1x16x16xf32> to vector<2x1x16xf32>
    %210 = vector.shape_cast %209 : vector<2x1x16xf32> to vector<2x1x16x1xf32>
    %cst_179 = arith.constant dense<0.000000e+00> : vector<2x1x1xf32>
    %211 = vector.multi_reduction <add>, %210, %cst_179 [2] : vector<2x1x16x1xf32> to vector<2x1x1xf32>
    %212 = vector.shape_cast %211 : vector<2x1x1xf32> to vector<2x1x1x1xf32>
    %cst_180 = arith.constant dense<0.000000e+00> : vector<1x1x1xf32>
    %213 = vector.multi_reduction <add>, %212, %cst_180 [0] : vector<2x1x1x1xf32> to vector<1x1x1xf32>
    %214 = vector.shape_cast %213 : vector<1x1x1xf32> to vector<1x1x1x1xf32>
    %cst_181 = arith.constant 0.001953125 : f32
    %215 = vector.broadcast %cst_181 : f32 to vector<1x1x1x1xf32>
    %216 = arith.mulf %214, %215 : vector<1x1x1x1xf32>
    %217 = vector.broadcast %216 : vector<1x1x1x1xf32> to vector<2x1x16x16xf32>
    %218 = arith.subf %208, %217 : vector<2x1x16x16xf32>
    %219 = arith.mulf %218, %218 : vector<2x1x16x16xf32>
    %cst_182 = arith.constant dense<0.000000e+00> : vector<2x1x16xf32>
    %220 = vector.multi_reduction <add>, %219, %cst_182 [3] : vector<2x1x16x16xf32> to vector<2x1x16xf32>
    %221 = vector.shape_cast %220 : vector<2x1x16xf32> to vector<2x1x16x1xf32>
    %cst_183 = arith.constant dense<0.000000e+00> : vector<2x1x1xf32>
    %222 = vector.multi_reduction <add>, %221, %cst_183 [2] : vector<2x1x16x1xf32> to vector<2x1x1xf32>
    %223 = vector.shape_cast %222 : vector<2x1x1xf32> to vector<2x1x1x1xf32>
    %cst_184 = arith.constant dense<0.000000e+00> : vector<1x1x1xf32>
    %224 = vector.multi_reduction <add>, %223, %cst_184 [0] : vector<2x1x1x1xf32> to vector<1x1x1xf32>
    %225 = vector.shape_cast %224 : vector<1x1x1xf32> to vector<1x1x1x1xf32>
    %cst_185 = arith.constant 0.001953125 : f32
    %226 = vector.broadcast %cst_185 : f32 to vector<1x1x1x1xf32>
    %227 = arith.mulf %225, %226 : vector<1x1x1x1xf32>
    %cst_186 = arith.constant 9.99999974E-6 : f32
    %228 = vector.broadcast %cst_186 : f32 to vector<1x1x1x1xf32>
    %229 = arith.addf %227, %228 : vector<1x1x1x1xf32>
    %230 = math.rsqrt %229 : vector<1x1x1x1xf32>
    %231 = vector.broadcast %230 : vector<1x1x1x1xf32> to vector<2x1x16x16xf32>
    %232 = arith.mulf %218, %231 : vector<2x1x16x16xf32>
    %c0_187 = arith.constant 0 : index
    %233 = memref.load %arg4[%c0_187] : memref<8xf32, #tpu.memory_space<smem>>
    %234 = vector.broadcast %233 : f32 to vector<2x1x16x16xf32>
    %235 = arith.mulf %232, %234 : vector<2x1x16x16xf32>
    %c0_188 = arith.constant 0 : index
    %236 = memref.load %arg5[%c0_188] : memref<8xf32, #tpu.memory_space<smem>>
    %237 = vector.broadcast %236 : f32 to vector<2x1x16x16xf32>
    %238 = arith.addf %235, %237 : vector<2x1x16x16xf32>
    %c0_189 = arith.constant 0 : index
    %c0_190 = arith.constant 0 : index
    %c0_191 = arith.constant 0 : index
    %c0_192 = arith.constant 0 : index
    %239 = vector.load %arg6[%c0_189, %c0_190, %c0_191, %c0_192] : memref<2x8x16x16xf32, #tpu.memory_space<vmem>>, vector<2x1x16x16xf32>
    tpu.vector_store %arg6[%c0_189, %c0_190, %c0_191, %c0_192], %238 {strides = array<i32>} : memref<2x8x16x16xf32, #tpu.memory_space<vmem>>, vector<2x1x16x16xf32>,
    %c1_193 = arith.constant 1 : index
    %240 = memref.load %arg3[%c1_193] : memref<32xf32, #tpu.memory_space<smem>>
    %241 = vector.broadcast %240 : f32 to vector<2x1x16x16xf32>
    %242 = arith.mulf %55, %241 : vector<2x1x16x16xf32>
    %c9_194 = arith.constant 9 : index
    %243 = memref.load %arg3[%c9_194] : memref<32xf32, #tpu.memory_space<smem>>
    %244 = vector.broadcast %243 : f32 to vector<2x1x16x16xf32>
    %245 = arith.mulf %101, %244 : vector<2x1x16x16xf32>
    %246 = arith.addf %242, %245 : vector<2x1x16x16xf32>
    %c17_195 = arith.constant 17 : index
    %247 = memref.load %arg3[%c17_195] : memref<32xf32, #tpu.memory_space<smem>>
    %248 = vector.broadcast %247 : f32 to vector<2x1x16x16xf32>
    %249 = arith.mulf %147, %248 : vector<2x1x16x16xf32>
    %250 = arith.addf %246, %249 : vector<2x1x16x16xf32>
    %c25_196 = arith.constant 25 : index
    %251 = memref.load %arg3[%c25_196] : memref<32xf32, #tpu.memory_space<smem>>
    %252 = vector.broadcast %251 : f32 to vector<2x1x16x16xf32>
    %253 = arith.mulf %193, %252 : vector<2x1x16x16xf32>
    %254 = arith.addf %250, %253 : vector<2x1x16x16xf32>
    %cst_197 = arith.constant dense<0.000000e+00> : vector<2x1x16xf32>
    %255 = vector.multi_reduction <add>, %254, %cst_197 [3] : vector<2x1x16x16xf32> to vector<2x1x16xf32>
    %256 = vector.shape_cast %255 : vector<2x1x16xf32> to vector<2x1x16x1xf32>
    %cst_198 = arith.constant dense<0.000000e+00> : vector<2x1x1xf32>
    %257 = vector.multi_reduction <add>, %256, %cst_198 [2] : vector<2x1x16x1xf32> to vector<2x1x1xf32>
    %258 = vector.shape_cast %257 : vector<2x1x1xf32> to vector<2x1x1x1xf32>
    %cst_199 = arith.constant dense<0.000000e+00> : vector<1x1x1xf32>
    %259 = vector.multi_reduction <add>, %258, %cst_199 [0] : vector<2x1x1x1xf32> to vector<1x1x1xf32>
    %260 = vector.shape_cast %259 : vector<1x1x1xf32> to vector<1x1x1x1xf32>
    %cst_200 = arith.constant 0.001953125 : f32
    %261 = vector.broadcast %cst_200 : f32 to vector<1x1x1x1xf32>
    %262 = arith.mulf %260, %261 : vector<1x1x1x1xf32>
    %263 = vector.broadcast %262 : vector<1x1x1x1xf32> to vector<2x1x16x16xf32>
    %264 = arith.subf %254, %263 : vector<2x1x16x16xf32>
    %265 = arith.mulf %264, %264 : vector<2x1x16x16xf32>
    %cst_201 = arith.constant dense<0.000000e+00> : vector<2x1x16xf32>
    %266 = vector.multi_reduction <add>, %265, %cst_201 [3] : vector<2x1x16x16xf32> to vector<2x1x16xf32>
    %267 = vector.shape_cast %266 : vector<2x1x16xf32> to vector<2x1x16x1xf32>
    %cst_202 = arith.constant dense<0.000000e+00> : vector<2x1x1xf32>
    %268 = vector.multi_reduction <add>, %267, %cst_202 [2] : vector<2x1x16x1xf32> to vector<2x1x1xf32>
    %269 = vector.shape_cast %268 : vector<2x1x1xf32> to vector<2x1x1x1xf32>
    %cst_203 = arith.constant dense<0.000000e+00> : vector<1x1x1xf32>
    %270 = vector.multi_reduction <add>, %269, %cst_203 [0] : vector<2x1x1x1xf32> to vector<1x1x1xf32>
    %271 = vector.shape_cast %270 : vector<1x1x1xf32> to vector<1x1x1x1xf32>
    %cst_204 = arith.constant 0.001953125 : f32
    %272 = vector.broadcast %cst_204 : f32 to vector<1x1x1x1xf32>
    %273 = arith.mulf %271, %272 : vector<1x1x1x1xf32>
    %cst_205 = arith.constant 9.99999974E-6 : f32
    %274 = vector.broadcast %cst_205 : f32 to vector<1x1x1x1xf32>
    %275 = arith.addf %273, %274 : vector<1x1x1x1xf32>
    %276 = math.rsqrt %275 : vector<1x1x1x1xf32>
    %277 = vector.broadcast %276 : vector<1x1x1x1xf32> to vector<2x1x16x16xf32>
    %278 = arith.mulf %264, %277 : vector<2x1x16x16xf32>
    %c1_206 = arith.constant 1 : index
    %279 = memref.load %arg4[%c1_206] : memref<8xf32, #tpu.memory_space<smem>>
    %280 = vector.broadcast %279 : f32 to vector<2x1x16x16xf32>
    %281 = arith.mulf %278, %280 : vector<2x1x16x16xf32>
    %c1_207 = arith.constant 1 : index
    %282 = memref.load %arg5[%c1_207] : memref<8xf32, #tpu.memory_space<smem>>
    %283 = vector.broadcast %282 : f32 to vector<2x1x16x16xf32>
    %284 = arith.addf %281, %283 : vector<2x1x16x16xf32>
    %c0_208 = arith.constant 0 : index
    %c1_209 = arith.constant 1 : index
    %c0_210 = arith.constant 0 : index
    %c0_211 = arith.constant 0 : index
    %285 = vector.load %arg6[%c0_208, %c1_209, %c0_210, %c0_211] : memref<2x8x16x16xf32, #tpu.memory_space<vmem>>, vector<2x1x16x16xf32>
    tpu.vector_store %arg6[%c0_208, %c1_209, %c0_210, %c0_211], %284 {strides = array<i32>} : memref<2x8x16x16xf32, #tpu.memory_space<vmem>>, vector<2x1x16x16xf32>,
    %c2_212 = arith.constant 2 : index
    %286 = memref.load %arg3[%c2_212] : memref<32xf32, #tpu.memory_space<smem>>
    %287 = vector.broadcast %286 : f32 to vector<2x1x16x16xf32>
    %288 = arith.mulf %55, %287 : vector<2x1x16x16xf32>
    %c10_213 = arith.constant 10 : index
    %289 = memref.load %arg3[%c10_213] : memref<32xf32, #tpu.memory_space<smem>>
    %290 = vector.broadcast %289 : f32 to vector<2x1x16x16xf32>
    %291 = arith.mulf %101, %290 : vector<2x1x16x16xf32>
    %292 = arith.addf %288, %291 : vector<2x1x16x16xf32>
    %c18_214 = arith.constant 18 : index
    %293 = memref.load %arg3[%c18_214] : memref<32xf32, #tpu.memory_space<smem>>
    %294 = vector.broadcast %293 : f32 to vector<2x1x16x16xf32>
    %295 = arith.mulf %147, %294 : vector<2x1x16x16xf32>
    %296 = arith.addf %292, %295 : vector<2x1x16x16xf32>
    %c26_215 = arith.constant 26 : index
    %297 = memref.load %arg3[%c26_215] : memref<32xf32, #tpu.memory_space<smem>>
    %298 = vector.broadcast %297 : f32 to vector<2x1x16x16xf32>
    %299 = arith.mulf %193, %298 : vector<2x1x16x16xf32>
    %300 = arith.addf %296, %299 : vector<2x1x16x16xf32>
    %cst_216 = arith.constant dense<0.000000e+00> : vector<2x1x16xf32>
    %301 = vector.multi_reduction <add>, %300, %cst_216 [3] : vector<2x1x16x16xf32> to vector<2x1x16xf32>
    %302 = vector.shape_cast %301 : vector<2x1x16xf32> to vector<2x1x16x1xf32>
    %cst_217 = arith.constant dense<0.000000e+00> : vector<2x1x1xf32>
    %303 = vector.multi_reduction <add>, %302, %cst_217 [2] : vector<2x1x16x1xf32> to vector<2x1x1xf32>
    %304 = vector.shape_cast %303 : vector<2x1x1xf32> to vector<2x1x1x1xf32>
    %cst_218 = arith.constant dense<0.000000e+00> : vector<1x1x1xf32>
    %305 = vector.multi_reduction <add>, %304, %cst_218 [0] : vector<2x1x1x1xf32> to vector<1x1x1xf32>
    %306 = vector.shape_cast %305 : vector<1x1x1xf32> to vector<1x1x1x1xf32>
    %cst_219 = arith.constant 0.001953125 : f32
    %307 = vector.broadcast %cst_219 : f32 to vector<1x1x1x1xf32>
    %308 = arith.mulf %306, %307 : vector<1x1x1x1xf32>
    %309 = vector.broadcast %308 : vector<1x1x1x1xf32> to vector<2x1x16x16xf32>
    %310 = arith.subf %300, %309 : vector<2x1x16x16xf32>
    %311 = arith.mulf %310, %310 : vector<2x1x16x16xf32>
    %cst_220 = arith.constant dense<0.000000e+00> : vector<2x1x16xf32>
    %312 = vector.multi_reduction <add>, %311, %cst_220 [3] : vector<2x1x16x16xf32> to vector<2x1x16xf32>
    %313 = vector.shape_cast %312 : vector<2x1x16xf32> to vector<2x1x16x1xf32>
    %cst_221 = arith.constant dense<0.000000e+00> : vector<2x1x1xf32>
    %314 = vector.multi_reduction <add>, %313, %cst_221 [2] : vector<2x1x16x1xf32> to vector<2x1x1xf32>
    %315 = vector.shape_cast %314 : vector<2x1x1xf32> to vector<2x1x1x1xf32>
    %cst_222 = arith.constant dense<0.000000e+00> : vector<1x1x1xf32>
    %316 = vector.multi_reduction <add>, %315, %cst_222 [0] : vector<2x1x1x1xf32> to vector<1x1x1xf32>
    %317 = vector.shape_cast %316 : vector<1x1x1xf32> to vector<1x1x1x1xf32>
    %cst_223 = arith.constant 0.001953125 : f32
    %318 = vector.broadcast %cst_223 : f32 to vector<1x1x1x1xf32>
    %319 = arith.mulf %317, %318 : vector<1x1x1x1xf32>
    %cst_224 = arith.constant 9.99999974E-6 : f32
    %320 = vector.broadcast %cst_224 : f32 to vector<1x1x1x1xf32>
    %321 = arith.addf %319, %320 : vector<1x1x1x1xf32>
    %322 = math.rsqrt %321 : vector<1x1x1x1xf32>
    %323 = vector.broadcast %322 : vector<1x1x1x1xf32> to vector<2x1x16x16xf32>
    %324 = arith.mulf %310, %323 : vector<2x1x16x16xf32>
    %c2_225 = arith.constant 2 : index
    %325 = memref.load %arg4[%c2_225] : memref<8xf32, #tpu.memory_space<smem>>
    %326 = vector.broadcast %325 : f32 to vector<2x1x16x16xf32>
    %327 = arith.mulf %324, %326 : vector<2x1x16x16xf32>
    %c2_226 = arith.constant 2 : index
    %328 = memref.load %arg5[%c2_226] : memref<8xf32, #tpu.memory_space<smem>>
    %329 = vector.broadcast %328 : f32 to vector<2x1x16x16xf32>
    %330 = arith.addf %327, %329 : vector<2x1x16x16xf32>
    %c0_227 = arith.constant 0 : index
    %c2_228 = arith.constant 2 : index
    %c0_229 = arith.constant 0 : index
    %c0_230 = arith.constant 0 : index
    %331 = vector.load %arg6[%c0_227, %c2_228, %c0_229, %c0_230] : memref<2x8x16x16xf32, #tpu.memory_space<vmem>>, vector<2x1x16x16xf32>
    tpu.vector_store %arg6[%c0_227, %c2_228, %c0_229, %c0_230], %330 {strides = array<i32>} : memref<2x8x16x16xf32, #tpu.memory_space<vmem>>, vector<2x1x16x16xf32>,
    %c3_231 = arith.constant 3 : index
    %332 = memref.load %arg3[%c3_231] : memref<32xf32, #tpu.memory_space<smem>>
    %333 = vector.broadcast %332 : f32 to vector<2x1x16x16xf32>
    %334 = arith.mulf %55, %333 : vector<2x1x16x16xf32>
    %c11_232 = arith.constant 11 : index
    %335 = memref.load %arg3[%c11_232] : memref<32xf32, #tpu.memory_space<smem>>
    %336 = vector.broadcast %335 : f32 to vector<2x1x16x16xf32>
    %337 = arith.mulf %101, %336 : vector<2x1x16x16xf32>
    %338 = arith.addf %334, %337 : vector<2x1x16x16xf32>
    %c19_233 = arith.constant 19 : index
    %339 = memref.load %arg3[%c19_233] : memref<32xf32, #tpu.memory_space<smem>>
    %340 = vector.broadcast %339 : f32 to vector<2x1x16x16xf32>
    %341 = arith.mulf %147, %340 : vector<2x1x16x16xf32>
    %342 = arith.addf %338, %341 : vector<2x1x16x16xf32>
    %c27_234 = arith.constant 27 : index
    %343 = memref.load %arg3[%c27_234] : memref<32xf32, #tpu.memory_space<smem>>
    %344 = vector.broadcast %343 : f32 to vector<2x1x16x16xf32>
    %345 = arith.mulf %193, %344 : vector<2x1x16x16xf32>
    %346 = arith.addf %342, %345 : vector<2x1x16x16xf32>
    %cst_235 = arith.constant dense<0.000000e+00> : vector<2x1x16xf32>
    %347 = vector.multi_reduction <add>, %346, %cst_235 [3] : vector<2x1x16x16xf32> to vector<2x1x16xf32>
    %348 = vector.shape_cast %347 : vector<2x1x16xf32> to vector<2x1x16x1xf32>
    %cst_236 = arith.constant dense<0.000000e+00> : vector<2x1x1xf32>
    %349 = vector.multi_reduction <add>, %348, %cst_236 [2] : vector<2x1x16x1xf32> to vector<2x1x1xf32>
    %350 = vector.shape_cast %349 : vector<2x1x1xf32> to vector<2x1x1x1xf32>
    %cst_237 = arith.constant dense<0.000000e+00> : vector<1x1x1xf32>
    %351 = vector.multi_reduction <add>, %350, %cst_237 [0] : vector<2x1x1x1xf32> to vector<1x1x1xf32>
    %352 = vector.shape_cast %351 : vector<1x1x1xf32> to vector<1x1x1x1xf32>
    %cst_238 = arith.constant 0.001953125 : f32
    %353 = vector.broadcast %cst_238 : f32 to vector<1x1x1x1xf32>
    %354 = arith.mulf %352, %353 : vector<1x1x1x1xf32>
    %355 = vector.broadcast %354 : vector<1x1x1x1xf32> to vector<2x1x16x16xf32>
    %356 = arith.subf %346, %355 : vector<2x1x16x16xf32>
    %357 = arith.mulf %356, %356 : vector<2x1x16x16xf32>
    %cst_239 = arith.constant dense<0.000000e+00> : vector<2x1x16xf32>
    %358 = vector.multi_reduction <add>, %357, %cst_239 [3] : vector<2x1x16x16xf32> to vector<2x1x16xf32>
    %359 = vector.shape_cast %358 : vector<2x1x16xf32> to vector<2x1x16x1xf32>
    %cst_240 = arith.constant dense<0.000000e+00> : vector<2x1x1xf32>
    %360 = vector.multi_reduction <add>, %359, %cst_240 [2] : vector<2x1x16x1xf32> to vector<2x1x1xf32>
    %361 = vector.shape_cast %360 : vector<2x1x1xf32> to vector<2x1x1x1xf32>
    %cst_241 = arith.constant dense<0.000000e+00> : vector<1x1x1xf32>
    %362 = vector.multi_reduction <add>, %361, %cst_241 [0] : vector<2x1x1x1xf32> to vector<1x1x1xf32>
    %363 = vector.shape_cast %362 : vector<1x1x1xf32> to vector<1x1x1x1xf32>
    %cst_242 = arith.constant 0.001953125 : f32
    %364 = vector.broadcast %cst_242 : f32 to vector<1x1x1x1xf32>
    %365 = arith.mulf %363, %364 : vector<1x1x1x1xf32>
    %cst_243 = arith.constant 9.99999974E-6 : f32
    %366 = vector.broadcast %cst_243 : f32 to vector<1x1x1x1xf32>
    %367 = arith.addf %365, %366 : vector<1x1x1x1xf32>
    %368 = math.rsqrt %367 : vector<1x1x1x1xf32>
    %369 = vector.broadcast %368 : vector<1x1x1x1xf32> to vector<2x1x16x16xf32>
    %370 = arith.mulf %356, %369 : vector<2x1x16x16xf32>
    %c3_244 = arith.constant 3 : index
    %371 = memref.load %arg4[%c3_244] : memref<8xf32, #tpu.memory_space<smem>>
    %372 = vector.broadcast %371 : f32 to vector<2x1x16x16xf32>
    %373 = arith.mulf %370, %372 : vector<2x1x16x16xf32>
    %c3_245 = arith.constant 3 : index
    %374 = memref.load %arg5[%c3_245] : memref<8xf32, #tpu.memory_space<smem>>
    %375 = vector.broadcast %374 : f32 to vector<2x1x16x16xf32>
    %376 = arith.addf %373, %375 : vector<2x1x16x16xf32>
    %c0_246 = arith.constant 0 : index
    %c3_247 = arith.constant 3 : index
    %c0_248 = arith.constant 0 : index
    %c0_249 = arith.constant 0 : index
    %377 = vector.load %arg6[%c0_246, %c3_247, %c0_248, %c0_249] : memref<2x8x16x16xf32, #tpu.memory_space<vmem>>, vector<2x1x16x16xf32>
    tpu.vector_store %arg6[%c0_246, %c3_247, %c0_248, %c0_249], %376 {strides = array<i32>} : memref<2x8x16x16xf32, #tpu.memory_space<vmem>>, vector<2x1x16x16xf32>,
    %c4_250 = arith.constant 4 : index
    %378 = memref.load %arg3[%c4_250] : memref<32xf32, #tpu.memory_space<smem>>
    %379 = vector.broadcast %378 : f32 to vector<2x1x16x16xf32>
    %380 = arith.mulf %55, %379 : vector<2x1x16x16xf32>
    %c12_251 = arith.constant 12 : index
    %381 = memref.load %arg3[%c12_251] : memref<32xf32, #tpu.memory_space<smem>>
    %382 = vector.broadcast %381 : f32 to vector<2x1x16x16xf32>
    %383 = arith.mulf %101, %382 : vector<2x1x16x16xf32>
    %384 = arith.addf %380, %383 : vector<2x1x16x16xf32>
    %c20_252 = arith.constant 20 : index
    %385 = memref.load %arg3[%c20_252] : memref<32xf32, #tpu.memory_space<smem>>
    %386 = vector.broadcast %385 : f32 to vector<2x1x16x16xf32>
    %387 = arith.mulf %147, %386 : vector<2x1x16x16xf32>
    %388 = arith.addf %384, %387 : vector<2x1x16x16xf32>
    %c28_253 = arith.constant 28 : index
    %389 = memref.load %arg3[%c28_253] : memref<32xf32, #tpu.memory_space<smem>>
    %390 = vector.broadcast %389 : f32 to vector<2x1x16x16xf32>
    %391 = arith.mulf %193, %390 : vector<2x1x16x16xf32>
    %392 = arith.addf %388, %391 : vector<2x1x16x16xf32>
    %cst_254 = arith.constant dense<0.000000e+00> : vector<2x1x16xf32>
    %393 = vector.multi_reduction <add>, %392, %cst_254 [3] : vector<2x1x16x16xf32> to vector<2x1x16xf32>
    %394 = vector.shape_cast %393 : vector<2x1x16xf32> to vector<2x1x16x1xf32>
    %cst_255 = arith.constant dense<0.000000e+00> : vector<2x1x1xf32>
    %395 = vector.multi_reduction <add>, %394, %cst_255 [2] : vector<2x1x16x1xf32> to vector<2x1x1xf32>
    %396 = vector.shape_cast %395 : vector<2x1x1xf32> to vector<2x1x1x1xf32>
    %cst_256 = arith.constant dense<0.000000e+00> : vector<1x1x1xf32>
    %397 = vector.multi_reduction <add>, %396, %cst_256 [0] : vector<2x1x1x1xf32> to vector<1x1x1xf32>
    %398 = vector.shape_cast %397 : vector<1x1x1xf32> to vector<1x1x1x1xf32>
    %cst_257 = arith.constant 0.001953125 : f32
    %399 = vector.broadcast %cst_257 : f32 to vector<1x1x1x1xf32>
    %400 = arith.mulf %398, %399 : vector<1x1x1x1xf32>
    %401 = vector.broadcast %400 : vector<1x1x1x1xf32> to vector<2x1x16x16xf32>
    %402 = arith.subf %392, %401 : vector<2x1x16x16xf32>
    %403 = arith.mulf %402, %402 : vector<2x1x16x16xf32>
    %cst_258 = arith.constant dense<0.000000e+00> : vector<2x1x16xf32>
    %404 = vector.multi_reduction <add>, %403, %cst_258 [3] : vector<2x1x16x16xf32> to vector<2x1x16xf32>
    %405 = vector.shape_cast %404 : vector<2x1x16xf32> to vector<2x1x16x1xf32>
    %cst_259 = arith.constant dense<0.000000e+00> : vector<2x1x1xf32>
    %406 = vector.multi_reduction <add>, %405, %cst_259 [2] : vector<2x1x16x1xf32> to vector<2x1x1xf32>
    %407 = vector.shape_cast %406 : vector<2x1x1xf32> to vector<2x1x1x1xf32>
    %cst_260 = arith.constant dense<0.000000e+00> : vector<1x1x1xf32>
    %408 = vector.multi_reduction <add>, %407, %cst_260 [0] : vector<2x1x1x1xf32> to vector<1x1x1xf32>
    %409 = vector.shape_cast %408 : vector<1x1x1xf32> to vector<1x1x1x1xf32>
    %cst_261 = arith.constant 0.001953125 : f32
    %410 = vector.broadcast %cst_261 : f32 to vector<1x1x1x1xf32>
    %411 = arith.mulf %409, %410 : vector<1x1x1x1xf32>
    %cst_262 = arith.constant 9.99999974E-6 : f32
    %412 = vector.broadcast %cst_262 : f32 to vector<1x1x1x1xf32>
    %413 = arith.addf %411, %412 : vector<1x1x1x1xf32>
    %414 = math.rsqrt %413 : vector<1x1x1x1xf32>
    %415 = vector.broadcast %414 : vector<1x1x1x1xf32> to vector<2x1x16x16xf32>
    %416 = arith.mulf %402, %415 : vector<2x1x16x16xf32>
    %c4_263 = arith.constant 4 : index
    %417 = memref.load %arg4[%c4_263] : memref<8xf32, #tpu.memory_space<smem>>
    %418 = vector.broadcast %417 : f32 to vector<2x1x16x16xf32>
    %419 = arith.mulf %416, %418 : vector<2x1x16x16xf32>
    %c4_264 = arith.constant 4 : index
    %420 = memref.load %arg5[%c4_264] : memref<8xf32, #tpu.memory_space<smem>>
    %421 = vector.broadcast %420 : f32 to vector<2x1x16x16xf32>
    %422 = arith.addf %419, %421 : vector<2x1x16x16xf32>
    %c0_265 = arith.constant 0 : index
    %c4_266 = arith.constant 4 : index
    %c0_267 = arith.constant 0 : index
    %c0_268 = arith.constant 0 : index
    %423 = vector.load %arg6[%c0_265, %c4_266, %c0_267, %c0_268] : memref<2x8x16x16xf32, #tpu.memory_space<vmem>>, vector<2x1x16x16xf32>
    tpu.vector_store %arg6[%c0_265, %c4_266, %c0_267, %c0_268], %422 {strides = array<i32>} : memref<2x8x16x16xf32, #tpu.memory_space<vmem>>, vector<2x1x16x16xf32>,
    %c5_269 = arith.constant 5 : index
    %424 = memref.load %arg3[%c5_269] : memref<32xf32, #tpu.memory_space<smem>>
    %425 = vector.broadcast %424 : f32 to vector<2x1x16x16xf32>
    %426 = arith.mulf %55, %425 : vector<2x1x16x16xf32>
    %c13_270 = arith.constant 13 : index
    %427 = memref.load %arg3[%c13_270] : memref<32xf32, #tpu.memory_space<smem>>
    %428 = vector.broadcast %427 : f32 to vector<2x1x16x16xf32>
    %429 = arith.mulf %101, %428 : vector<2x1x16x16xf32>
    %430 = arith.addf %426, %429 : vector<2x1x16x16xf32>
    %c21_271 = arith.constant 21 : index
    %431 = memref.load %arg3[%c21_271] : memref<32xf32, #tpu.memory_space<smem>>
    %432 = vector.broadcast %431 : f32 to vector<2x1x16x16xf32>
    %433 = arith.mulf %147, %432 : vector<2x1x16x16xf32>
    %434 = arith.addf %430, %433 : vector<2x1x16x16xf32>
    %c29_272 = arith.constant 29 : index
    %435 = memref.load %arg3[%c29_272] : memref<32xf32, #tpu.memory_space<smem>>
    %436 = vector.broadcast %435 : f32 to vector<2x1x16x16xf32>
    %437 = arith.mulf %193, %436 : vector<2x1x16x16xf32>
    %438 = arith.addf %434, %437 : vector<2x1x16x16xf32>
    %cst_273 = arith.constant dense<0.000000e+00> : vector<2x1x16xf32>
    %439 = vector.multi_reduction <add>, %438, %cst_273 [3] : vector<2x1x16x16xf32> to vector<2x1x16xf32>
    %440 = vector.shape_cast %439 : vector<2x1x16xf32> to vector<2x1x16x1xf32>
    %cst_274 = arith.constant dense<0.000000e+00> : vector<2x1x1xf32>
    %441 = vector.multi_reduction <add>, %440, %cst_274 [2] : vector<2x1x16x1xf32> to vector<2x1x1xf32>
    %442 = vector.shape_cast %441 : vector<2x1x1xf32> to vector<2x1x1x1xf32>
    %cst_275 = arith.constant dense<0.000000e+00> : vector<1x1x1xf32>
    %443 = vector.multi_reduction <add>, %442, %cst_275 [0] : vector<2x1x1x1xf32> to vector<1x1x1xf32>
    %444 = vector.shape_cast %443 : vector<1x1x1xf32> to vector<1x1x1x1xf32>
    %cst_276 = arith.constant 0.001953125 : f32
    %445 = vector.broadcast %cst_276 : f32 to vector<1x1x1x1xf32>
    %446 = arith.mulf %444, %445 : vector<1x1x1x1xf32>
    %447 = vector.broadcast %446 : vector<1x1x1x1xf32> to vector<2x1x16x16xf32>
    %448 = arith.subf %438, %447 : vector<2x1x16x16xf32>
    %449 = arith.mulf %448, %448 : vector<2x1x16x16xf32>
    %cst_277 = arith.constant dense<0.000000e+00> : vector<2x1x16xf32>
    %450 = vector.multi_reduction <add>, %449, %cst_277 [3] : vector<2x1x16x16xf32> to vector<2x1x16xf32>
    %451 = vector.shape_cast %450 : vector<2x1x16xf32> to vector<2x1x16x1xf32>
    %cst_278 = arith.constant dense<0.000000e+00> : vector<2x1x1xf32>
    %452 = vector.multi_reduction <add>, %451, %cst_278 [2] : vector<2x1x16x1xf32> to vector<2x1x1xf32>
    %453 = vector.shape_cast %452 : vector<2x1x1xf32> to vector<2x1x1x1xf32>
    %cst_279 = arith.constant dense<0.000000e+00> : vector<1x1x1xf32>
    %454 = vector.multi_reduction <add>, %453, %cst_279 [0] : vector<2x1x1x1xf32> to vector<1x1x1xf32>
    %455 = vector.shape_cast %454 : vector<1x1x1xf32> to vector<1x1x1x1xf32>
    %cst_280 = arith.constant 0.001953125 : f32
    %456 = vector.broadcast %cst_280 : f32 to vector<1x1x1x1xf32>
    %457 = arith.mulf %455, %456 : vector<1x1x1x1xf32>
    %cst_281 = arith.constant 9.99999974E-6 : f32
    %458 = vector.broadcast %cst_281 : f32 to vector<1x1x1x1xf32>
    %459 = arith.addf %457, %458 : vector<1x1x1x1xf32>
    %460 = math.rsqrt %459 : vector<1x1x1x1xf32>
    %461 = vector.broadcast %460 : vector<1x1x1x1xf32> to vector<2x1x16x16xf32>
    %462 = arith.mulf %448, %461 : vector<2x1x16x16xf32>
    %c5_282 = arith.constant 5 : index
    %463 = memref.load %arg4[%c5_282] : memref<8xf32, #tpu.memory_space<smem>>
    %464 = vector.broadcast %463 : f32 to vector<2x1x16x16xf32>
    %465 = arith.mulf %462, %464 : vector<2x1x16x16xf32>
    %c5_283 = arith.constant 5 : index
    %466 = memref.load %arg5[%c5_283] : memref<8xf32, #tpu.memory_space<smem>>
    %467 = vector.broadcast %466 : f32 to vector<2x1x16x16xf32>
    %468 = arith.addf %465, %467 : vector<2x1x16x16xf32>
    %c0_284 = arith.constant 0 : index
    %c5_285 = arith.constant 5 : index
    %c0_286 = arith.constant 0 : index
    %c0_287 = arith.constant 0 : index
    %469 = vector.load %arg6[%c0_284, %c5_285, %c0_286, %c0_287] : memref<2x8x16x16xf32, #tpu.memory_space<vmem>>, vector<2x1x16x16xf32>
    tpu.vector_store %arg6[%c0_284, %c5_285, %c0_286, %c0_287], %468 {strides = array<i32>} : memref<2x8x16x16xf32, #tpu.memory_space<vmem>>, vector<2x1x16x16xf32>,
    %c6_288 = arith.constant 6 : index
    %470 = memref.load %arg3[%c6_288] : memref<32xf32, #tpu.memory_space<smem>>
    %471 = vector.broadcast %470 : f32 to vector<2x1x16x16xf32>
    %472 = arith.mulf %55, %471 : vector<2x1x16x16xf32>
    %c14_289 = arith.constant 14 : index
    %473 = memref.load %arg3[%c14_289] : memref<32xf32, #tpu.memory_space<smem>>
    %474 = vector.broadcast %473 : f32 to vector<2x1x16x16xf32>
    %475 = arith.mulf %101, %474 : vector<2x1x16x16xf32>
    %476 = arith.addf %472, %475 : vector<2x1x16x16xf32>
    %c22_290 = arith.constant 22 : index
    %477 = memref.load %arg3[%c22_290] : memref<32xf32, #tpu.memory_space<smem>>
    %478 = vector.broadcast %477 : f32 to vector<2x1x16x16xf32>
    %479 = arith.mulf %147, %478 : vector<2x1x16x16xf32>
    %480 = arith.addf %476, %479 : vector<2x1x16x16xf32>
    %c30_291 = arith.constant 30 : index
    %481 = memref.load %arg3[%c30_291] : memref<32xf32, #tpu.memory_space<smem>>
    %482 = vector.broadcast %481 : f32 to vector<2x1x16x16xf32>
    %483 = arith.mulf %193, %482 : vector<2x1x16x16xf32>
    %484 = arith.addf %480, %483 : vector<2x1x16x16xf32>
    %cst_292 = arith.constant dense<0.000000e+00> : vector<2x1x16xf32>
    %485 = vector.multi_reduction <add>, %484, %cst_292 [3] : vector<2x1x16x16xf32> to vector<2x1x16xf32>
    %486 = vector.shape_cast %485 : vector<2x1x16xf32> to vector<2x1x16x1xf32>
    %cst_293 = arith.constant dense<0.000000e+00> : vector<2x1x1xf32>
    %487 = vector.multi_reduction <add>, %486, %cst_293 [2] : vector<2x1x16x1xf32> to vector<2x1x1xf32>
    %488 = vector.shape_cast %487 : vector<2x1x1xf32> to vector<2x1x1x1xf32>
    %cst_294 = arith.constant dense<0.000000e+00> : vector<1x1x1xf32>
    %489 = vector.multi_reduction <add>, %488, %cst_294 [0] : vector<2x1x1x1xf32> to vector<1x1x1xf32>
    %490 = vector.shape_cast %489 : vector<1x1x1xf32> to vector<1x1x1x1xf32>
    %cst_295 = arith.constant 0.001953125 : f32
    %491 = vector.broadcast %cst_295 : f32 to vector<1x1x1x1xf32>
    %492 = arith.mulf %490, %491 : vector<1x1x1x1xf32>
    %493 = vector.broadcast %492 : vector<1x1x1x1xf32> to vector<2x1x16x16xf32>
    %494 = arith.subf %484, %493 : vector<2x1x16x16xf32>
    %495 = arith.mulf %494, %494 : vector<2x1x16x16xf32>
    %cst_296 = arith.constant dense<0.000000e+00> : vector<2x1x16xf32>
    %496 = vector.multi_reduction <add>, %495, %cst_296 [3] : vector<2x1x16x16xf32> to vector<2x1x16xf32>
    %497 = vector.shape_cast %496 : vector<2x1x16xf32> to vector<2x1x16x1xf32>
    %cst_297 = arith.constant dense<0.000000e+00> : vector<2x1x1xf32>
    %498 = vector.multi_reduction <add>, %497, %cst_297 [2] : vector<2x1x16x1xf32> to vector<2x1x1xf32>
    %499 = vector.shape_cast %498 : vector<2x1x1xf32> to vector<2x1x1x1xf32>
    %cst_298 = arith.constant dense<0.000000e+00> : vector<1x1x1xf32>
    %500 = vector.multi_reduction <add>, %499, %cst_298 [0] : vector<2x1x1x1xf32> to vector<1x1x1xf32>
    %501 = vector.shape_cast %500 : vector<1x1x1xf32> to vector<1x1x1x1xf32>
    %cst_299 = arith.constant 0.001953125 : f32
    %502 = vector.broadcast %cst_299 : f32 to vector<1x1x1x1xf32>
    %503 = arith.mulf %501, %502 : vector<1x1x1x1xf32>
    %cst_300 = arith.constant 9.99999974E-6 : f32
    %504 = vector.broadcast %cst_300 : f32 to vector<1x1x1x1xf32>
    %505 = arith.addf %503, %504 : vector<1x1x1x1xf32>
    %506 = math.rsqrt %505 : vector<1x1x1x1xf32>
    %507 = vector.broadcast %506 : vector<1x1x1x1xf32> to vector<2x1x16x16xf32>
    %508 = arith.mulf %494, %507 : vector<2x1x16x16xf32>
    %c6_301 = arith.constant 6 : index
    %509 = memref.load %arg4[%c6_301] : memref<8xf32, #tpu.memory_space<smem>>
    %510 = vector.broadcast %509 : f32 to vector<2x1x16x16xf32>
    %511 = arith.mulf %508, %510 : vector<2x1x16x16xf32>
    %c6_302 = arith.constant 6 : index
    %512 = memref.load %arg5[%c6_302] : memref<8xf32, #tpu.memory_space<smem>>
    %513 = vector.broadcast %512 : f32 to vector<2x1x16x16xf32>
    %514 = arith.addf %511, %513 : vector<2x1x16x16xf32>
    %c0_303 = arith.constant 0 : index
    %c6_304 = arith.constant 6 : index
    %c0_305 = arith.constant 0 : index
    %c0_306 = arith.constant 0 : index
    %515 = vector.load %arg6[%c0_303, %c6_304, %c0_305, %c0_306] : memref<2x8x16x16xf32, #tpu.memory_space<vmem>>, vector<2x1x16x16xf32>
    tpu.vector_store %arg6[%c0_303, %c6_304, %c0_305, %c0_306], %514 {strides = array<i32>} : memref<2x8x16x16xf32, #tpu.memory_space<vmem>>, vector<2x1x16x16xf32>,
    %c7_307 = arith.constant 7 : index
    %516 = memref.load %arg3[%c7_307] : memref<32xf32, #tpu.memory_space<smem>>
    %517 = vector.broadcast %516 : f32 to vector<2x1x16x16xf32>
    %518 = arith.mulf %55, %517 : vector<2x1x16x16xf32>
    %c15_308 = arith.constant 15 : index
    %519 = memref.load %arg3[%c15_308] : memref<32xf32, #tpu.memory_space<smem>>
    %520 = vector.broadcast %519 : f32 to vector<2x1x16x16xf32>
    %521 = arith.mulf %101, %520 : vector<2x1x16x16xf32>
    %522 = arith.addf %518, %521 : vector<2x1x16x16xf32>
    %c23_309 = arith.constant 23 : index
    %523 = memref.load %arg3[%c23_309] : memref<32xf32, #tpu.memory_space<smem>>
    %524 = vector.broadcast %523 : f32 to vector<2x1x16x16xf32>
    %525 = arith.mulf %147, %524 : vector<2x1x16x16xf32>
    %526 = arith.addf %522, %525 : vector<2x1x16x16xf32>
    %c31_310 = arith.constant 31 : index
    %527 = memref.load %arg3[%c31_310] : memref<32xf32, #tpu.memory_space<smem>>
    %528 = vector.broadcast %527 : f32 to vector<2x1x16x16xf32>
    %529 = arith.mulf %193, %528 : vector<2x1x16x16xf32>
    %530 = arith.addf %526, %529 : vector<2x1x16x16xf32>
    %cst_311 = arith.constant dense<0.000000e+00> : vector<2x1x16xf32>
    %531 = vector.multi_reduction <add>, %530, %cst_311 [3] : vector<2x1x16x16xf32> to vector<2x1x16xf32>
    %532 = vector.shape_cast %531 : vector<2x1x16xf32> to vector<2x1x16x1xf32>
    %cst_312 = arith.constant dense<0.000000e+00> : vector<2x1x1xf32>
    %533 = vector.multi_reduction <add>, %532, %cst_312 [2] : vector<2x1x16x1xf32> to vector<2x1x1xf32>
    %534 = vector.shape_cast %533 : vector<2x1x1xf32> to vector<2x1x1x1xf32>
    %cst_313 = arith.constant dense<0.000000e+00> : vector<1x1x1xf32>
    %535 = vector.multi_reduction <add>, %534, %cst_313 [0] : vector<2x1x1x1xf32> to vector<1x1x1xf32>
    %536 = vector.shape_cast %535 : vector<1x1x1xf32> to vector<1x1x1x1xf32>
    %cst_314 = arith.constant 0.001953125 : f32
    %537 = vector.broadcast %cst_314 : f32 to vector<1x1x1x1xf32>
    %538 = arith.mulf %536, %537 : vector<1x1x1x1xf32>
    %539 = vector.broadcast %538 : vector<1x1x1x1xf32> to vector<2x1x16x16xf32>
    %540 = arith.subf %530, %539 : vector<2x1x16x16xf32>
    %541 = arith.mulf %540, %540 : vector<2x1x16x16xf32>
    %cst_315 = arith.constant dense<0.000000e+00> : vector<2x1x16xf32>
    %542 = vector.multi_reduction <add>, %541, %cst_315 [3] : vector<2x1x16x16xf32> to vector<2x1x16xf32>
    %543 = vector.shape_cast %542 : vector<2x1x16xf32> to vector<2x1x16x1xf32>
    %cst_316 = arith.constant dense<0.000000e+00> : vector<2x1x1xf32>
    %544 = vector.multi_reduction <add>, %543, %cst_316 [2] : vector<2x1x16x1xf32> to vector<2x1x1xf32>
    %545 = vector.shape_cast %544 : vector<2x1x1xf32> to vector<2x1x1x1xf32>
    %cst_317 = arith.constant dense<0.000000e+00> : vector<1x1x1xf32>
    %546 = vector.multi_reduction <add>, %545, %cst_317 [0] : vector<2x1x1x1xf32> to vector<1x1x1xf32>
    %547 = vector.shape_cast %546 : vector<1x1x1xf32> to vector<1x1x1x1xf32>
    %cst_318 = arith.constant 0.001953125 : f32
    %548 = vector.broadcast %cst_318 : f32 to vector<1x1x1x1xf32>
    %549 = arith.mulf %547, %548 : vector<1x1x1x1xf32>
    %cst_319 = arith.constant 9.99999974E-6 : f32
    %550 = vector.broadcast %cst_319 : f32 to vector<1x1x1x1xf32>
    %551 = arith.addf %549, %550 : vector<1x1x1x1xf32>
    %552 = math.rsqrt %551 : vector<1x1x1x1xf32>
    %553 = vector.broadcast %552 : vector<1x1x1x1xf32> to vector<2x1x16x16xf32>
    %554 = arith.mulf %540, %553 : vector<2x1x16x16xf32>
    %c7_320 = arith.constant 7 : index
    %555 = memref.load %arg4[%c7_320] : memref<8xf32, #tpu.memory_space<smem>>
    %556 = vector.broadcast %555 : f32 to vector<2x1x16x16xf32>
    %557 = arith.mulf %554, %556 : vector<2x1x16x16xf32>
    %c7_321 = arith.constant 7 : index
    %558 = memref.load %arg5[%c7_321] : memref<8xf32, #tpu.memory_space<smem>>
    %559 = vector.broadcast %558 : f32 to vector<2x1x16x16xf32>
    %560 = arith.addf %557, %559 : vector<2x1x16x16xf32>
    %c0_322 = arith.constant 0 : index
    %c7_323 = arith.constant 7 : index
    %c0_324 = arith.constant 0 : index
    %c0_325 = arith.constant 0 : index
    %561 = vector.load %arg6[%c0_322, %c7_323, %c0_324, %c0_325] : memref<2x8x16x16xf32, #tpu.memory_space<vmem>>, vector<2x1x16x16xf32>
    tpu.vector_store %arg6[%c0_322, %c7_323, %c0_324, %c0_325], %560 {strides = array<i32>} : memref<2x8x16x16xf32, #tpu.memory_space<vmem>>, vector<2x1x16x16xf32>,
    return
  }
  func.func @transform_0(%arg0: i32) -> (i32, i32, i32, i32) {
    %c0_i32 = arith.constant 0 : i32
    %c0_i32_0 = arith.constant 0 : i32
    %c0_i32_1 = arith.constant 0 : i32
    %c0_i32_2 = arith.constant 0 : i32
    %c0_i32_3 = arith.constant 0 : i32
    return %c0_i32, %c0_i32_0, %c0_i32_1, %c0_i32_2 : i32, i32, i32, i32
  }
  func.func @transform_1(%arg0: i32) -> i32 {
    %c0_i32 = arith.constant 0 : i32
    %c0_i32_0 = arith.constant 0 : i32
    return %c0_i32 : i32
  }
  func.func @transform_2(%arg0: i32) -> i32 {
    %c0_i32 = arith.constant 0 : i32
    %c0_i32_0 = arith.constant 0 : i32
    return %c0_i32 : i32
  }
  func.func @transform_3(%arg0: i32) -> i32 {
    %c0_i32 = arith.constant 0 : i32
    %c0_i32_0 = arith.constant 0 : i32
    return %c0_i32 : i32
  }
  func.func @transform_4(%arg0: i32) -> i32 {
    %c0_i32 = arith.constant 0 : i32
    %c0_i32_0 = arith.constant 0 : i32
    return %c0_i32 : i32
  }
  func.func @transform_5(%arg0: i32) -> (i32, i32, i32, i32) {
    %c0_i32 = arith.constant 0 : i32
    %c0_i32_0 = arith.constant 0 : i32
    %c0_i32_1 = arith.constant 0 : i32
    %c0_i32_2 = arith.constant 0 : i32
    %c0_i32_3 = arith.constant 0 : i32
    return %c0_i32, %c0_i32_0, %c0_i32_1, %c0_i32_2 : i32, i32, i32, i32
  }
}

</mosaic_0001>

<llo_original>
// kernel: tpu_custom_call.1
$region0: #{tpu_custom_call.1}
  #allocation0 [shape = 'u32[]', space=smem, size = 0x4, offset = 0x4, fixed_abs, tag = 'smem constant byte address 0x4 - core index']
  #allocation1 [shape = 'u32[72,128]{1,0:T(1,128)}', space=vmem, size = 0x9000, scoped, tag = 'internal scratch']
  #allocation2 [shape = 'f32[2,4,20,20]{3,2,1,0:T(8,128)}', space=vmem, size = 0x18000, scoped, tag = 'scratch operand']
  %s0 = inlined_call_operand.hbm [shape: f32[2,4,16,16], index: 0, kind: input, shape index: {}]
  %s1 = inlined_call_operand.hbm [shape: f32[36], index: 1, kind: input, shape index: {}]
  %s2 = inlined_call_operand.vmem [shape: f32[32], index: 2, kind: input, shape index: {}]
  %s3 = inlined_call_operand.vmem [shape: f32[8], index: 3, kind: input, shape index: {}]
  %s4 = inlined_call_operand.vmem [shape: f32[8], index: 4, kind: input, shape index: {}]
  %s5 = inlined_call_operand.hbm [shape: f32[2,8,16,16], index: 5, kind: output, shape index: {}]
  %s6 = sld [smem:[#allocation0]]
  $region50: #{tpu_custom_call.1} parent=0
    _
  %s8 = ssub.s32 1, %s6
  %s9 = scalar_select 0, %s8, %s6
  $region1: #{tpu_custom_call.1} parent=0
    #allocation3 [shape = 'u8[65536]{0}', space=vmem, size = 0x10000, scoped, tag = 'input window, operand 0, single buffered']
    #allocation4 [shape = 's32[1]{0}', space=sflag, size = 0x4, scoped, tag = 'scoped memory for tpu_custom_call.1']
    #allocation5 [shape = 's32[1]{0}', space=sflag, size = 0x4, scoped, tag = 'scoped memory for tpu_custom_call.1']
    #allocation6 [shape = 's32[1]{0}', space=sflag, size = 0x4, scoped, tag = 'scoped memory for tpu_custom_call.1']
    #allocation7 [shape = 's32[1]{0}', space=sflag, size = 0x4, scoped, tag = 'scoped memory for tpu_custom_call.1']
    #allocation8 [shape = 'u8[512]{0}', space=smem, size = 0x200, scoped, tag = 'input window, operand 1, single buffered']
    #allocation9 [shape = 'u8[512]{0}', space=smem, size = 0x200, scoped, tag = 'input window, operand 2, single buffered']
    #allocation10 [shape = 'u8[512]{0}', space=smem, size = 0x200, scoped, tag = 'input window, operand 3, single buffered']
    #allocation11 [shape = 's32[1]{0}', space=sflag, size = 0x4, scoped, tag = 'scoped memory for tpu_custom_call.1']
    #allocation12 [shape = 'u8[512]{0}', space=smem, size = 0x200, scoped, tag = 'input window, operand 4, single buffered']
    #allocation13 [shape = 'u8[131072]{0}', space=vmem, size = 0x20000, scoped, tag = 'output window, operand 0, single buffered']
    %10 = vsyncpa [#allocation4], 0
    %11 = vsyncpa [#allocation6], 0
    %12 = vsyncpa [#allocation7], 0
    %13 = vsyncpa [#allocation11], 0
    %14 = vsyncpa [#allocation5], 0
    // Predicated region
    $region2: #{tpu_custom_call.1} parent=1 // pred_check
      _
    $region3: #{tpu_custom_call.1} parent=1 // pred_check_branch
      %16 = sbr.rel (0) target = $region5
    $region4: #{tpu_custom_call.1} parent=1 // pred_region
      %18 = vsyncadd [#allocation4], 0
      %s19 = sshll.u32 %s0, 4
      %s20 = int_to_ptr.hbm [resolvable:$true] %s19
      %s21 = sshll.u32 [#allocation3], 4
      %s22 = int_to_ptr.vmem [resolvable:$true] %s21
      %27 = dma.hbm_to_vmem [thread:$0]  %s20, 2048, %s22, [#allocation4], 128, 128, 8
    $region5: #{tpu_custom_call.1} parent=1 // pred_fallthru
      _
    // Predicated region
    $region6: #{tpu_custom_call.1} parent=1 // pred_check
      _
    $region7: #{tpu_custom_call.1} parent=1 // pred_check_branch
      %29 = sbr.rel (0) target = $region9
    $region8: #{tpu_custom_call.1} parent=1 // pred_region
      %31 = vsyncadd [#allocation6], 0
      %s33 = sshll.u32 %s1, 4
      %s34 = int_to_ptr.hbm [resolvable:$true] %s33
      %36 = dma.hbm_to_smem %s34, 16, [#allocation8], [#allocation6]
    $region9: #{tpu_custom_call.1} parent=1 // pred_fallthru
      _
    // Predicated region
    $region10: #{tpu_custom_call.1} parent=1 // pred_check
      _
    $region11: #{tpu_custom_call.1} parent=1 // pred_check_branch
      %38 = sbr.rel (0) target = $region13
    $region12: #{tpu_custom_call.1} parent=1 // pred_region
      %40 = vsyncadd [#allocation7], 0
      %s42 = sshll.u32 %s2, 4
      %s43 = int_to_ptr.vmem [resolvable:$true] %s42
      %45 = dma.vmem_to_smem %s43, 16, [#allocation9], [#allocation7]
    $region13: #{tpu_custom_call.1} parent=1 // pred_fallthru
      _
    // Predicated region
    $region14: #{tpu_custom_call.1} parent=1 // pred_check
      _
    $region15: #{tpu_custom_call.1} parent=1 // pred_check_branch
      %47 = sbr.rel (0) target = $region17
    $region16: #{tpu_custom_call.1} parent=1 // pred_region
      %49 = vsyncadd [#allocation11], 0
      %s51 = sshll.u32 %s3, 4
      %s52 = int_to_ptr.vmem [resolvable:$true] %s51
      %54 = dma.vmem_to_smem %s52, 16, [#allocation10], [#allocation11]
    $region17: #{tpu_custom_call.1} parent=1 // pred_fallthru
      _
    // Predicated region
    $region18: #{tpu_custom_call.1} parent=1 // pred_check
      _
    $region19: #{tpu_custom_call.1} parent=1 // pred_check_branch
      %56 = sbr.rel (0) target = $region21
    $region20: #{tpu_custom_call.1} parent=1 // pred_region
      %58 = vsyncadd [#allocation11], 0
      %s60 = sshll.u32 %s4, 4
      %s61 = int_to_ptr.vmem [resolvable:$true] %s60
      %63 = dma.vmem_to_smem %s61, 16, [#allocation12], [#allocation11]
    $region21: #{tpu_custom_call.1} parent=1 // pred_fallthru
      _
    // Predicated region
    $region22: #{tpu_custom_call.1} parent=1 // pred_check
      _
    $region23: #{tpu_custom_call.1} parent=1 // pred_check_branch
      %65 = sbr.rel (0) target = $region25
    $region24: #{tpu_custom_call.1} parent=1 // pred_region
      %67 = dma.done [#allocation4], 2048
    $region25: #{tpu_custom_call.1} parent=1 // pred_fallthru
      _
    // Predicated region
    $region26: #{tpu_custom_call.1} parent=1 // pred_check
      _
    $region27: #{tpu_custom_call.1} parent=1 // pred_check_branch
      %69 = sbr.rel (0) target = $region29
    $region28: #{tpu_custom_call.1} parent=1 // pred_region
      %71 = dma.done [#allocation6], 16
    $region29: #{tpu_custom_call.1} parent=1 // pred_fallthru
      _
    // Predicated region
    $region30: #{tpu_custom_call.1} parent=1 // pred_check
      _
    $region31: #{tpu_custom_call.1} parent=1 // pred_check_branch
      %73 = sbr.rel (0) target = $region33
    $region32: #{tpu_custom_call.1} parent=1 // pred_region
      %75 = dma.done [#allocation7], 16
    $region33: #{tpu_custom_call.1} parent=1 // pred_fallthru
      _
    // Predicated region
    $region34: #{tpu_custom_call.1} parent=1 // pred_check
      _
    $region35: #{tpu_custom_call.1} parent=1 // pred_check_branch
      %77 = sbr.rel (0) target = $region37
    $region36: #{tpu_custom_call.1} parent=1 // pred_region
      %79 = dma.done [#allocation11], 16
    $region37: #{tpu_custom_call.1} parent=1 // pred_fallthru
      _
    // Predicated region
    $region38: #{tpu_custom_call.1} parent=1 // pred_check
      _
    $region39: #{tpu_custom_call.1} parent=1 // pred_check_branch
      %81 = sbr.rel (0) target = $region41
    $region40: #{tpu_custom_call.1} parent=1 // pred_region
      %83 = dma.done [#allocation11], 16
    $region41: #{tpu_custom_call.1} parent=1 // pred_fallthru
      _
    %84 = sfence
    %v85 = vld [vmem:[#allocation3] sm:$0xff]
    %v86 = vld [vmem:[#allocation3 + $0x8] sm:$0xff]
    %v87 = vld [vmem:[#allocation3 + $0x10] sm:$0xff]
    %v88 = vld [vmem:[#allocation3 + $0x18] sm:$0xff]
    %v89 = vld [vmem:[#allocation3 + $0x20] sm:$0xff]
    %v90 = vld [vmem:[#allocation3 + $0x28] sm:$0xff]
    %v91 = vld [vmem:[#allocation3 + $0x30] sm:$0xff]
    %v92 = vld [vmem:[#allocation3 + $0x38] sm:$0xff]
    %v93 = vld [vmem:[#allocation3 + $0x40] sm:$0xff]
    %v94 = vld [vmem:[#allocation3 + $0x48] sm:$0xff]
    %v95 = vld [vmem:[#allocation3 + $0x50] sm:$0xff]
    %v96 = vld [vmem:[#allocation3 + $0x58] sm:$0xff]
    %v97 = vld [vmem:[#allocation3 + $0x60] sm:$0xff]
    %v98 = vld [vmem:[#allocation3 + $0x68] sm:$0xff]
    %v99 = vld [vmem:[#allocation3 + $0x70] sm:$0xff]
    %v100 = vld [vmem:[#allocation3 + $0x78] sm:$0xff]
    %v101 = vmax.f32 %v85, 0.0
    %v102 = vmax.f32 %v86, 0.0
    %v103 = vmax.f32 %v87, 0.0
    %v104 = vmax.f32 %v88, 0.0
    %v105 = vmax.f32 %v89, 0.0
    %v106 = vmax.f32 %v90, 0.0
    %v107 = vmax.f32 %v91, 0.0
    %v108 = vmax.f32 %v92, 0.0
    %v109 = vmax.f32 %v93, 0.0
    %v110 = vmax.f32 %v94, 0.0
    %v111 = vmax.f32 %v95, 0.0
    %v112 = vmax.f32 %v96, 0.0
    %v113 = vmax.f32 %v97, 0.0
    %v114 = vmax.f32 %v98, 0.0
    %v115 = vmax.f32 %v99, 0.0
    %v116 = vmax.f32 %v100, 0.0
    %vm117 = vcmask 156672
    %118 = vst.msk [vmem:[#allocation2] sm:$0x3] %vm117, 0.0
    %119 = vst.msk [vmem:[#allocation2 + $0x18] sm:$0x3] %vm117, 0.0
    %120 = vst.msk [vmem:[#allocation2 + $0x30] sm:$0x3] %vm117, 0.0
    %121 = vst.msk [vmem:[#allocation2 + $0x48] sm:$0x3] %vm117, 0.0
    %122 = vst.msk [vmem:[#allocation2 + $0x60] sm:$0x3] %vm117, 0.0
    %123 = vst.msk [vmem:[#allocation2 + $0x78] sm:$0x3] %vm117, 0.0
    %124 = vst.msk [vmem:[#allocation2 + $0x90] sm:$0x3] %vm117, 0.0
    %125 = vst.msk [vmem:[#allocation2 + $0xa8] sm:$0x3] %vm117, 0.0
    %126 = vst.msk [vmem:[#allocation2 + $0x12] sm:$0x3] %vm117, 0.0
    %127 = vst.msk [vmem:[#allocation2 + $0x2a] sm:$0x3] %vm117, 0.0
    %128 = vst.msk [vmem:[#allocation2 + $0x42] sm:$0x3] %vm117, 0.0
    %129 = vst.msk [vmem:[#allocation2 + $0x5a] sm:$0x3] %vm117, 0.0
    %130 = vst.msk [vmem:[#allocation2 + $0x72] sm:$0x3] %vm117, 0.0
    %131 = vst.msk [vmem:[#allocation2 + $0x8a] sm:$0x3] %vm117, 0.0
    %132 = vst.msk [vmem:[#allocation2 + $0xa2] sm:$0x3] %vm117, 0.0
    %133 = vst.msk [vmem:[#allocation2 + $0xba] sm:$0x3] %vm117, 0.0
    %vm134 = vcmask 15360
    %135 = vst.msk [vmem:[#allocation2 + $0x2] sm:$0xff] %vm134, 0.0
    %136 = vst.msk [vmem:[#allocation2 + $0xa] sm:$0xff] %vm134, 0.0
    %137 = vst.msk [vmem:[#allocation2 + $0x1a] sm:$0xff] %vm134, 0.0
    %138 = vst.msk [vmem:[#allocation2 + $0x22] sm:$0xff] %vm134, 0.0
    %139 = vst.msk [vmem:[#allocation2 + $0x32] sm:$0xff] %vm134, 0.0
    %140 = vst.msk [vmem:[#allocation2 + $0x3a] sm:$0xff] %vm134, 0.0
    %141 = vst.msk [vmem:[#allocation2 + $0x4a] sm:$0xff] %vm134, 0.0
    %142 = vst.msk [vmem:[#allocation2 + $0x52] sm:$0xff] %vm134, 0.0
    %143 = vst.msk [vmem:[#allocation2 + $0x62] sm:$0xff] %vm134, 0.0
    %144 = vst.msk [vmem:[#allocation2 + $0x6a] sm:$0xff] %vm134, 0.0
    %145 = vst.msk [vmem:[#allocation2 + $0x7a] sm:$0xff] %vm134, 0.0
    %146 = vst.msk [vmem:[#allocation2 + $0x82] sm:$0xff] %vm134, 0.0
    %147 = vst.msk [vmem:[#allocation2 + $0x92] sm:$0xff] %vm134, 0.0
    %148 = vst.msk [vmem:[#allocation2 + $0x9a] sm:$0xff] %vm134, 0.0
    %149 = vst.msk [vmem:[#allocation2 + $0xaa] sm:$0xff] %vm134, 0.0
    %150 = vst.msk [vmem:[#allocation2 + $0xb2] sm:$0xff] %vm134, 0.0
    %vm151 = vcmask 162960
    %152 = vst.msk [vmem:[#allocation2 + $0x2] sm:$0xff] %vm151, 0.0
    %153 = vst.msk [vmem:[#allocation2 + $0xa] sm:$0xff] %vm151, 0.0
    %154 = vst.msk [vmem:[#allocation2 + $0x1a] sm:$0xff] %vm151, 0.0
    %155 = vst.msk [vmem:[#allocation2 + $0x22] sm:$0xff] %vm151, 0.0
    %156 = vst.msk [vmem:[#allocation2 + $0x32] sm:$0xff] %vm151, 0.0
    %157 = vst.msk [vmem:[#allocation2 + $0x3a] sm:$0xff] %vm151, 0.0
    %158 = vst.msk [vmem:[#allocation2 + $0x4a] sm:$0xff] %vm151, 0.0
    %159 = vst.msk [vmem:[#allocation2 + $0x52] sm:$0xff] %vm151, 0.0
    %160 = vst.msk [vmem:[#allocation2 + $0x62] sm:$0xff] %vm151, 0.0
    %161 = vst.msk [vmem:[#allocation2 + $0x6a] sm:$0xff] %vm151, 0.0
    %162 = vst.msk [vmem:[#allocation2 + $0x7a] sm:$0xff] %vm151, 0.0
    %163 = vst.msk [vmem:[#allocation2 + $0x82] sm:$0xff] %vm151, 0.0
    %164 = vst.msk [vmem:[#allocation2 + $0x92] sm:$0xff] %vm151, 0.0
    %165 = vst.msk [vmem:[#allocation2 + $0x9a] sm:$0xff] %vm151, 0.0
    %166 = vst.msk [vmem:[#allocation2 + $0xaa] sm:$0xff] %vm151, 0.0
    %167 = vst.msk [vmem:[#allocation2 + $0xb2] sm:$0xff] %vm151, 0.0
    %184 = vrot.lane.b32.xlu0 %v101, 2
    %v185 = vpop.permute.xlu0 %184
    %186 = vrot.lane.b32.xlu0 %v102, 2
    %v187 = vpop.permute.xlu0 %186
    %188 = vrot.lane.b32.xlu0 %v103, 2
    %v189 = vpop.permute.xlu0 %188
    %190 = vrot.lane.b32.xlu0 %v104, 2
    %v191 = vpop.permute.xlu0 %190
    %192 = vrot.lane.b32.xlu0 %v105, 2
    %v193 = vpop.permute.xlu0 %192
    %194 = vrot.lane.b32.xlu0 %v106, 2
    %v195 = vpop.permute.xlu0 %194
    %196 = vrot.lane.b32.xlu0 %v107, 2
    %v197 = vpop.permute.xlu0 %196
    %198 = vrot.lane.b32.xlu0 %v108, 2
    %v199 = vpop.permute.xlu0 %198
    %200 = vrot.lane.b32.xlu0 %v109, 2
    %v201 = vpop.permute.xlu0 %200
    %202 = vrot.lane.b32.xlu0 %v110, 2
    %v203 = vpop.permute.xlu0 %202
    %204 = vrot.lane.b32.xlu0 %v111, 2
    %v205 = vpop.permute.xlu0 %204
    %206 = vrot.lane.b32.xlu0 %v112, 2
    %v207 = vpop.permute.xlu0 %206
    %208 = vrot.lane.b32.xlu0 %v113, 2
    %v209 = vpop.permute.xlu0 %208
    %210 = vrot.lane.b32.xlu0 %v114, 2
    %v211 = vpop.permute.xlu0 %210
    %212 = vrot.lane.b32.xlu0 %v115, 2
    %v213 = vpop.permute.xlu0 %212
    %214 = vrot.lane.b32.xlu0 %v116, 2
    %v215 = vpop.permute.xlu0 %214
    %vm232 = vcmask 146448
    %233 = vst.msk [vmem:[#allocation2 + $0x2] sm:$0xff] %vm232, %v185
    %234 = vst.msk [vmem:[#allocation2 + $0xa] sm:$0xff] %vm232, %v187
    %235 = vst.msk [vmem:[#allocation2 + $0x1a] sm:$0xff] %vm232, %v189
    %236 = vst.msk [vmem:[#allocation2 + $0x22] sm:$0xff] %vm232, %v191
    %237 = vst.msk [vmem:[#allocation2 + $0x32] sm:$0xff] %vm232, %v193
    %238 = vst.msk [vmem:[#allocation2 + $0x3a] sm:$0xff] %vm232, %v195
    %239 = vst.msk [vmem:[#allocation2 + $0x4a] sm:$0xff] %vm232, %v197
    %240 = vst.msk [vmem:[#allocation2 + $0x52] sm:$0xff] %vm232, %v199
    %241 = vst.msk [vmem:[#allocation2 + $0x62] sm:$0xff] %vm232, %v201
    %242 = vst.msk [vmem:[#allocation2 + $0x6a] sm:$0xff] %vm232, %v203
    %243 = vst.msk [vmem:[#allocation2 + $0x7a] sm:$0xff] %vm232, %v205
    %244 = vst.msk [vmem:[#allocation2 + $0x82] sm:$0xff] %vm232, %v207
    %245 = vst.msk [vmem:[#allocation2 + $0x92] sm:$0xff] %vm232, %v209
    %246 = vst.msk [vmem:[#allocation2 + $0x9a] sm:$0xff] %vm232, %v211
    %247 = vst.msk [vmem:[#allocation2 + $0xaa] sm:$0xff] %vm232, %v213
    %248 = vst.msk [vmem:[#allocation2 + $0xb2] sm:$0xff] %vm232, %v215
    %v249 = vld [vmem:[#allocation2] sm:$0xff]
    %v250 = vld [vmem:[#allocation2 + $0x8] sm:$0xff]
    %v251 = vld [vmem:[#allocation2 + $0x60] sm:$0xff]
    %v252 = vld [vmem:[#allocation2 + $0x68] sm:$0xff]
    %s253 = sld [smem:[#allocation8]]
    %v254 = vstv %s253
    %v255 = vmul.f32 %v249, %v254
    %v256 = vmul.f32 %v250, %v254
    %v257 = vmul.f32 %v251, %v254
    %v258 = vmul.f32 %v252, %v254
    %v259 = vadd.f32 %v255, 0.0
    %v260 = vadd.f32 %v256, 0.0
    %v261 = vadd.f32 %v257, 0.0
    %v262 = vadd.f32 %v258, 0.0
    %s263 = sld [smem:[#allocation8 + $0x4]]
    %v264 = vstv %s263
    %v265 = vmul.f32 %v249, %v264
    %v266 = vmul.f32 %v250, %v264
    %v267 = vmul.f32 %v251, %v264
    %v268 = vmul.f32 %v252, %v264
    %273 = vrot.lane.b32.xlu0 %v265, 126
    %v274 = vpop.permute.xlu0 %273
    %275 = vrot.lane.b32.xlu0 %v266, 126
    %v276 = vpop.permute.xlu0 %275
    %277 = vrot.lane.b32.xlu0 %v267, 126
    %v278 = vpop.permute.xlu0 %277
    %279 = vrot.lane.b32.xlu0 %v268, 126
    %v280 = vpop.permute.xlu0 %279
    %v285 = vadd.f32 %v259, %v274
    %v286 = vadd.f32 %v260, %v276
    %v287 = vadd.f32 %v261, %v278
    %v288 = vadd.f32 %v262, %v280
    %s289 = sld [smem:[#allocation8 + $0x8]]
    %v290 = vstv %s289
    %v291 = vmul.f32 %v249, %v290
    %v292 = vmul.f32 %v250, %v290
    %v293 = vmul.f32 %v251, %v290
    %v294 = vmul.f32 %v252, %v290
    %299 = vrot.lane.b32.xlu0 %v291, 124
    %v300 = vpop.permute.xlu0 %299
    %301 = vrot.lane.b32.xlu0 %v292, 124
    %v302 = vpop.permute.xlu0 %301
    %303 = vrot.lane.b32.xlu0 %v293, 124
    %v304 = vpop.permute.xlu0 %303
    %305 = vrot.lane.b32.xlu0 %v294, 124
    %v306 = vpop.permute.xlu0 %305
    %v311 = vadd.f32 %v285, %v300
    %v312 = vadd.f32 %v286, %v302
    %v313 = vadd.f32 %v287, %v304
    %v314 = vadd.f32 %v288, %v306
    %v315 = vld [vmem:[#allocation2 + $0x2] sm:$0xff]
    %v316 = vld [vmem:[#allocation2 + $0xa] sm:$0xff]
    %v317 = vld [vmem:[#allocation2 + $0x62] sm:$0xff]
    %v318 = vld [vmem:[#allocation2 + $0x6a] sm:$0xff]
    %s319 = sld [smem:[#allocation8 + $0xc]]
    %v320 = vstv %s319
    %v321 = vmul.f32 %v315, %v320
    %v322 = vmul.f32 %v316, %v320
    %v323 = vmul.f32 %v317, %v320
    %v324 = vmul.f32 %v318, %v320
    %v325 = vadd.f32 %v311, %v321
    %v326 = vadd.f32 %v312, %v322
    %v327 = vadd.f32 %v313, %v323
    %v328 = vadd.f32 %v314, %v324
    %s329 = sld [smem:[#allocation8 + $0x10]]
    %v330 = vstv %s329
    %v331 = vmul.f32 %v315, %v330
    %v332 = vmul.f32 %v316, %v330
    %v333 = vmul.f32 %v317, %v330
    %v334 = vmul.f32 %v318, %v330
    %339 = vrot.lane.b32.xlu0 %v331, 126
    %v340 = vpop.permute.xlu0 %339
    %341 = vrot.lane.b32.xlu0 %v332, 126
    %v342 = vpop.permute.xlu0 %341
    %343 = vrot.lane.b32.xlu0 %v333, 126
    %v344 = vpop.permute.xlu0 %343
    %345 = vrot.lane.b32.xlu0 %v334, 126
    %v346 = vpop.permute.xlu0 %345
    %v351 = vadd.f32 %v325, %v340
    %v352 = vadd.f32 %v326, %v342
    %v353 = vadd.f32 %v327, %v344
    %v354 = vadd.f32 %v328, %v346
    %s355 = sld [smem:[#allocation8 + $0x14]]
    %v356 = vstv %s355
    %v357 = vmul.f32 %v315, %v356
    %v358 = vmul.f32 %v316, %v356
    %v359 = vmul.f32 %v317, %v356
    %v360 = vmul.f32 %v318, %v356
    %365 = vrot.lane.b32.xlu0 %v357, 124
    %v366 = vpop.permute.xlu0 %365
    %367 = vrot.lane.b32.xlu0 %v358, 124
    %v368 = vpop.permute.xlu0 %367
    %369 = vrot.lane.b32.xlu0 %v359, 124
    %v370 = vpop.permute.xlu0 %369
    %371 = vrot.lane.b32.xlu0 %v360, 124
    %v372 = vpop.permute.xlu0 %371
    %v377 = vadd.f32 %v351, %v366
    %v378 = vadd.f32 %v352, %v368
    %v379 = vadd.f32 %v353, %v370
    %v380 = vadd.f32 %v354, %v372
    %v381 = vld [vmem:[#allocation2 + $0x4] sm:$0xff]
    %v382 = vld [vmem:[#allocation2 + $0xc] sm:$0xff]
    %v383 = vld [vmem:[#allocation2 + $0x64] sm:$0xff]
    %v384 = vld [vmem:[#allocation2 + $0x6c] sm:$0xff]
    %s385 = sld [smem:[#allocation8 + $0x18]]
    %v386 = vstv %s385
    %v387 = vmul.f32 %v381, %v386
    %v388 = vmul.f32 %v382, %v386
    %v389 = vmul.f32 %v383, %v386
    %v390 = vmul.f32 %v384, %v386
    %v391 = vadd.f32 %v377, %v387
    %v392 = vadd.f32 %v378, %v388
    %v393 = vadd.f32 %v379, %v389
    %v394 = vadd.f32 %v380, %v390
    %s395 = sld [smem:[#allocation8 + $0x1c]]
    %v396 = vstv %s395
    %v397 = vmul.f32 %v381, %v396
    %v398 = vmul.f32 %v382, %v396
    %v399 = vmul.f32 %v383, %v396
    %v400 = vmul.f32 %v384, %v396
    %405 = vrot.lane.b32.xlu0 %v397, 126
    %v406 = vpop.permute.xlu0 %405
    %407 = vrot.lane.b32.xlu0 %v398, 126
    %v408 = vpop.permute.xlu0 %407
    %409 = vrot.lane.b32.xlu0 %v399, 126
    %v410 = vpop.permute.xlu0 %409
    %411 = vrot.lane.b32.xlu0 %v400, 126
    %v412 = vpop.permute.xlu0 %411
    %v417 = vadd.f32 %v391, %v406
    %v418 = vadd.f32 %v392, %v408
    %v419 = vadd.f32 %v393, %v410
    %v420 = vadd.f32 %v394, %v412
    %s421 = sld [smem:[#allocation8 + $0x20]]
    %v422 = vstv %s421
    %v423 = vmul.f32 %v381, %v422
    %v424 = vmul.f32 %v382, %v422
    %v425 = vmul.f32 %v383, %v422
    %v426 = vmul.f32 %v384, %v422
    %431 = vrot.lane.b32.xlu0 %v423, 124
    %v432 = vpop.permute.xlu0 %431
    %433 = vrot.lane.b32.xlu0 %v424, 124
    %v434 = vpop.permute.xlu0 %433
    %435 = vrot.lane.b32.xlu0 %v425, 124
    %v436 = vpop.permute.xlu0 %435
    %437 = vrot.lane.b32.xlu0 %v426, 124
    %v438 = vpop.permute.xlu0 %437
    %v443 = vadd.f32 %v417, %v432
    %v444 = vadd.f32 %v418, %v434
    %v445 = vadd.f32 %v419, %v436
    %v446 = vadd.f32 %v420, %v438
    %s447 = scalar_lea.vmem [#allocation2], 24
    %v448 = vld [vmem:[%s447] sm:$0xff]
    %v449 = vld [vmem:[%s447 + $0x8] sm:$0xff]
    %v450 = vld [vmem:[%s447 + $0x60] sm:$0xff]
    %v451 = vld [vmem:[%s447 + $0x68] sm:$0xff]
    %s452 = sld [smem:[#allocation8 + $0x1]]
    %v453 = vstv %s452
    %v454 = vmul.f32 %v448, %v453
    %v455 = vmul.f32 %v449, %v453
    %v456 = vmul.f32 %v450, %v453
    %v457 = vmul.f32 %v451, %v453
    %v458 = vadd.f32 %v454, 0.0
    %v459 = vadd.f32 %v455, 0.0
    %v460 = vadd.f32 %v456, 0.0
    %v461 = vadd.f32 %v457, 0.0
    %s462 = sld [smem:[#allocation8 + $0x5]]
    %v463 = vstv %s462
    %v464 = vmul.f32 %v448, %v463
    %v465 = vmul.f32 %v449, %v463
    %v466 = vmul.f32 %v450, %v463
    %v467 = vmul.f32 %v451, %v463
    %472 = vrot.lane.b32.xlu0 %v464, 126
    %v473 = vpop.permute.xlu0 %472
    %474 = vrot.lane.b32.xlu0 %v465, 126
    %v475 = vpop.permute.xlu0 %474
    %476 = vrot.lane.b32.xlu0 %v466, 126
    %v477 = vpop.permute.xlu0 %476
    %478 = vrot.lane.b32.xlu0 %v467, 126
    %v479 = vpop.permute.xlu0 %478
    %v484 = vadd.f32 %v458, %v473
    %v485 = vadd.f32 %v459, %v475
    %v486 = vadd.f32 %v460, %v477
    %v487 = vadd.f32 %v461, %v479
    %s488 = sld [smem:[#allocation8 + $0x9]]
    %v489 = vstv %s488
    %v490 = vmul.f32 %v448, %v489
    %v491 = vmul.f32 %v449, %v489
    %v492 = vmul.f32 %v450, %v489
    %v493 = vmul.f32 %v451, %v489
    %498 = vrot.lane.b32.xlu0 %v490, 124
    %v499 = vpop.permute.xlu0 %498
    %500 = vrot.lane.b32.xlu0 %v491, 124
    %v501 = vpop.permute.xlu0 %500
    %502 = vrot.lane.b32.xlu0 %v492, 124
    %v503 = vpop.permute.xlu0 %502
    %504 = vrot.lane.b32.xlu0 %v493, 124
    %v505 = vpop.permute.xlu0 %504
    %v510 = vadd.f32 %v484, %v499
    %v511 = vadd.f32 %v485, %v501
    %v512 = vadd.f32 %v486, %v503
    %v513 = vadd.f32 %v487, %v505
    %v514 = vld [vmem:[%s447 + $0x2] sm:$0xff]
    %v515 = vld [vmem:[%s447 + $0xa] sm:$0xff]
    %v516 = vld [vmem:[%s447 + $0x62] sm:$0xff]
    %v517 = vld [vmem:[%s447 + $0x6a] sm:$0xff]
    %s518 = sld [smem:[#allocation8 + $0xd]]
    %v519 = vstv %s518
    %v520 = vmul.f32 %v514, %v519
    %v521 = vmul.f32 %v515, %v519
    %v522 = vmul.f32 %v516, %v519
    %v523 = vmul.f32 %v517, %v519
    %v524 = vadd.f32 %v510, %v520
    %v525 = vadd.f32 %v511, %v521
    %v526 = vadd.f32 %v512, %v522
    %v527 = vadd.f32 %v513, %v523
    %s528 = sld [smem:[#allocation8 + $0x11]]
    %v529 = vstv %s528
    %v530 = vmul.f32 %v514, %v529
    %v531 = vmul.f32 %v515, %v529
    %v532 = vmul.f32 %v516, %v529
    %v533 = vmul.f32 %v517, %v529
    %538 = vrot.lane.b32.xlu0 %v530, 126
    %v539 = vpop.permute.xlu0 %538
    %540 = vrot.lane.b32.xlu0 %v531, 126
    %v541 = vpop.permute.xlu0 %540
    %542 = vrot.lane.b32.xlu0 %v532, 126
    %v543 = vpop.permute.xlu0 %542
    %544 = vrot.lane.b32.xlu0 %v533, 126
    %v545 = vpop.permute.xlu0 %544
    %v550 = vadd.f32 %v524, %v539
    %v551 = vadd.f32 %v525, %v541
    %v552 = vadd.f32 %v526, %v543
    %v553 = vadd.f32 %v527, %v545
    %s554 = sld [smem:[#allocation8 + $0x15]]
    %v555 = vstv %s554
    %v556 = vmul.f32 %v514, %v555
    %v557 = vmul.f32 %v515, %v555
    %v558 = vmul.f32 %v516, %v555
    %v559 = vmul.f32 %v517, %v555
    %564 = vrot.lane.b32.xlu0 %v556, 124
    %v565 = vpop.permute.xlu0 %564
    %566 = vrot.lane.b32.xlu0 %v557, 124
    %v567 = vpop.permute.xlu0 %566
    %568 = vrot.lane.b32.xlu0 %v558, 124
    %v569 = vpop.permute.xlu0 %568
    %570 = vrot.lane.b32.xlu0 %v559, 124
    %v571 = vpop.permute.xlu0 %570
    %v576 = vadd.f32 %v550, %v565
    %v577 = vadd.f32 %v551, %v567
    %v578 = vadd.f32 %v552, %v569
    %v579 = vadd.f32 %v553, %v571
    %v580 = vld [vmem:[%s447 + $0x4] sm:$0xff]
    %v581 = vld [vmem:[%s447 + $0xc] sm:$0xff]
    %v582 = vld [vmem:[%s447 + $0x64] sm:$0xff]
    %v583 = vld [vmem:[%s447 + $0x6c] sm:$0xff]
    %s584 = sld [smem:[#allocation8 + $0x19]]
    %v585 = vstv %s584
    %v586 = vmul.f32 %v580, %v585
    %v587 = vmul.f32 %v581, %v585
    %v588 = vmul.f32 %v582, %v585
    %v589 = vmul.f32 %v583, %v585
    %v590 = vadd.f32 %v576, %v586
    %v591 = vadd.f32 %v577, %v587
    %v592 = vadd.f32 %v578, %v588
    %v593 = vadd.f32 %v579, %v589
    %s594 = sld [smem:[#allocation8 + $0x1d]]
    %v595 = vstv %s594
    %v596 = vmul.f32 %v580, %v595
    %v597 = vmul.f32 %v581, %v595
    %v598 = vmul.f32 %v582, %v595
    %v599 = vmul.f32 %v583, %v595
    %604 = vrot.lane.b32.xlu0 %v596, 126
    %v605 = vpop.permute.xlu0 %604
    %606 = vrot.lane.b32.xlu0 %v597, 126
    %v607 = vpop.permute.xlu0 %606
    %608 = vrot.lane.b32.xlu0 %v598, 126
    %v609 = vpop.permute.xlu0 %608
    %610 = vrot.lane.b32.xlu0 %v599, 126
    %v611 = vpop.permute.xlu0 %610
    %v616 = vadd.f32 %v590, %v605
    %v617 = vadd.f32 %v591, %v607
    %v618 = vadd.f32 %v592, %v609
    %v619 = vadd.f32 %v593, %v611
    %s620 = sld [smem:[#allocation8 + $0x21]]
    %v621 = vstv %s620
    %v622 = vmul.f32 %v580, %v621
    %v623 = vmul.f32 %v581, %v621
    %v624 = vmul.f32 %v582, %v621
    %v625 = vmul.f32 %v583, %v621
    %630 = vrot.lane.b32.xlu0 %v622, 124
    %v631 = vpop.permute.xlu0 %630
    %632 = vrot.lane.b32.xlu0 %v623, 124
    %v633 = vpop.permute.xlu0 %632
    %634 = vrot.lane.b32.xlu0 %v624, 124
    %v635 = vpop.permute.xlu0 %634
    %636 = vrot.lane.b32.xlu0 %v625, 124
    %v637 = vpop.permute.xlu0 %636
    %v642 = vadd.f32 %v616, %v631
    %v643 = vadd.f32 %v617, %v633
    %v644 = vadd.f32 %v618, %v635
    %v645 = vadd.f32 %v619, %v637
    %s646 = scalar_lea.vmem [#allocation2], 48
    %v647 = vld [vmem:[%s646] sm:$0xff]
    %v648 = vld [vmem:[%s646 + $0x8] sm:$0xff]
    %v649 = vld [vmem:[%s646 + $0x60] sm:$0xff]
    %v650 = vld [vmem:[%s646 + $0x68] sm:$0xff]
    %s651 = sld [smem:[#allocation8 + $0x2]]
    %v652 = vstv %s651
    %v653 = vmul.f32 %v647, %v652
    %v654 = vmul.f32 %v648, %v652
    %v655 = vmul.f32 %v649, %v652
    %v656 = vmul.f32 %v650, %v652
    %v657 = vadd.f32 %v653, 0.0
    %v658 = vadd.f32 %v654, 0.0
    %v659 = vadd.f32 %v655, 0.0
    %v660 = vadd.f32 %v656, 0.0
    %s661 = sld [smem:[#allocation8 + $0x6]]
    %v662 = vstv %s661
    %v663 = vmul.f32 %v647, %v662
    %v664 = vmul.f32 %v648, %v662
    %v665 = vmul.f32 %v649, %v662
    %v666 = vmul.f32 %v650, %v662
    %671 = vrot.lane.b32.xlu0 %v663, 126
    %v672 = vpop.permute.xlu0 %671
    %673 = vrot.lane.b32.xlu0 %v664, 126
    %v674 = vpop.permute.xlu0 %673
    %675 = vrot.lane.b32.xlu0 %v665, 126
    %v676 = vpop.permute.xlu0 %675
    %677 = vrot.lane.b32.xlu0 %v666, 126
    %v678 = vpop.permute.xlu0 %677
    %v683 = vadd.f32 %v657, %v672
    %v684 = vadd.f32 %v658, %v674
    %v685 = vadd.f32 %v659, %v676
    %v686 = vadd.f32 %v660, %v678
    %s687 = sld [smem:[#allocation8 + $0xa]]
    %v688 = vstv %s687
    %v689 = vmul.f32 %v647, %v688
    %v690 = vmul.f32 %v648, %v688
    %v691 = vmul.f32 %v649, %v688
    %v692 = vmul.f32 %v650, %v688
    %697 = vrot.lane.b32.xlu0 %v689, 124
    %v698 = vpop.permute.xlu0 %697
    %699 = vrot.lane.b32.xlu0 %v690, 124
    %v700 = vpop.permute.xlu0 %699
    %701 = vrot.lane.b32.xlu0 %v691, 124
    %v702 = vpop.permute.xlu0 %701
    %703 = vrot.lane.b32.xlu0 %v692, 124
    %v704 = vpop.permute.xlu0 %703
    %v709 = vadd.f32 %v683, %v698
    %v710 = vadd.f32 %v684, %v700
    %v711 = vadd.f32 %v685, %v702
    %v712 = vadd.f32 %v686, %v704
    %v713 = vld [vmem:[%s646 + $0x2] sm:$0xff]
    %v714 = vld [vmem:[%s646 + $0xa] sm:$0xff]
    %v715 = vld [vmem:[%s646 + $0x62] sm:$0xff]
    %v716 = vld [vmem:[%s646 + $0x6a] sm:$0xff]
    %s717 = sld [smem:[#allocation8 + $0xe]]
    %v718 = vstv %s717
    %v719 = vmul.f32 %v713, %v718
    %v720 = vmul.f32 %v714, %v718
    %v721 = vmul.f32 %v715, %v718
    %v722 = vmul.f32 %v716, %v718
    %v723 = vadd.f32 %v709, %v719
    %v724 = vadd.f32 %v710, %v720
    %v725 = vadd.f32 %v711, %v721
    %v726 = vadd.f32 %v712, %v722
    %s727 = sld [smem:[#allocation8 + $0x12]]
    %v728 = vstv %s727
    %v729 = vmul.f32 %v713, %v728
    %v730 = vmul.f32 %v714, %v728
    %v731 = vmul.f32 %v715, %v728
    %v732 = vmul.f32 %v716, %v728
    %737 = vrot.lane.b32.xlu0 %v729, 126
    %v738 = vpop.permute.xlu0 %737
    %739 = vrot.lane.b32.xlu0 %v730, 126
    %v740 = vpop.permute.xlu0 %739
    %741 = vrot.lane.b32.xlu0 %v731, 126
    %v742 = vpop.permute.xlu0 %741
    %743 = vrot.lane.b32.xlu0 %v732, 126
    %v744 = vpop.permute.xlu0 %743
    %v749 = vadd.f32 %v723, %v738
    %v750 = vadd.f32 %v724, %v740
    %v751 = vadd.f32 %v725, %v742
    %v752 = vadd.f32 %v726, %v744
    %s753 = sld [smem:[#allocation8 + $0x16]]
    %v754 = vstv %s753
    %v755 = vmul.f32 %v713, %v754
    %v756 = vmul.f32 %v714, %v754
    %v757 = vmul.f32 %v715, %v754
    %v758 = vmul.f32 %v716, %v754
    %763 = vrot.lane.b32.xlu0 %v755, 124
    %v764 = vpop.permute.xlu0 %763
    %765 = vrot.lane.b32.xlu0 %v756, 124
    %v766 = vpop.permute.xlu0 %765
    %767 = vrot.lane.b32.xlu0 %v757, 124
    %v768 = vpop.permute.xlu0 %767
    %769 = vrot.lane.b32.xlu0 %v758, 124
    %v770 = vpop.permute.xlu0 %769
    %v775 = vadd.f32 %v749, %v764
    %v776 = vadd.f32 %v750, %v766
    %v777 = vadd.f32 %v751, %v768
    %v778 = vadd.f32 %v752, %v770
    %v779 = vld [vmem:[%s646 + $0x4] sm:$0xff]
    %v780 = vld [vmem:[%s646 + $0xc] sm:$0xff]
    %v781 = vld [vmem:[%s646 + $0x64] sm:$0xff]
    %v782 = vld [vmem:[%s646 + $0x6c] sm:$0xff]
    %s783 = sld [smem:[#allocation8 + $0x1a]]
    %v784 = vstv %s783
    %v785 = vmul.f32 %v779, %v784
    %v786 = vmul.f32 %v780, %v784
    %v787 = vmul.f32 %v781, %v784
    %v788 = vmul.f32 %v782, %v784
    %v789 = vadd.f32 %v775, %v785
    %v790 = vadd.f32 %v776, %v786
    %v791 = vadd.f32 %v777, %v787
    %v792 = vadd.f32 %v778, %v788
    %s793 = sld [smem:[#allocation8 + $0x1e]]
    %v794 = vstv %s793
    %v795 = vmul.f32 %v779, %v794
    %v796 = vmul.f32 %v780, %v794
    %v797 = vmul.f32 %v781, %v794
    %v798 = vmul.f32 %v782, %v794
    %803 = vrot.lane.b32.xlu0 %v795, 126
    %v804 = vpop.permute.xlu0 %803
    %805 = vrot.lane.b32.xlu0 %v796, 126
    %v806 = vpop.permute.xlu0 %805
    %807 = vrot.lane.b32.xlu0 %v797, 126
    %v808 = vpop.permute.xlu0 %807
    %809 = vrot.lane.b32.xlu0 %v798, 126
    %v810 = vpop.permute.xlu0 %809
    %v815 = vadd.f32 %v789, %v804
    %v816 = vadd.f32 %v790, %v806
    %v817 = vadd.f32 %v791, %v808
    %v818 = vadd.f32 %v792, %v810
    %s819 = sld [smem:[#allocation8 + $0x22]]
    %v820 = vstv %s819
    %v821 = vmul.f32 %v779, %v820
    %v822 = vmul.f32 %v780, %v820
    %v823 = vmul.f32 %v781, %v820
    %v824 = vmul.f32 %v782, %v820
    %829 = vrot.lane.b32.xlu0 %v821, 124
    %v830 = vpop.permute.xlu0 %829
    %831 = vrot.lane.b32.xlu0 %v822, 124
    %v832 = vpop.permute.xlu0 %831
    %833 = vrot.lane.b32.xlu0 %v823, 124
    %v834 = vpop.permute.xlu0 %833
    %835 = vrot.lane.b32.xlu0 %v824, 124
    %v836 = vpop.permute.xlu0 %835
    %v841 = vadd.f32 %v815, %v830
    %v842 = vadd.f32 %v816, %v832
    %v843 = vadd.f32 %v817, %v834
    %v844 = vadd.f32 %v818, %v836
    %s845 = scalar_lea.vmem [#allocation2], 72
    %v846 = vld [vmem:[%s845] sm:$0xff]
    %v847 = vld [vmem:[%s845 + $0x8] sm:$0xff]
    %v848 = vld [vmem:[%s845 + $0x60] sm:$0xff]
    %v849 = vld [vmem:[%s845 + $0x68] sm:$0xff]
    %s850 = sld [smem:[#allocation8 + $0x3]]
    %v851 = vstv %s850
    %v852 = vmul.f32 %v846, %v851
    %v853 = vmul.f32 %v847, %v851
    %v854 = vmul.f32 %v848, %v851
    %v855 = vmul.f32 %v849, %v851
    %v856 = vadd.f32 %v852, 0.0
    %v857 = vadd.f32 %v853, 0.0
    %v858 = vadd.f32 %v854, 0.0
    %v859 = vadd.f32 %v855, 0.0
    %s860 = sld [smem:[#allocation8 + $0x7]]
    %v861 = vstv %s860
    %v862 = vmul.f32 %v846, %v861
    %v863 = vmul.f32 %v847, %v861
    %v864 = vmul.f32 %v848, %v861
    %v865 = vmul.f32 %v849, %v861
    %870 = vrot.lane.b32.xlu0 %v862, 126
    %v871 = vpop.permute.xlu0 %870
    %872 = vrot.lane.b32.xlu0 %v863, 126
    %v873 = vpop.permute.xlu0 %872
    %874 = vrot.lane.b32.xlu0 %v864, 126
    %v875 = vpop.permute.xlu0 %874
    %876 = vrot.lane.b32.xlu0 %v865, 126
    %v877 = vpop.permute.xlu0 %876
    %v882 = vadd.f32 %v856, %v871
    %v883 = vadd.f32 %v857, %v873
    %v884 = vadd.f32 %v858, %v875
    %v885 = vadd.f32 %v859, %v877
    %s886 = sld [smem:[#allocation8 + $0xb]]
    %v887 = vstv %s886
    %v888 = vmul.f32 %v846, %v887
    %v889 = vmul.f32 %v847, %v887
    %v890 = vmul.f32 %v848, %v887
    %v891 = vmul.f32 %v849, %v887
    %896 = vrot.lane.b32.xlu0 %v888, 124
    %v897 = vpop.permute.xlu0 %896
    %898 = vrot.lane.b32.xlu0 %v889, 124
    %v899 = vpop.permute.xlu0 %898
    %900 = vrot.lane.b32.xlu0 %v890, 124
    %v901 = vpop.permute.xlu0 %900
    %902 = vrot.lane.b32.xlu0 %v891, 124
    %v903 = vpop.permute.xlu0 %902
    %v908 = vadd.f32 %v882, %v897
    %v909 = vadd.f32 %v883, %v899
    %v910 = vadd.f32 %v884, %v901
    %v911 = vadd.f32 %v885, %v903
    %v912 = vld [vmem:[%s845 + $0x2] sm:$0xff]
    %v913 = vld [vmem:[%s845 + $0xa] sm:$0xff]
    %v914 = vld [vmem:[%s845 + $0x62] sm:$0xff]
    %v915 = vld [vmem:[%s845 + $0x6a] sm:$0xff]
    %s916 = sld [smem:[#allocation8 + $0xf]]
    %v917 = vstv %s916
    %v918 = vmul.f32 %v912, %v917
    %v919 = vmul.f32 %v913, %v917
    %v920 = vmul.f32 %v914, %v917
    %v921 = vmul.f32 %v915, %v917
    %v922 = vadd.f32 %v908, %v918
    %v923 = vadd.f32 %v909, %v919
    %v924 = vadd.f32 %v910, %v920
    %v925 = vadd.f32 %v911, %v921
    %s926 = sld [smem:[#allocation8 + $0x13]]
    %v927 = vstv %s926
    %v928 = vmul.f32 %v912, %v927
    %v929 = vmul.f32 %v913, %v927
    %v930 = vmul.f32 %v914, %v927
    %v931 = vmul.f32 %v915, %v927
    %936 = vrot.lane.b32.xlu0 %v928, 126
    %v937 = vpop.permute.xlu0 %936
    %938 = vrot.lane.b32.xlu0 %v929, 126
    %v939 = vpop.permute.xlu0 %938
    %940 = vrot.lane.b32.xlu0 %v930, 126
    %v941 = vpop.permute.xlu0 %940
    %942 = vrot.lane.b32.xlu0 %v931, 126
    %v943 = vpop.permute.xlu0 %942
    %v948 = vadd.f32 %v922, %v937
    %v949 = vadd.f32 %v923, %v939
    %v950 = vadd.f32 %v924, %v941
    %v951 = vadd.f32 %v925, %v943
    %s952 = sld [smem:[#allocation8 + $0x17]]
    %v953 = vstv %s952
    %v954 = vmul.f32 %v912, %v953
    %v955 = vmul.f32 %v913, %v953
    %v956 = vmul.f32 %v914, %v953
    %v957 = vmul.f32 %v915, %v953
    %962 = vrot.lane.b32.xlu0 %v954, 124
    %v963 = vpop.permute.xlu0 %962
    %964 = vrot.lane.b32.xlu0 %v955, 124
    %v965 = vpop.permute.xlu0 %964
    %966 = vrot.lane.b32.xlu0 %v956, 124
    %v967 = vpop.permute.xlu0 %966
    %968 = vrot.lane.b32.xlu0 %v957, 124
    %v969 = vpop.permute.xlu0 %968
    %v974 = vadd.f32 %v948, %v963
    %v975 = vadd.f32 %v949, %v965
    %v976 = vadd.f32 %v950, %v967
    %v977 = vadd.f32 %v951, %v969
    %v978 = vld [vmem:[%s845 + $0x4] sm:$0xff]
    %v979 = vld [vmem:[%s845 + $0xc] sm:$0xff]
    %v980 = vld [vmem:[%s845 + $0x64] sm:$0xff]
    %v981 = vld [vmem:[%s845 + $0x6c] sm:$0xff]
    %s982 = sld [smem:[#allocation8 + $0x1b]]
    %v983 = vstv %s982
    %v984 = vmul.f32 %v978, %v983
    %v985 = vmul.f32 %v979, %v983
    %v986 = vmul.f32 %v980, %v983
    %v987 = vmul.f32 %v981, %v983
    %v988 = vadd.f32 %v974, %v984
    %v989 = vadd.f32 %v975, %v985
    %v990 = vadd.f32 %v976, %v986
    %v991 = vadd.f32 %v977, %v987
    %s992 = sld [smem:[#allocation8 + $0x1f]]
    %v993 = vstv %s992
    %v994 = vmul.f32 %v978, %v993
    %v995 = vmul.f32 %v979, %v993
    %v996 = vmul.f32 %v980, %v993
    %v997 = vmul.f32 %v981, %v993
    %1002 = vrot.lane.b32.xlu0 %v994, 126
    %v1003 = vpop.permute.xlu0 %1002
    %1004 = vrot.lane.b32.xlu0 %v995, 126
    %v1005 = vpop.permute.xlu0 %1004
    %1006 = vrot.lane.b32.xlu0 %v996, 126
    %v1007 = vpop.permute.xlu0 %1006
    %1008 = vrot.lane.b32.xlu0 %v997, 126
    %v1009 = vpop.permute.xlu0 %1008
    %v1014 = vadd.f32 %v988, %v1003
    %v1015 = vadd.f32 %v989, %v1005
    %v1016 = vadd.f32 %v990, %v1007
    %v1017 = vadd.f32 %v991, %v1009
    %s1018 = sld [smem:[#allocation8 + $0x23]]
    %v1019 = vstv %s1018
    %v1020 = vmul.f32 %v978, %v1019
    %v1021 = vmul.f32 %v979, %v1019
    %v1022 = vmul.f32 %v980, %v1019
    %v1023 = vmul.f32 %v981, %v1019
    %1028 = vrot.lane.b32.xlu0 %v1020, 124
    %v1029 = vpop.permute.xlu0 %1028
    %1030 = vrot.lane.b32.xlu0 %v1021, 124
    %v1031 = vpop.permute.xlu0 %1030
    %1032 = vrot.lane.b32.xlu0 %v1022, 124
    %v1033 = vpop.permute.xlu0 %1032
    %1034 = vrot.lane.b32.xlu0 %v1023, 124
    %v1035 = vpop.permute.xlu0 %1034
    %v1040 = vadd.f32 %v1014, %v1029
    %v1041 = vadd.f32 %v1015, %v1031
    %v1042 = vadd.f32 %v1016, %v1033
    %v1043 = vadd.f32 %v1017, %v1035
    %s1044 = sld [smem:[#allocation9]]
    %v1045 = vstv %s1044
    %v1046 = vmul.f32 %v443, %v1045
    %v1047 = vmul.f32 %v444, %v1045
    %v1048 = vmul.f32 %v445, %v1045
    %v1049 = vmul.f32 %v446, %v1045
    %s1050 = sld [smem:[#allocation9 + $0x8]]
    %v1051 = vstv %s1050
    %v1052 = vmul.f32 %v642, %v1051
    %v1053 = vmul.f32 %v643, %v1051
    %v1054 = vmul.f32 %v644, %v1051
    %v1055 = vmul.f32 %v645, %v1051
    %v1056 = vadd.f32 %v1046, %v1052
    %v1057 = vadd.f32 %v1047, %v1053
    %v1058 = vadd.f32 %v1048, %v1054
    %v1059 = vadd.f32 %v1049, %v1055
    %s1060 = sld [smem:[#allocation9 + $0x10]]
    %v1061 = vstv %s1060
    %v1062 = vmul.f32 %v841, %v1061
    %v1063 = vmul.f32 %v842, %v1061
    %v1064 = vmul.f32 %v843, %v1061
    %v1065 = vmul.f32 %v844, %v1061
    %v1066 = vadd.f32 %v1056, %v1062
    %v1067 = vadd.f32 %v1057, %v1063
    %v1068 = vadd.f32 %v1058, %v1064
    %v1069 = vadd.f32 %v1059, %v1065
    %s1070 = sld [smem:[#allocation9 + $0x18]]
    %v1071 = vstv %s1070
    %v1072 = vmul.f32 %v1040, %v1071
    %v1073 = vmul.f32 %v1041, %v1071
    %v1074 = vmul.f32 %v1042, %v1071
    %v1075 = vmul.f32 %v1043, %v1071
    %v1076 = vadd.f32 %v1066, %v1072
    %v1077 = vadd.f32 %v1067, %v1073
    %v1078 = vadd.f32 %v1068, %v1074
    %v1079 = vadd.f32 %v1069, %v1075
    %vm1080 = vcmask 130048
    %v1081 = vsel %vm1080, %v1076, 0.0
    %1082 = vadd.xlane.f32.xlu0 %v1081
    %v1083 = vpop.xlane.xlu0 %1082
    %v1084 = vsel %vm1080, %v1077, 0.0
    %1085 = vadd.xlane.f32.xlu0 %v1084
    %v1086 = vpop.xlane.xlu0 %1085
    %v1087 = vsel %vm1080, %v1078, 0.0
    %1088 = vadd.xlane.f32.xlu0 %v1087
    %v1089 = vpop.xlane.xlu0 %1088
    %v1090 = vsel %vm1080, %v1079, 0.0
    %1091 = vadd.xlane.f32.xlu0 %v1090
    %v1092 = vpop.xlane.xlu0 %1091
    %v1093 = vadd.f32 %v1083, %v1086
    %v1094 = vrot.slane %v1093, 4
    %v1095 = vadd.f32 %v1093, %v1094
    %v1096 = vrot.slane %v1095, 2
    %v1097 = vadd.f32 %v1095, %v1096
    %v1098 = vrot.slane %v1097, 1
    %v1099 = vadd.f32 %v1097, %v1098
    %v1100 = vadd.f32 %v1089, %v1092
    %v1101 = vrot.slane %v1100, 4
    %v1102 = vadd.f32 %v1100, %v1101
    %v1103 = vrot.slane %v1102, 2
    %v1104 = vadd.f32 %v1102, %v1103
    %v1105 = vrot.slane %v1104, 1
    %v1106 = vadd.f32 %v1104, %v1105
    %v1107 = vadd.f32 %v1099, %v1106
    %v1108 = vmul.f32 %v1107, 0.001953125
    %v1109 = vsub.f32 %v1076, %v1108
    %v1110 = vsub.f32 %v1077, %v1108
    %v1111 = vsub.f32 %v1078, %v1108
    %v1112 = vsub.f32 %v1079, %v1108
    %v1113 = vmul.f32 %v1109, %v1109
    %v1114 = vmul.f32 %v1110, %v1110
    %v1115 = vmul.f32 %v1111, %v1111
    %v1116 = vmul.f32 %v1112, %v1112
    %v1117 = vsel %vm1080, %v1113, 0.0
    %1118 = vadd.xlane.f32.xlu0 %v1117
    %v1119 = vpop.xlane.xlu0 %1118
    %v1120 = vsel %vm1080, %v1114, 0.0
    %1121 = vadd.xlane.f32.xlu0 %v1120
    %v1122 = vpop.xlane.xlu0 %1121
    %v1123 = vsel %vm1080, %v1115, 0.0
    %1124 = vadd.xlane.f32.xlu0 %v1123
    %v1125 = vpop.xlane.xlu0 %1124
    %v1126 = vsel %vm1080, %v1116, 0.0
    %1127 = vadd.xlane.f32.xlu0 %v1126
    %v1128 = vpop.xlane.xlu0 %1127
    %v1129 = vadd.f32 %v1119, %v1122
    %v1130 = vrot.slane %v1129, 4
    %v1131 = vadd.f32 %v1129, %v1130
    %v1132 = vrot.slane %v1131, 2
    %v1133 = vadd.f32 %v1131, %v1132
    %v1134 = vrot.slane %v1133, 1
    %v1135 = vadd.f32 %v1133, %v1134
    %v1136 = vadd.f32 %v1125, %v1128
    %v1137 = vrot.slane %v1136, 4
    %v1138 = vadd.f32 %v1136, %v1137
    %v1139 = vrot.slane %v1138, 2
    %v1140 = vadd.f32 %v1138, %v1139
    %v1141 = vrot.slane %v1140, 1
    %v1142 = vadd.f32 %v1140, %v1141
    %v1143 = vadd.f32 %v1135, %v1142
    %v1144 = vmul.f32 %v1143, 0.001953125
    %v1145 = vadd.f32 %v1144, 1e-05
    %v1146 = vrsqrt.pop %v1145
    %v1147 = vmul.f32 %v1146, %v1145
    %v1148 = vmul.f32 %v1147, %v1146
    %v1149 = vmul.f32 0.5, %v1148
    %v1150 = vsub.f32 1.5, %v1149
    %v1151 = vmul.f32 %v1146, %v1150
    %vm1152 = vweird.f32 %v1145
    %vm1153 = vweird.f32 %v1146
    %vm1154 = vmor %vm1152, %vm1153
    %v1155 = vsel %vm1154, %v1146, %v1151
    %v1156 = vmul.f32 %v1109, %v1155
    %v1157 = vmul.f32 %v1110, %v1155
    %v1158 = vmul.f32 %v1111, %v1155
    %v1159 = vmul.f32 %v1112, %v1155
    %s1160 = sld [smem:[#allocation10]]
    %v1161 = vstv %s1160
    %v1162 = vmul.f32 %v1156, %v1161
    %v1163 = vmul.f32 %v1157, %v1161
    %v1164 = vmul.f32 %v1158, %v1161
    %v1165 = vmul.f32 %v1159, %v1161
    %s1166 = sld [smem:[#allocation12]]
    %v1167 = vstv %s1166
    %v1168 = vadd.f32 %v1162, %v1167
    %v1169 = vadd.f32 %v1163, %v1167
    %v1170 = vadd.f32 %v1164, %v1167
    %v1171 = vadd.f32 %v1165, %v1167
    %1172 = vst.msk [vmem:[#allocation13] sm:$0xff] %vm1080, %v1168
    %1173 = vst.msk [vmem:[#allocation13 + $0x8] sm:$0xff] %vm1080, %v1169
    %1174 = vst.msk [vmem:[#allocation13 + $0x80] sm:$0xff] %vm1080, %v1170
    %1175 = vst.msk [vmem:[#allocation13 + $0x88] sm:$0xff] %vm1080, %v1171
    %s1176 = sld [smem:[#allocation9 + $0x1]]
    %v1177 = vstv %s1176
    %v1178 = vmul.f32 %v443, %v1177
    %v1179 = vmul.f32 %v444, %v1177
    %v1180 = vmul.f32 %v445, %v1177
    %v1181 = vmul.f32 %v446, %v1177
    %s1182 = sld [smem:[#allocation9 + $0x9]]
    %v1183 = vstv %s1182
    %v1184 = vmul.f32 %v642, %v1183
    %v1185 = vmul.f32 %v643, %v1183
    %v1186 = vmul.f32 %v644, %v1183
    %v1187 = vmul.f32 %v645, %v1183
    %v1188 = vadd.f32 %v1178, %v1184
    %v1189 = vadd.f32 %v1179, %v1185
    %v1190 = vadd.f32 %v1180, %v1186
    %v1191 = vadd.f32 %v1181, %v1187
    %s1192 = sld [smem:[#allocation9 + $0x11]]
    %v1193 = vstv %s1192
    %v1194 = vmul.f32 %v841, %v1193
    %v1195 = vmul.f32 %v842, %v1193
    %v1196 = vmul.f32 %v843, %v1193
    %v1197 = vmul.f32 %v844, %v1193
    %v1198 = vadd.f32 %v1188, %v1194
    %v1199 = vadd.f32 %v1189, %v1195
    %v1200 = vadd.f32 %v1190, %v1196
    %v1201 = vadd.f32 %v1191, %v1197
    %s1202 = sld [smem:[#allocation9 + $0x19]]
    %v1203 = vstv %s1202
    %v1204 = vmul.f32 %v1040, %v1203
    %v1205 = vmul.f32 %v1041, %v1203
    %v1206 = vmul.f32 %v1042, %v1203
    %v1207 = vmul.f32 %v1043, %v1203
    %v1208 = vadd.f32 %v1198, %v1204
    %v1209 = vadd.f32 %v1199, %v1205
    %v1210 = vadd.f32 %v1200, %v1206
    %v1211 = vadd.f32 %v1201, %v1207
    %v1212 = vsel %vm1080, %v1208, 0.0
    %1213 = vadd.xlane.f32.xlu0 %v1212
    %v1214 = vpop.xlane.xlu0 %1213
    %v1215 = vsel %vm1080, %v1209, 0.0
    %1216 = vadd.xlane.f32.xlu0 %v1215
    %v1217 = vpop.xlane.xlu0 %1216
    %v1218 = vsel %vm1080, %v1210, 0.0
    %1219 = vadd.xlane.f32.xlu0 %v1218
    %v1220 = vpop.xlane.xlu0 %1219
    %v1221 = vsel %vm1080, %v1211, 0.0
    %1222 = vadd.xlane.f32.xlu0 %v1221
    %v1223 = vpop.xlane.xlu0 %1222
    %v1224 = vadd.f32 %v1214, %v1217
    %v1225 = vrot.slane %v1224, 4
    %v1226 = vadd.f32 %v1224, %v1225
    %v1227 = vrot.slane %v1226, 2
    %v1228 = vadd.f32 %v1226, %v1227
    %v1229 = vrot.slane %v1228, 1
    %v1230 = vadd.f32 %v1228, %v1229
    %v1231 = vadd.f32 %v1220, %v1223
    %v1232 = vrot.slane %v1231, 4
    %v1233 = vadd.f32 %v1231, %v1232
    %v1234 = vrot.slane %v1233, 2
    %v1235 = vadd.f32 %v1233, %v1234
    %v1236 = vrot.slane %v1235, 1
    %v1237 = vadd.f32 %v1235, %v1236
    %v1238 = vadd.f32 %v1230, %v1237
    %v1239 = vmul.f32 %v1238, 0.001953125
    %v1240 = vsub.f32 %v1208, %v1239
    %v1241 = vsub.f32 %v1209, %v1239
    %v1242 = vsub.f32 %v1210, %v1239
    %v1243 = vsub.f32 %v1211, %v1239
    %v1244 = vmul.f32 %v1240, %v1240
    %v1245 = vmul.f32 %v1241, %v1241
    %v1246 = vmul.f32 %v1242, %v1242
    %v1247 = vmul.f32 %v1243, %v1243
    %v1248 = vsel %vm1080, %v1244, 0.0
    %1249 = vadd.xlane.f32.xlu0 %v1248
    %v1250 = vpop.xlane.xlu0 %1249
    %v1251 = vsel %vm1080, %v1245, 0.0
    %1252 = vadd.xlane.f32.xlu0 %v1251
    %v1253 = vpop.xlane.xlu0 %1252
    %v1254 = vsel %vm1080, %v1246, 0.0
    %1255 = vadd.xlane.f32.xlu0 %v1254
    %v1256 = vpop.xlane.xlu0 %1255
    %v1257 = vsel %vm1080, %v1247, 0.0
    %1258 = vadd.xlane.f32.xlu0 %v1257
    %v1259 = vpop.xlane.xlu0 %1258
    %v1260 = vadd.f32 %v1250, %v1253
    %v1261 = vrot.slane %v1260, 4
    %v1262 = vadd.f32 %v1260, %v1261
    %v1263 = vrot.slane %v1262, 2
    %v1264 = vadd.f32 %v1262, %v1263
    %v1265 = vrot.slane %v1264, 1
    %v1266 = vadd.f32 %v1264, %v1265
    %v1267 = vadd.f32 %v1256, %v1259
    %v1268 = vrot.slane %v1267, 4
    %v1269 = vadd.f32 %v1267, %v1268
    %v1270 = vrot.slane %v1269, 2
    %v1271 = vadd.f32 %v1269, %v1270
    %v1272 = vrot.slane %v1271, 1
    %v1273 = vadd.f32 %v1271, %v1272
    %v1274 = vadd.f32 %v1266, %v1273
    %v1275 = vmul.f32 %v1274, 0.001953125
    %v1276 = vadd.f32 %v1275, 1e-05
    %v1277 = vrsqrt.pop %v1276
    %v1278 = vmul.f32 %v1277, %v1276
    %v1279 = vmul.f32 %v1278, %v1277
    %v1280 = vmul.f32 0.5, %v1279
    %v1281 = vsub.f32 1.5, %v1280
    %v1282 = vmul.f32 %v1277, %v1281
    %vm1283 = vweird.f32 %v1276
    %vm1284 = vweird.f32 %v1277
    %vm1285 = vmor %vm1283, %vm1284
    %v1286 = vsel %vm1285, %v1277, %v1282
    %v1287 = vmul.f32 %v1240, %v1286
    %v1288 = vmul.f32 %v1241, %v1286
    %v1289 = vmul.f32 %v1242, %v1286
    %v1290 = vmul.f32 %v1243, %v1286
    %s1291 = sld [smem:[#allocation10 + $0x1]]
    %v1292 = vstv %s1291
    %v1293 = vmul.f32 %v1287, %v1292
    %v1294 = vmul.f32 %v1288, %v1292
    %v1295 = vmul.f32 %v1289, %v1292
    %v1296 = vmul.f32 %v1290, %v1292
    %s1297 = sld [smem:[#allocation12 + $0x1]]
    %v1298 = vstv %s1297
    %v1299 = vadd.f32 %v1293, %v1298
    %v1300 = vadd.f32 %v1294, %v1298
    %v1301 = vadd.f32 %v1295, %v1298
    %v1302 = vadd.f32 %v1296, %v1298
    %s1303 = scalar_lea.vmem [#allocation13], 16
    %1304 = vst.msk [vmem:[%s1303] sm:$0xff] %vm1080, %v1299
    %1305 = vst.msk [vmem:[%s1303 + $0x8] sm:$0xff] %vm1080, %v1300
    %1306 = vst.msk [vmem:[%s1303 + $0x80] sm:$0xff] %vm1080, %v1301
    %1307 = vst.msk [vmem:[%s1303 + $0x88] sm:$0xff] %vm1080, %v1302
    %s1308 = sld [smem:[#allocation9 + $0x2]]
    %v1309 = vstv %s1308
    %v1310 = vmul.f32 %v443, %v1309
    %v1311 = vmul.f32 %v444, %v1309
    %v1312 = vmul.f32 %v445, %v1309
    %v1313 = vmul.f32 %v446, %v1309
    %s1314 = sld [smem:[#allocation9 + $0xa]]
    %v1315 = vstv %s1314
    %v1316 = vmul.f32 %v642, %v1315
    %v1317 = vmul.f32 %v643, %v1315
    %v1318 = vmul.f32 %v644, %v1315
    %v1319 = vmul.f32 %v645, %v1315
    %v1320 = vadd.f32 %v1310, %v1316
    %v1321 = vadd.f32 %v1311, %v1317
    %v1322 = vadd.f32 %v1312, %v1318
    %v1323 = vadd.f32 %v1313, %v1319
    %s1324 = sld [smem:[#allocation9 + $0x12]]
    %v1325 = vstv %s1324
    %v1326 = vmul.f32 %v841, %v1325
    %v1327 = vmul.f32 %v842, %v1325
    %v1328 = vmul.f32 %v843, %v1325
    %v1329 = vmul.f32 %v844, %v1325
    %v1330 = vadd.f32 %v1320, %v1326
    %v1331 = vadd.f32 %v1321, %v1327
    %v1332 = vadd.f32 %v1322, %v1328
    %v1333 = vadd.f32 %v1323, %v1329
    %s1334 = sld [smem:[#allocation9 + $0x1a]]
    %v1335 = vstv %s1334
    %v1336 = vmul.f32 %v1040, %v1335
    %v1337 = vmul.f32 %v1041, %v1335
    %v1338 = vmul.f32 %v1042, %v1335
    %v1339 = vmul.f32 %v1043, %v1335
    %v1340 = vadd.f32 %v1330, %v1336
    %v1341 = vadd.f32 %v1331, %v1337
    %v1342 = vadd.f32 %v1332, %v1338
    %v1343 = vadd.f32 %v1333, %v1339
    %v1344 = vsel %vm1080, %v1340, 0.0
    %1345 = vadd.xlane.f32.xlu0 %v1344
    %v1346 = vpop.xlane.xlu0 %1345
    %v1347 = vsel %vm1080, %v1341, 0.0
    %1348 = vadd.xlane.f32.xlu0 %v1347
    %v1349 = vpop.xlane.xlu0 %1348
    %v1350 = vsel %vm1080, %v1342, 0.0
    %1351 = vadd.xlane.f32.xlu0 %v1350
    %v1352 = vpop.xlane.xlu0 %1351
    %v1353 = vsel %vm1080, %v1343, 0.0
    %1354 = vadd.xlane.f32.xlu0 %v1353
    %v1355 = vpop.xlane.xlu0 %1354
    %v1356 = vadd.f32 %v1346, %v1349
    %v1357 = vrot.slane %v1356, 4
    %v1358 = vadd.f32 %v1356, %v1357
    %v1359 = vrot.slane %v1358, 2
    %v1360 = vadd.f32 %v1358, %v1359
    %v1361 = vrot.slane %v1360, 1
    %v1362 = vadd.f32 %v1360, %v1361
    %v1363 = vadd.f32 %v1352, %v1355
    %v1364 = vrot.slane %v1363, 4
    %v1365 = vadd.f32 %v1363, %v1364
    %v1366 = vrot.slane %v1365, 2
    %v1367 = vadd.f32 %v1365, %v1366
    %v1368 = vrot.slane %v1367, 1
    %v1369 = vadd.f32 %v1367, %v1368
    %v1370 = vadd.f32 %v1362, %v1369
    %v1371 = vmul.f32 %v1370, 0.001953125
    %v1372 = vsub.f32 %v1340, %v1371
    %v1373 = vsub.f32 %v1341, %v1371
    %v1374 = vsub.f32 %v1342, %v1371
    %v1375 = vsub.f32 %v1343, %v1371
    %v1376 = vmul.f32 %v1372, %v1372
    %v1377 = vmul.f32 %v1373, %v1373
    %v1378 = vmul.f32 %v1374, %v1374
    %v1379 = vmul.f32 %v1375, %v1375
    %v1380 = vsel %vm1080, %v1376, 0.0
    %1381 = vadd.xlane.f32.xlu0 %v1380
    %v1382 = vpop.xlane.xlu0 %1381
    %v1383 = vsel %vm1080, %v1377, 0.0
    %1384 = vadd.xlane.f32.xlu0 %v1383
    %v1385 = vpop.xlane.xlu0 %1384
    %v1386 = vsel %vm1080, %v1378, 0.0
    %1387 = vadd.xlane.f32.xlu0 %v1386
    %v1388 = vpop.xlane.xlu0 %1387
    %v1389 = vsel %vm1080, %v1379, 0.0
    %1390 = vadd.xlane.f32.xlu0 %v1389
    %v1391 = vpop.xlane.xlu0 %1390
    %v1392 = vadd.f32 %v1382, %v1385
    %v1393 = vrot.slane %v1392, 4
    %v1394 = vadd.f32 %v1392, %v1393
    %v1395 = vrot.slane %v1394, 2
    %v1396 = vadd.f32 %v1394, %v1395
    %v1397 = vrot.slane %v1396, 1
    %v1398 = vadd.f32 %v1396, %v1397
    %v1399 = vadd.f32 %v1388, %v1391
    %v1400 = vrot.slane %v1399, 4
    %v1401 = vadd.f32 %v1399, %v1400
    %v1402 = vrot.slane %v1401, 2
    %v1403 = vadd.f32 %v1401, %v1402
    %v1404 = vrot.slane %v1403, 1
    %v1405 = vadd.f32 %v1403, %v1404
    %v1406 = vadd.f32 %v1398, %v1405
    %v1407 = vmul.f32 %v1406, 0.001953125
    %v1408 = vadd.f32 %v1407, 1e-05
    %v1409 = vrsqrt.pop %v1408
    %v1410 = vmul.f32 %v1409, %v1408
    %v1411 = vmul.f32 %v1410, %v1409
    %v1412 = vmul.f32 0.5, %v1411
    %v1413 = vsub.f32 1.5, %v1412
    %v1414 = vmul.f32 %v1409, %v1413
    %vm1415 = vweird.f32 %v1408
    %vm1416 = vweird.f32 %v1409
    %vm1417 = vmor %vm1415, %vm1416
    %v1418 = vsel %vm1417, %v1409, %v1414
    %v1419 = vmul.f32 %v1372, %v1418
    %v1420 = vmul.f32 %v1373, %v1418
    %v1421 = vmul.f32 %v1374, %v1418
    %v1422 = vmul.f32 %v1375, %v1418
    %s1423 = sld [smem:[#allocation10 + $0x2]]
    %v1424 = vstv %s1423
    %v1425 = vmul.f32 %v1419, %v1424
    %v1426 = vmul.f32 %v1420, %v1424
    %v1427 = vmul.f32 %v1421, %v1424
    %v1428 = vmul.f32 %v1422, %v1424
    %s1429 = sld [smem:[#allocation12 + $0x2]]
    %v1430 = vstv %s1429
    %v1431 = vadd.f32 %v1425, %v1430
    %v1432 = vadd.f32 %v1426, %v1430
    %v1433 = vadd.f32 %v1427, %v1430
    %v1434 = vadd.f32 %v1428, %v1430
    %s1435 = scalar_lea.vmem [#allocation13], 32
    %1436 = vst.msk [vmem:[%s1435] sm:$0xff] %vm1080, %v1431
    %1437 = vst.msk [vmem:[%s1435 + $0x8] sm:$0xff] %vm1080, %v1432
    %1438 = vst.msk [vmem:[%s1435 + $0x80] sm:$0xff] %vm1080, %v1433
    %1439 = vst.msk [vmem:[%s1435 + $0x88] sm:$0xff] %vm1080, %v1434
    %s1440 = sld [smem:[#allocation9 + $0x3]]
    %v1441 = vstv %s1440
    %v1442 = vmul.f32 %v443, %v1441
    %v1443 = vmul.f32 %v444, %v1441
    %v1444 = vmul.f32 %v445, %v1441
    %v1445 = vmul.f32 %v446, %v1441
    %s1446 = sld [smem:[#allocation9 + $0xb]]
    %v1447 = vstv %s1446
    %v1448 = vmul.f32 %v642, %v1447
    %v1449 = vmul.f32 %v643, %v1447
    %v1450 = vmul.f32 %v644, %v1447
    %v1451 = vmul.f32 %v645, %v1447
    %v1452 = vadd.f32 %v1442, %v1448
    %v1453 = vadd.f32 %v1443, %v1449
    %v1454 = vadd.f32 %v1444, %v1450
    %v1455 = vadd.f32 %v1445, %v1451
    %s1456 = sld [smem:[#allocation9 + $0x13]]
    %v1457 = vstv %s1456
    %v1458 = vmul.f32 %v841, %v1457
    %v1459 = vmul.f32 %v842, %v1457
    %v1460 = vmul.f32 %v843, %v1457
    %v1461 = vmul.f32 %v844, %v1457
    %v1462 = vadd.f32 %v1452, %v1458
    %v1463 = vadd.f32 %v1453, %v1459
    %v1464 = vadd.f32 %v1454, %v1460
    %v1465 = vadd.f32 %v1455, %v1461
    %s1466 = sld [smem:[#allocation9 + $0x1b]]
    %v1467 = vstv %s1466
    %v1468 = vmul.f32 %v1040, %v1467
    %v1469 = vmul.f32 %v1041, %v1467
    %v1470 = vmul.f32 %v1042, %v1467
    %v1471 = vmul.f32 %v1043, %v1467
    %v1472 = vadd.f32 %v1462, %v1468
    %v1473 = vadd.f32 %v1463, %v1469
    %v1474 = vadd.f32 %v1464, %v1470
    %v1475 = vadd.f32 %v1465, %v1471
    %v1476 = vsel %vm1080, %v1472, 0.0
    %1477 = vadd.xlane.f32.xlu0 %v1476
    %v1478 = vpop.xlane.xlu0 %1477
    %v1479 = vsel %vm1080, %v1473, 0.0
    %1480 = vadd.xlane.f32.xlu0 %v1479
    %v1481 = vpop.xlane.xlu0 %1480
    %v1482 = vsel %vm1080, %v1474, 0.0
    %1483 = vadd.xlane.f32.xlu0 %v1482
    %v1484 = vpop.xlane.xlu0 %1483
    %v1485 = vsel %vm1080, %v1475, 0.0
    %1486 = vadd.xlane.f32.xlu0 %v1485
    %v1487 = vpop.xlane.xlu0 %1486
    %v1488 = vadd.f32 %v1478, %v1481
    %v1489 = vrot.slane %v1488, 4
    %v1490 = vadd.f32 %v1488, %v1489
    %v1491 = vrot.slane %v1490, 2
    %v1492 = vadd.f32 %v1490, %v1491
    %v1493 = vrot.slane %v1492, 1
    %v1494 = vadd.f32 %v1492, %v1493
    %v1495 = vadd.f32 %v1484, %v1487
    %v1496 = vrot.slane %v1495, 4
    %v1497 = vadd.f32 %v1495, %v1496
    %v1498 = vrot.slane %v1497, 2
    %v1499 = vadd.f32 %v1497, %v1498
    %v1500 = vrot.slane %v1499, 1
    %v1501 = vadd.f32 %v1499, %v1500
    %v1502 = vadd.f32 %v1494, %v1501
    %v1503 = vmul.f32 %v1502, 0.001953125
    %v1504 = vsub.f32 %v1472, %v1503
    %v1505 = vsub.f32 %v1473, %v1503
    %v1506 = vsub.f32 %v1474, %v1503
    %v1507 = vsub.f32 %v1475, %v1503
    %v1508 = vmul.f32 %v1504, %v1504
    %v1509 = vmul.f32 %v1505, %v1505
    %v1510 = vmul.f32 %v1506, %v1506
    %v1511 = vmul.f32 %v1507, %v1507
    %v1512 = vsel %vm1080, %v1508, 0.0
    %1513 = vadd.xlane.f32.xlu0 %v1512
    %v1514 = vpop.xlane.xlu0 %1513
    %v1515 = vsel %vm1080, %v1509, 0.0
    %1516 = vadd.xlane.f32.xlu0 %v1515
    %v1517 = vpop.xlane.xlu0 %1516
    %v1518 = vsel %vm1080, %v1510, 0.0
    %1519 = vadd.xlane.f32.xlu0 %v1518
    %v1520 = vpop.xlane.xlu0 %1519
    %v1521 = vsel %vm1080, %v1511, 0.0
    %1522 = vadd.xlane.f32.xlu0 %v1521
    %v1523 = vpop.xlane.xlu0 %1522
    %v1524 = vadd.f32 %v1514, %v1517
    %v1525 = vrot.slane %v1524, 4
    %v1526 = vadd.f32 %v1524, %v1525
    %v1527 = vrot.slane %v1526, 2
    %v1528 = vadd.f32 %v1526, %v1527
    %v1529 = vrot.slane %v1528, 1
    %v1530 = vadd.f32 %v1528, %v1529
    %v1531 = vadd.f32 %v1520, %v1523
    %v1532 = vrot.slane %v1531, 4
    %v1533 = vadd.f32 %v1531, %v1532
    %v1534 = vrot.slane %v1533, 2
    %v1535 = vadd.f32 %v1533, %v1534
    %v1536 = vrot.slane %v1535, 1
    %v1537 = vadd.f32 %v1535, %v1536
    %v1538 = vadd.f32 %v1530, %v1537
    %v1539 = vmul.f32 %v1538, 0.001953125
    %v1540 = vadd.f32 %v1539, 1e-05
    %v1541 = vrsqrt.pop %v1540
    %v1542 = vmul.f32 %v1541, %v1540
    %v1543 = vmul.f32 %v1542, %v1541
    %v1544 = vmul.f32 0.5, %v1543
    %v1545 = vsub.f32 1.5, %v1544
    %v1546 = vmul.f32 %v1541, %v1545
    %vm1547 = vweird.f32 %v1540
    %vm1548 = vweird.f32 %v1541
    %vm1549 = vmor %vm1547, %vm1548
    %v1550 = vsel %vm1549, %v1541, %v1546
    %v1551 = vmul.f32 %v1504, %v1550
    %v1552 = vmul.f32 %v1505, %v1550
    %v1553 = vmul.f32 %v1506, %v1550
    %v1554 = vmul.f32 %v1507, %v1550
    %s1555 = sld [smem:[#allocation10 + $0x3]]
    %v1556 = vstv %s1555
    %v1557 = vmul.f32 %v1551, %v1556
    %v1558 = vmul.f32 %v1552, %v1556
    %v1559 = vmul.f32 %v1553, %v1556
    %v1560 = vmul.f32 %v1554, %v1556
    %s1561 = sld [smem:[#allocation12 + $0x3]]
    %v1562 = vstv %s1561
    %v1563 = vadd.f32 %v1557, %v1562
    %v1564 = vadd.f32 %v1558, %v1562
    %v1565 = vadd.f32 %v1559, %v1562
    %v1566 = vadd.f32 %v1560, %v1562
    %s1567 = scalar_lea.vmem [#allocation13], 48
    %1568 = vst.msk [vmem:[%s1567] sm:$0xff] %vm1080, %v1563
    %1569 = vst.msk [vmem:[%s1567 + $0x8] sm:$0xff] %vm1080, %v1564
    %1570 = vst.msk [vmem:[%s1567 + $0x80] sm:$0xff] %vm1080, %v1565
    %1571 = vst.msk [vmem:[%s1567 + $0x88] sm:$0xff] %vm1080, %v1566
    %s1572 = sld [smem:[#allocation9 + $0x4]]
    %v1573 = vstv %s1572
    %v1574 = vmul.f32 %v443, %v1573
    %v1575 = vmul.f32 %v444, %v1573
    %v1576 = vmul.f32 %v445, %v1573
    %v1577 = vmul.f32 %v446, %v1573
    %s1578 = sld [smem:[#allocation9 + $0xc]]
    %v1579 = vstv %s1578
    %v1580 = vmul.f32 %v642, %v1579
    %v1581 = vmul.f32 %v643, %v1579
    %v1582 = vmul.f32 %v644, %v1579
    %v1583 = vmul.f32 %v645, %v1579
    %v1584 = vadd.f32 %v1574, %v1580
    %v1585 = vadd.f32 %v1575, %v1581
    %v1586 = vadd.f32 %v1576, %v1582
    %v1587 = vadd.f32 %v1577, %v1583
    %s1588 = sld [smem:[#allocation9 + $0x14]]
    %v1589 = vstv %s1588
    %v1590 = vmul.f32 %v841, %v1589
    %v1591 = vmul.f32 %v842, %v1589
    %v1592 = vmul.f32 %v843, %v1589
    %v1593 = vmul.f32 %v844, %v1589
    %v1594 = vadd.f32 %v1584, %v1590
    %v1595 = vadd.f32 %v1585, %v1591
    %v1596 = vadd.f32 %v1586, %v1592
    %v1597 = vadd.f32 %v1587, %v1593
    %s1598 = sld [smem:[#allocation9 + $0x1c]]
    %v1599 = vstv %s1598
    %v1600 = vmul.f32 %v1040, %v1599
    %v1601 = vmul.f32 %v1041, %v1599
    %v1602 = vmul.f32 %v1042, %v1599
    %v1603 = vmul.f32 %v1043, %v1599
    %v1604 = vadd.f32 %v1594, %v1600
    %v1605 = vadd.f32 %v1595, %v1601
    %v1606 = vadd.f32 %v1596, %v1602
    %v1607 = vadd.f32 %v1597, %v1603
    %v1608 = vsel %vm1080, %v1604, 0.0
    %1609 = vadd.xlane.f32.xlu0 %v1608
    %v1610 = vpop.xlane.xlu0 %1609
    %v1611 = vsel %vm1080, %v1605, 0.0
    %1612 = vadd.xlane.f32.xlu0 %v1611
    %v1613 = vpop.xlane.xlu0 %1612
    %v1614 = vsel %vm1080, %v1606, 0.0
    %1615 = vadd.xlane.f32.xlu0 %v1614
    %v1616 = vpop.xlane.xlu0 %1615
    %v1617 = vsel %vm1080, %v1607, 0.0
    %1618 = vadd.xlane.f32.xlu0 %v1617
    %v1619 = vpop.xlane.xlu0 %1618
    %v1620 = vadd.f32 %v1610, %v1613
    %v1621 = vrot.slane %v1620, 4
    %v1622 = vadd.f32 %v1620, %v1621
    %v1623 = vrot.slane %v1622, 2
    %v1624 = vadd.f32 %v1622, %v1623
    %v1625 = vrot.slane %v1624, 1
    %v1626 = vadd.f32 %v1624, %v1625
    %v1627 = vadd.f32 %v1616, %v1619
    %v1628 = vrot.slane %v1627, 4
    %v1629 = vadd.f32 %v1627, %v1628
    %v1630 = vrot.slane %v1629, 2
    %v1631 = vadd.f32 %v1629, %v1630
    %v1632 = vrot.slane %v1631, 1
    %v1633 = vadd.f32 %v1631, %v1632
    %v1634 = vadd.f32 %v1626, %v1633
    %v1635 = vmul.f32 %v1634, 0.001953125
    %v1636 = vsub.f32 %v1604, %v1635
    %v1637 = vsub.f32 %v1605, %v1635
    %v1638 = vsub.f32 %v1606, %v1635
    %v1639 = vsub.f32 %v1607, %v1635
    %v1640 = vmul.f32 %v1636, %v1636
    %v1641 = vmul.f32 %v1637, %v1637
    %v1642 = vmul.f32 %v1638, %v1638
    %v1643 = vmul.f32 %v1639, %v1639
    %v1644 = vsel %vm1080, %v1640, 0.0
    %1645 = vadd.xlane.f32.xlu0 %v1644
    %v1646 = vpop.xlane.xlu0 %1645
    %v1647 = vsel %vm1080, %v1641, 0.0
    %1648 = vadd.xlane.f32.xlu0 %v1647
    %v1649 = vpop.xlane.xlu0 %1648
    %v1650 = vsel %vm1080, %v1642, 0.0
    %1651 = vadd.xlane.f32.xlu0 %v1650
    %v1652 = vpop.xlane.xlu0 %1651
    %v1653 = vsel %vm1080, %v1643, 0.0
    %1654 = vadd.xlane.f32.xlu0 %v1653
    %v1655 = vpop.xlane.xlu0 %1654
    %v1656 = vadd.f32 %v1646, %v1649
    %v1657 = vrot.slane %v1656, 4
    %v1658 = vadd.f32 %v1656, %v1657
    %v1659 = vrot.slane %v1658, 2
    %v1660 = vadd.f32 %v1658, %v1659
    %v1661 = vrot.slane %v1660, 1
    %v1662 = vadd.f32 %v1660, %v1661
    %v1663 = vadd.f32 %v1652, %v1655
    %v1664 = vrot.slane %v1663, 4
    %v1665 = vadd.f32 %v1663, %v1664
    %v1666 = vrot.slane %v1665, 2
    %v1667 = vadd.f32 %v1665, %v1666
    %v1668 = vrot.slane %v1667, 1
    %v1669 = vadd.f32 %v1667, %v1668
    %v1670 = vadd.f32 %v1662, %v1669
    %v1671 = vmul.f32 %v1670, 0.001953125
    %v1672 = vadd.f32 %v1671, 1e-05
    %v1673 = vrsqrt.pop %v1672
    %v1674 = vmul.f32 %v1673, %v1672
    %v1675 = vmul.f32 %v1674, %v1673
    %v1676 = vmul.f32 0.5, %v1675
    %v1677 = vsub.f32 1.5, %v1676
    %v1678 = vmul.f32 %v1673, %v1677
    %vm1679 = vweird.f32 %v1672
    %vm1680 = vweird.f32 %v1673
    %vm1681 = vmor %vm1679, %vm1680
    %v1682 = vsel %vm1681, %v1673, %v1678
    %v1683 = vmul.f32 %v1636, %v1682
    %v1684 = vmul.f32 %v1637, %v1682
    %v1685 = vmul.f32 %v1638, %v1682
    %v1686 = vmul.f32 %v1639, %v1682
    %s1687 = sld [smem:[#allocation10 + $0x4]]
    %v1688 = vstv %s1687
    %v1689 = vmul.f32 %v1683, %v1688
    %v1690 = vmul.f32 %v1684, %v1688
    %v1691 = vmul.f32 %v1685, %v1688
    %v1692 = vmul.f32 %v1686, %v1688
    %s1693 = sld [smem:[#allocation12 + $0x4]]
    %v1694 = vstv %s1693
    %v1695 = vadd.f32 %v1689, %v1694
    %v1696 = vadd.f32 %v1690, %v1694
    %v1697 = vadd.f32 %v1691, %v1694
    %v1698 = vadd.f32 %v1692, %v1694
    %s1699 = scalar_lea.vmem [#allocation13], 64
    %1700 = vst.msk [vmem:[%s1699] sm:$0xff] %vm1080, %v1695
    %1701 = vst.msk [vmem:[%s1699 + $0x8] sm:$0xff] %vm1080, %v1696
    %1702 = vst.msk [vmem:[%s1699 + $0x80] sm:$0xff] %vm1080, %v1697
    %1703 = vst.msk [vmem:[%s1699 + $0x88] sm:$0xff] %vm1080, %v1698
    %s1704 = sld [smem:[#allocation9 + $0x5]]
    %v1705 = vstv %s1704
    %v1706 = vmul.f32 %v443, %v1705
    %v1707 = vmul.f32 %v444, %v1705
    %v1708 = vmul.f32 %v445, %v1705
    %v1709 = vmul.f32 %v446, %v1705
    %s1710 = sld [smem:[#allocation9 + $0xd]]
    %v1711 = vstv %s1710
    %v1712 = vmul.f32 %v642, %v1711
    %v1713 = vmul.f32 %v643, %v1711
    %v1714 = vmul.f32 %v644, %v1711
    %v1715 = vmul.f32 %v645, %v1711
    %v1716 = vadd.f32 %v1706, %v1712
    %v1717 = vadd.f32 %v1707, %v1713
    %v1718 = vadd.f32 %v1708, %v1714
    %v1719 = vadd.f32 %v1709, %v1715
    %s1720 = sld [smem:[#allocation9 + $0x15]]
    %v1721 = vstv %s1720
    %v1722 = vmul.f32 %v841, %v1721
    %v1723 = vmul.f32 %v842, %v1721
    %v1724 = vmul.f32 %v843, %v1721
    %v1725 = vmul.f32 %v844, %v1721
    %v1726 = vadd.f32 %v1716, %v1722
    %v1727 = vadd.f32 %v1717, %v1723
    %v1728 = vadd.f32 %v1718, %v1724
    %v1729 = vadd.f32 %v1719, %v1725
    %s1730 = sld [smem:[#allocation9 + $0x1d]]
    %v1731 = vstv %s1730
    %v1732 = vmul.f32 %v1040, %v1731
    %v1733 = vmul.f32 %v1041, %v1731
    %v1734 = vmul.f32 %v1042, %v1731
    %v1735 = vmul.f32 %v1043, %v1731
    %v1736 = vadd.f32 %v1726, %v1732
    %v1737 = vadd.f32 %v1727, %v1733
    %v1738 = vadd.f32 %v1728, %v1734
    %v1739 = vadd.f32 %v1729, %v1735
    %v1740 = vsel %vm1080, %v1736, 0.0
    %1741 = vadd.xlane.f32.xlu0 %v1740
    %v1742 = vpop.xlane.xlu0 %1741
    %v1743 = vsel %vm1080, %v1737, 0.0
    %1744 = vadd.xlane.f32.xlu0 %v1743
    %v1745 = vpop.xlane.xlu0 %1744
    %v1746 = vsel %vm1080, %v1738, 0.0
    %1747 = vadd.xlane.f32.xlu0 %v1746
    %v1748 = vpop.xlane.xlu0 %1747
    %v1749 = vsel %vm1080, %v1739, 0.0
    %1750 = vadd.xlane.f32.xlu0 %v1749
    %v1751 = vpop.xlane.xlu0 %1750
    %v1752 = vadd.f32 %v1742, %v1745
    %v1753 = vrot.slane %v1752, 4
    %v1754 = vadd.f32 %v1752, %v1753
    %v1755 = vrot.slane %v1754, 2
    %v1756 = vadd.f32 %v1754, %v1755
    %v1757 = vrot.slane %v1756, 1
    %v1758 = vadd.f32 %v1756, %v1757
    %v1759 = vadd.f32 %v1748, %v1751
    %v1760 = vrot.slane %v1759, 4
    %v1761 = vadd.f32 %v1759, %v1760
    %v1762 = vrot.slane %v1761, 2
    %v1763 = vadd.f32 %v1761, %v1762
    %v1764 = vrot.slane %v1763, 1
    %v1765 = vadd.f32 %v1763, %v1764
    %v1766 = vadd.f32 %v1758, %v1765
    %v1767 = vmul.f32 %v1766, 0.001953125
    %v1768 = vsub.f32 %v1736, %v1767
    %v1769 = vsub.f32 %v1737, %v1767
    %v1770 = vsub.f32 %v1738, %v1767
    %v1771 = vsub.f32 %v1739, %v1767
    %v1772 = vmul.f32 %v1768, %v1768
    %v1773 = vmul.f32 %v1769, %v1769
    %v1774 = vmul.f32 %v1770, %v1770
    %v1775 = vmul.f32 %v1771, %v1771
    %v1776 = vsel %vm1080, %v1772, 0.0
    %1777 = vadd.xlane.f32.xlu0 %v1776
    %v1778 = vpop.xlane.xlu0 %1777
    %v1779 = vsel %vm1080, %v1773, 0.0
    %1780 = vadd.xlane.f32.xlu0 %v1779
    %v1781 = vpop.xlane.xlu0 %1780
    %v1782 = vsel %vm1080, %v1774, 0.0
    %1783 = vadd.xlane.f32.xlu0 %v1782
    %v1784 = vpop.xlane.xlu0 %1783
    %v1785 = vsel %vm1080, %v1775, 0.0
    %1786 = vadd.xlane.f32.xlu0 %v1785
    %v1787 = vpop.xlane.xlu0 %1786
    %v1788 = vadd.f32 %v1778, %v1781
    %v1789 = vrot.slane %v1788, 4
    %v1790 = vadd.f32 %v1788, %v1789
    %v1791 = vrot.slane %v1790, 2
    %v1792 = vadd.f32 %v1790, %v1791
    %v1793 = vrot.slane %v1792, 1
    %v1794 = vadd.f32 %v1792, %v1793
    %v1795 = vadd.f32 %v1784, %v1787
    %v1796 = vrot.slane %v1795, 4
    %v1797 = vadd.f32 %v1795, %v1796
    %v1798 = vrot.slane %v1797, 2
    %v1799 = vadd.f32 %v1797, %v1798
    %v1800 = vrot.slane %v1799, 1
    %v1801 = vadd.f32 %v1799, %v1800
    %v1802 = vadd.f32 %v1794, %v1801
    %v1803 = vmul.f32 %v1802, 0.001953125
    %v1804 = vadd.f32 %v1803, 1e-05
    %v1805 = vrsqrt.pop %v1804
    %v1806 = vmul.f32 %v1805, %v1804
    %v1807 = vmul.f32 %v1806, %v1805
    %v1808 = vmul.f32 0.5, %v1807
    %v1809 = vsub.f32 1.5, %v1808
    %v1810 = vmul.f32 %v1805, %v1809
    %vm1811 = vweird.f32 %v1804
    %vm1812 = vweird.f32 %v1805
    %vm1813 = vmor %vm1811, %vm1812
    %v1814 = vsel %vm1813, %v1805, %v1810
    %v1815 = vmul.f32 %v1768, %v1814
    %v1816 = vmul.f32 %v1769, %v1814
    %v1817 = vmul.f32 %v1770, %v1814
    %v1818 = vmul.f32 %v1771, %v1814
    %s1819 = sld [smem:[#allocation10 + $0x5]]
    %v1820 = vstv %s1819
    %v1821 = vmul.f32 %v1815, %v1820
    %v1822 = vmul.f32 %v1816, %v1820
    %v1823 = vmul.f32 %v1817, %v1820
    %v1824 = vmul.f32 %v1818, %v1820
    %s1825 = sld [smem:[#allocation12 + $0x5]]
    %v1826 = vstv %s1825
    %v1827 = vadd.f32 %v1821, %v1826
    %v1828 = vadd.f32 %v1822, %v1826
    %v1829 = vadd.f32 %v1823, %v1826
    %v1830 = vadd.f32 %v1824, %v1826
    %s1831 = scalar_lea.vmem [#allocation13], 80
    %1832 = vst.msk [vmem:[%s1831] sm:$0xff] %vm1080, %v1827
    %1833 = vst.msk [vmem:[%s1831 + $0x8] sm:$0xff] %vm1080, %v1828
    %1834 = vst.msk [vmem:[%s1831 + $0x80] sm:$0xff] %vm1080, %v1829
    %1835 = vst.msk [vmem:[%s1831 + $0x88] sm:$0xff] %vm1080, %v1830
    %s1836 = sld [smem:[#allocation9 + $0x6]]
    %v1837 = vstv %s1836
    %v1838 = vmul.f32 %v443, %v1837
    %v1839 = vmul.f32 %v444, %v1837
    %v1840 = vmul.f32 %v445, %v1837
    %v1841 = vmul.f32 %v446, %v1837
    %s1842 = sld [smem:[#allocation9 + $0xe]]
    %v1843 = vstv %s1842
    %v1844 = vmul.f32 %v642, %v1843
    %v1845 = vmul.f32 %v643, %v1843
    %v1846 = vmul.f32 %v644, %v1843
    %v1847 = vmul.f32 %v645, %v1843
    %v1848 = vadd.f32 %v1838, %v1844
    %v1849 = vadd.f32 %v1839, %v1845
    %v1850 = vadd.f32 %v1840, %v1846
    %v1851 = vadd.f32 %v1841, %v1847
    %s1852 = sld [smem:[#allocation9 + $0x16]]
    %v1853 = vstv %s1852
    %v1854 = vmul.f32 %v841, %v1853
    %v1855 = vmul.f32 %v842, %v1853
    %v1856 = vmul.f32 %v843, %v1853
    %v1857 = vmul.f32 %v844, %v1853
    %v1858 = vadd.f32 %v1848, %v1854
    %v1859 = vadd.f32 %v1849, %v1855
    %v1860 = vadd.f32 %v1850, %v1856
    %v1861 = vadd.f32 %v1851, %v1857
    %s1862 = sld [smem:[#allocation9 + $0x1e]]
    %v1863 = vstv %s1862
    %v1864 = vmul.f32 %v1040, %v1863
    %v1865 = vmul.f32 %v1041, %v1863
    %v1866 = vmul.f32 %v1042, %v1863
    %v1867 = vmul.f32 %v1043, %v1863
    %v1868 = vadd.f32 %v1858, %v1864
    %v1869 = vadd.f32 %v1859, %v1865
    %v1870 = vadd.f32 %v1860, %v1866
    %v1871 = vadd.f32 %v1861, %v1867
    %v1872 = vsel %vm1080, %v1868, 0.0
    %1873 = vadd.xlane.f32.xlu0 %v1872
    %v1874 = vpop.xlane.xlu0 %1873
    %v1875 = vsel %vm1080, %v1869, 0.0
    %1876 = vadd.xlane.f32.xlu0 %v1875
    %v1877 = vpop.xlane.xlu0 %1876
    %v1878 = vsel %vm1080, %v1870, 0.0
    %1879 = vadd.xlane.f32.xlu0 %v1878
    %v1880 = vpop.xlane.xlu0 %1879
    %v1881 = vsel %vm1080, %v1871, 0.0
    %1882 = vadd.xlane.f32.xlu0 %v1881
    %v1883 = vpop.xlane.xlu0 %1882
    %v1884 = vadd.f32 %v1874, %v1877
    %v1885 = vrot.slane %v1884, 4
    %v1886 = vadd.f32 %v1884, %v1885
    %v1887 = vrot.slane %v1886, 2
    %v1888 = vadd.f32 %v1886, %v1887
    %v1889 = vrot.slane %v1888, 1
    %v1890 = vadd.f32 %v1888, %v1889
    %v1891 = vadd.f32 %v1880, %v1883
    %v1892 = vrot.slane %v1891, 4
    %v1893 = vadd.f32 %v1891, %v1892
    %v1894 = vrot.slane %v1893, 2
    %v1895 = vadd.f32 %v1893, %v1894
    %v1896 = vrot.slane %v1895, 1
    %v1897 = vadd.f32 %v1895, %v1896
    %v1898 = vadd.f32 %v1890, %v1897
    %v1899 = vmul.f32 %v1898, 0.001953125
    %v1900 = vsub.f32 %v1868, %v1899
    %v1901 = vsub.f32 %v1869, %v1899
    %v1902 = vsub.f32 %v1870, %v1899
    %v1903 = vsub.f32 %v1871, %v1899
    %v1904 = vmul.f32 %v1900, %v1900
    %v1905 = vmul.f32 %v1901, %v1901
    %v1906 = vmul.f32 %v1902, %v1902
    %v1907 = vmul.f32 %v1903, %v1903
    %v1908 = vsel %vm1080, %v1904, 0.0
    %1909 = vadd.xlane.f32.xlu0 %v1908
    %v1910 = vpop.xlane.xlu0 %1909
    %v1911 = vsel %vm1080, %v1905, 0.0
    %1912 = vadd.xlane.f32.xlu0 %v1911
    %v1913 = vpop.xlane.xlu0 %1912
    %v1914 = vsel %vm1080, %v1906, 0.0
    %1915 = vadd.xlane.f32.xlu0 %v1914
    %v1916 = vpop.xlane.xlu0 %1915
    %v1917 = vsel %vm1080, %v1907, 0.0
    %1918 = vadd.xlane.f32.xlu0 %v1917
    %v1919 = vpop.xlane.xlu0 %1918
    %v1920 = vadd.f32 %v1910, %v1913
    %v1921 = vrot.slane %v1920, 4
    %v1922 = vadd.f32 %v1920, %v1921
    %v1923 = vrot.slane %v1922, 2
    %v1924 = vadd.f32 %v1922, %v1923
    %v1925 = vrot.slane %v1924, 1
    %v1926 = vadd.f32 %v1924, %v1925
    %v1927 = vadd.f32 %v1916, %v1919
    %v1928 = vrot.slane %v1927, 4
    %v1929 = vadd.f32 %v1927, %v1928
    %v1930 = vrot.slane %v1929, 2
    %v1931 = vadd.f32 %v1929, %v1930
    %v1932 = vrot.slane %v1931, 1
    %v1933 = vadd.f32 %v1931, %v1932
    %v1934 = vadd.f32 %v1926, %v1933
    %v1935 = vmul.f32 %v1934, 0.001953125
    %v1936 = vadd.f32 %v1935, 1e-05
    %v1937 = vrsqrt.pop %v1936
    %v1938 = vmul.f32 %v1937, %v1936
    %v1939 = vmul.f32 %v1938, %v1937
    %v1940 = vmul.f32 0.5, %v1939
    %v1941 = vsub.f32 1.5, %v1940
    %v1942 = vmul.f32 %v1937, %v1941
    %vm1943 = vweird.f32 %v1936
    %vm1944 = vweird.f32 %v1937
    %vm1945 = vmor %vm1943, %vm1944
    %v1946 = vsel %vm1945, %v1937, %v1942
    %v1947 = vmul.f32 %v1900, %v1946
    %v1948 = vmul.f32 %v1901, %v1946
    %v1949 = vmul.f32 %v1902, %v1946
    %v1950 = vmul.f32 %v1903, %v1946
    %s1951 = sld [smem:[#allocation10 + $0x6]]
    %v1952 = vstv %s1951
    %v1953 = vmul.f32 %v1947, %v1952
    %v1954 = vmul.f32 %v1948, %v1952
    %v1955 = vmul.f32 %v1949, %v1952
    %v1956 = vmul.f32 %v1950, %v1952
    %s1957 = sld [smem:[#allocation12 + $0x6]]
    %v1958 = vstv %s1957
    %v1959 = vadd.f32 %v1953, %v1958
    %v1960 = vadd.f32 %v1954, %v1958
    %v1961 = vadd.f32 %v1955, %v1958
    %v1962 = vadd.f32 %v1956, %v1958
    %s1963 = scalar_lea.vmem [#allocation13], 96
    %1964 = vst.msk [vmem:[%s1963] sm:$0xff] %vm1080, %v1959
    %1965 = vst.msk [vmem:[%s1963 + $0x8] sm:$0xff] %vm1080, %v1960
    %1966 = vst.msk [vmem:[%s1963 + $0x80] sm:$0xff] %vm1080, %v1961
    %1967 = vst.msk [vmem:[%s1963 + $0x88] sm:$0xff] %vm1080, %v1962
    %s1968 = sld [smem:[#allocation9 + $0x7]]
    %v1969 = vstv %s1968
    %v1970 = vmul.f32 %v443, %v1969
    %v1971 = vmul.f32 %v444, %v1969
    %v1972 = vmul.f32 %v445, %v1969
    %v1973 = vmul.f32 %v446, %v1969
    %s1974 = sld [smem:[#allocation9 + $0xf]]
    %v1975 = vstv %s1974
    %v1976 = vmul.f32 %v642, %v1975
    %v1977 = vmul.f32 %v643, %v1975
    %v1978 = vmul.f32 %v644, %v1975
    %v1979 = vmul.f32 %v645, %v1975
    %v1980 = vadd.f32 %v1970, %v1976
    %v1981 = vadd.f32 %v1971, %v1977
    %v1982 = vadd.f32 %v1972, %v1978
    %v1983 = vadd.f32 %v1973, %v1979
    %s1984 = sld [smem:[#allocation9 + $0x17]]
    %v1985 = vstv %s1984
    %v1986 = vmul.f32 %v841, %v1985
    %v1987 = vmul.f32 %v842, %v1985
    %v1988 = vmul.f32 %v843, %v1985
    %v1989 = vmul.f32 %v844, %v1985
    %v1990 = vadd.f32 %v1980, %v1986
    %v1991 = vadd.f32 %v1981, %v1987
    %v1992 = vadd.f32 %v1982, %v1988
    %v1993 = vadd.f32 %v1983, %v1989
    %s1994 = sld [smem:[#allocation9 + $0x1f]]
    %v1995 = vstv %s1994
    %v1996 = vmul.f32 %v1040, %v1995
    %v1997 = vmul.f32 %v1041, %v1995
    %v1998 = vmul.f32 %v1042, %v1995
    %v1999 = vmul.f32 %v1043, %v1995
    %v2000 = vadd.f32 %v1990, %v1996
    %v2001 = vadd.f32 %v1991, %v1997
    %v2002 = vadd.f32 %v1992, %v1998
    %v2003 = vadd.f32 %v1993, %v1999
    %v2004 = vsel %vm1080, %v2000, 0.0
    %2005 = vadd.xlane.f32.xlu0 %v2004
    %v2006 = vpop.xlane.xlu0 %2005
    %v2007 = vsel %vm1080, %v2001, 0.0
    %2008 = vadd.xlane.f32.xlu0 %v2007
    %v2009 = vpop.xlane.xlu0 %2008
    %v2010 = vsel %vm1080, %v2002, 0.0
    %2011 = vadd.xlane.f32.xlu0 %v2010
    %v2012 = vpop.xlane.xlu0 %2011
    %v2013 = vsel %vm1080, %v2003, 0.0
    %2014 = vadd.xlane.f32.xlu0 %v2013
    %v2015 = vpop.xlane.xlu0 %2014
    %v2016 = vadd.f32 %v2006, %v2009
    %v2017 = vrot.slane %v2016, 4
    %v2018 = vadd.f32 %v2016, %v2017
    %v2019 = vrot.slane %v2018, 2
    %v2020 = vadd.f32 %v2018, %v2019
    %v2021 = vrot.slane %v2020, 1
    %v2022 = vadd.f32 %v2020, %v2021
    %v2023 = vadd.f32 %v2012, %v2015
    %v2024 = vrot.slane %v2023, 4
    %v2025 = vadd.f32 %v2023, %v2024
    %v2026 = vrot.slane %v2025, 2
    %v2027 = vadd.f32 %v2025, %v2026
    %v2028 = vrot.slane %v2027, 1
    %v2029 = vadd.f32 %v2027, %v2028
    %v2030 = vadd.f32 %v2022, %v2029
    %v2031 = vmul.f32 %v2030, 0.001953125
    %v2032 = vsub.f32 %v2000, %v2031
    %v2033 = vsub.f32 %v2001, %v2031
    %v2034 = vsub.f32 %v2002, %v2031
    %v2035 = vsub.f32 %v2003, %v2031
    %v2036 = vmul.f32 %v2032, %v2032
    %v2037 = vmul.f32 %v2033, %v2033
    %v2038 = vmul.f32 %v2034, %v2034
    %v2039 = vmul.f32 %v2035, %v2035
    %v2040 = vsel %vm1080, %v2036, 0.0
    %2041 = vadd.xlane.f32.xlu0 %v2040
    %v2042 = vpop.xlane.xlu0 %2041
    %v2043 = vsel %vm1080, %v2037, 0.0
    %2044 = vadd.xlane.f32.xlu0 %v2043
    %v2045 = vpop.xlane.xlu0 %2044
    %v2046 = vsel %vm1080, %v2038, 0.0
    %2047 = vadd.xlane.f32.xlu0 %v2046
    %v2048 = vpop.xlane.xlu0 %2047
    %v2049 = vsel %vm1080, %v2039, 0.0
    %2050 = vadd.xlane.f32.xlu0 %v2049
    %v2051 = vpop.xlane.xlu0 %2050
    %v2052 = vadd.f32 %v2042, %v2045
    %v2053 = vrot.slane %v2052, 4
    %v2054 = vadd.f32 %v2052, %v2053
    %v2055 = vrot.slane %v2054, 2
    %v2056 = vadd.f32 %v2054, %v2055
    %v2057 = vrot.slane %v2056, 1
    %v2058 = vadd.f32 %v2056, %v2057
    %v2059 = vadd.f32 %v2048, %v2051
    %v2060 = vrot.slane %v2059, 4
    %v2061 = vadd.f32 %v2059, %v2060
    %v2062 = vrot.slane %v2061, 2
    %v2063 = vadd.f32 %v2061, %v2062
    %v2064 = vrot.slane %v2063, 1
    %v2065 = vadd.f32 %v2063, %v2064
    %v2066 = vadd.f32 %v2058, %v2065
    %v2067 = vmul.f32 %v2066, 0.001953125
    %v2068 = vadd.f32 %v2067, 1e-05
    %v2069 = vrsqrt.pop %v2068
    %v2070 = vmul.f32 %v2069, %v2068
    %v2071 = vmul.f32 %v2070, %v2069
    %v2072 = vmul.f32 0.5, %v2071
    %v2073 = vsub.f32 1.5, %v2072
    %v2074 = vmul.f32 %v2069, %v2073
    %vm2075 = vweird.f32 %v2068
    %vm2076 = vweird.f32 %v2069
    %vm2077 = vmor %vm2075, %vm2076
    %v2078 = vsel %vm2077, %v2069, %v2074
    %v2079 = vmul.f32 %v2032, %v2078
    %v2080 = vmul.f32 %v2033, %v2078
    %v2081 = vmul.f32 %v2034, %v2078
    %v2082 = vmul.f32 %v2035, %v2078
    %s2083 = sld [smem:[#allocation10 + $0x7]]
    %v2084 = vstv %s2083
    %v2085 = vmul.f32 %v2079, %v2084
    %v2086 = vmul.f32 %v2080, %v2084
    %v2087 = vmul.f32 %v2081, %v2084
    %v2088 = vmul.f32 %v2082, %v2084
    %s2089 = sld [smem:[#allocation12 + $0x7]]
    %v2090 = vstv %s2089
    %v2091 = vadd.f32 %v2085, %v2090
    %v2092 = vadd.f32 %v2086, %v2090
    %v2093 = vadd.f32 %v2087, %v2090
    %v2094 = vadd.f32 %v2088, %v2090
    %s2095 = scalar_lea.vmem [#allocation13], 112
    %2096 = vst.msk [vmem:[%s2095] sm:$0xff] %vm1080, %v2091
    %2097 = vst.msk [vmem:[%s2095 + $0x8] sm:$0xff] %vm1080, %v2092
    %2098 = vst.msk [vmem:[%s2095 + $0x80] sm:$0xff] %vm1080, %v2093
    %2099 = vst.msk [vmem:[%s2095 + $0x88] sm:$0xff] %vm1080, %v2094
    // Predicated region
    $region42: #{tpu_custom_call.1} parent=1 // pred_check
      _
    $region43: #{tpu_custom_call.1} parent=1 // pred_check_branch
      %2101 = sbr.rel (0) target = $region45
    $region44: #{tpu_custom_call.1} parent=1 // pred_region
      %2103 = vsyncadd [#allocation5], 0
      %s2104 = sshll.u32 [#allocation13], 4
      %s2105 = int_to_ptr.vmem [resolvable:$true] %s2104
      %s2106 = sshll.u32 %s5, 4
      %s2107 = int_to_ptr.hbm [resolvable:$true] %s2106
      %2112 = dma.vmem_to_hbm [thread:$0]  %s2105, 4096, %s2107, [#allocation5], 128, 128, 8
    $region45: #{tpu_custom_call.1} parent=1 // pred_fallthru
      _
    // Predicated region
    $region46: #{tpu_custom_call.1} parent=1 // pred_check
      _
    $region47: #{tpu_custom_call.1} parent=1 // pred_check_branch
      %2114 = sbr.rel (0) target = $region49
    $region48: #{tpu_custom_call.1} parent=1 // pred_region
      %2116 = dma.done [#allocation5], 4096
    $region49: #{tpu_custom_call.1} parent=1 // pred_fallthru
      _
    %2117 = vsyncpa [#allocation4], 1
    %2118 = vsyncpa [#allocation5], 1
    %2119 = vsyncpa [#allocation6], 1
    %2120 = vsyncpa [#allocation7], 1
    %2121 = vsyncpa [#allocation11], 1

</llo_original>
